<compile_context>
chip_gen: v7x
topology: tpu7x:2x2x1
jax: 0.10.0
libtpu: 0.0.40
codegen_flags: <defaults>
</compile_context>

<pallas_src>
import math
import functools

import jax
import jax.numpy as jnp
from jax import lax
from jax.experimental import pallas as pl
from jax.experimental.pallas import tpu as pltpu


# ----------------------------------------------------------------------------
# Pallas kernel: full encoder stack (num_layers x shared EncoderBlock) for one
# batch element.  Tile = (1, S, D).
# ----------------------------------------------------------------------------
def encoder_stack_kernel(x_ref, mask_ref,
                         wq_ref, bq_ref, wk_ref, bk_ref, wv_ref, bv_ref,
                         wo_ref, bo_ref,
                         g1_ref, beta1_ref,
                         w1_ref, b1_ref, w2_ref, b2_ref,
                         g2_ref, beta2_ref,
                         o_ref,
                         *, num_heads, num_layers):
    cdt = jnp.bfloat16

    # Load the shared block weights once; they stay resident for all layers.
    wq = wq_ref[...]; wk = wk_ref[...]; wv = wv_ref[...]; wo = wo_ref[...]
    w1 = w1_ref[...]; w2 = w2_ref[...]
    bq = bq_ref[...]; bk = bk_ref[...]; bv = bv_ref[...]; bo = bo_ref[...]
    b1 = b1_ref[...]; b2 = b2_ref[...]
    g1 = g1_ref[...]; beta1 = beta1_ref[...]
    g2 = g2_ref[...]; beta2 = beta2_ref[...]

    x0 = x_ref[0]                       # (S, D) float32
    D = x0.shape[-1]
    dh = D // num_heads
    scale = 1.0 / math.sqrt(dh)

    # Additive padding-mask bias, computed ONCE (hoisted out of heads & layers).
    mask_bias = mask_ref[0] * (-1e9)    # (1, S), broadcasts over query rows

    def layer_norm(y, g, b):
        # Single-pass: var = E[y^2] - mu^2  (one fewer cross-lane reduction).
        mu = jnp.mean(y, axis=-1, keepdims=True)
        ms = jnp.mean(y * y, axis=-1, keepdims=True)
        var = ms - mu * mu
        return (y - mu) * lax.rsqrt(var + 1e-5) * g + b

    def layer_body(_, x):
        # --- Multi-head self attention (bf16 matmuls, f32 accumulation) ------
        xc = x.astype(cdt)
        q = jnp.dot(xc, wq, preferred_element_type=jnp.float32) + bq
        k = jnp.dot(xc, wk, preferred_element_type=jnp.float32) + bk
        v = jnp.dot(xc, wv, preferred_element_type=jnp.float32) + bv
        qc = q.astype(cdt); kc = k.astype(cdt); vc = v.astype(cdt)

        attn_acc = jnp.zeros_like(x)
        for h in range(num_heads):      # static unroll; dh >= 128 in the demo
            sl = slice(h * dh, (h + 1) * dh)
            # q @ k^T via dot_general contracting last dims (no explicit .T).
            logits = lax.dot_general(
                qc[:, sl], kc[:, sl], (((1,), (1,)), ((), ())),
                preferred_element_type=jnp.float32)
            logits = logits * scale + mask_bias
            m = jnp.max(logits, axis=-1, keepdims=True)     # stable softmax
            e = jnp.exp(logits - m)
            denom = jnp.sum(e, axis=-1, keepdims=True)
            attnw = e * pl.reciprocal(denom, approx=True)   # EUP, not VPU div
            ctx = jnp.dot(attnw.astype(cdt), vc[:, sl],
                          preferred_element_type=jnp.float32)
            # Fused "concat + out-projection": accumulate ctx_h @ wo[rows_h].
            attn_acc = attn_acc + jnp.dot(ctx.astype(cdt), wo[sl, :],
                                          preferred_element_type=jnp.float32)
        attn_out = attn_acc + bo

        a = layer_norm(x + attn_out, g1, beta1)

        # --- FeedForward: Linear -> ReLU -> Linear ---------------------------
        h1 = jnp.dot(a.astype(cdt), w1, preferred_element_type=jnp.float32) + b1
        h1 = jnp.maximum(h1, 0.0)
        ff = jnp.dot(h1.astype(cdt), w2, preferred_element_type=jnp.float32) + b2

        return layer_norm(a + ff, g2, beta2)

    o_ref[0] = lax.fori_loop(0, num_layers, layer_body, x0)


# ----------------------------------------------------------------------------
# pallas_call wrapper: one grid step per batch element; weights use constant
# index maps so they are DMA'd once and stay resident across grid steps.
# ----------------------------------------------------------------------------
def encoder_layers(x, mask, block_params, *, num_heads, num_layers):
    B, S, D = x.shape
    kernel = functools.partial(encoder_stack_kernel,
                               num_heads=num_heads, num_layers=num_layers)

    def const_spec(p):
        r = p.ndim
        return pl.BlockSpec(p.shape, lambda b, _r=r: (0,) * _r)

    in_specs = (
        [pl.BlockSpec((1, S, D), lambda b: (b, 0, 0)),     # activations
         pl.BlockSpec((1, 1, S), lambda b: (b, 0, 0))]     # padding mask
        + [const_spec(p) for p in block_params])           # shared weights

    return pl.pallas_call(
        kernel,
        out_shape=jax.ShapeDtypeStruct((B, S, D), jnp.float32),
        grid=(B,),
        in_specs=in_specs,
        out_specs=pl.BlockSpec((1, S, D), lambda b: (b, 0, 0)),
        compiler_params=pltpu.CompilerParams(
            dimension_semantics=("parallel",),
            vmem_limit_bytes=64 * 1024 * 1024),
    )(x, mask, *block_params)


# ----------------------------------------------------------------------------
# Positional encoding table, exactly matching the PyTorch loop:
#   pe[pos, i]   = sin(pos / 10000 ** (2*i / d_model))   (i even)
#   pe[pos, i+1] = cos(pos / 10000 ** (2*i / d_model))
# ----------------------------------------------------------------------------
def positional_encoding(position, d_model):
    pos = jnp.arange(position, dtype=jnp.float32)[:, None]
    i = jnp.arange(0, d_model, 2, dtype=jnp.float32)[None, :]
    angle = pos / jnp.power(10000.0, (2.0 * i) / d_model)
    pe = jnp.zeros((position, d_model), jnp.float32)
    pe = pe.at[:, 0::2].set(jnp.sin(angle))
    pe = pe.at[:, 1::2].set(jnp.cos(angle))
    return pe


# ----------------------------------------------------------------------------
# Full Encoder forward (Pallas hot path; embedding / PE as JAX glue).
# ----------------------------------------------------------------------------
def encoder_forward(tokens, padding_mask, params, *, num_layers, num_heads):
    emb_table = params["emb"]
    D = emb_table.shape[1]
    S = tokens.shape[1]

    emb = emb_table[tokens] * math.sqrt(D)                  # embb + *= sqrt(d)
    emb = math.sqrt(D) * emb + params["pe"][None, :S, :]    # PositionalEncoder
    # dropout_1 -> identity (eval)
    return encoder_layers(emb, padding_mask, params["block"],
                          num_heads=num_heads, num_layers=num_layers)


# ----------------------------------------------------------------------------
# Pure-JAX reference with matched precision (bf16 matmul inputs, f32 accum).
# ----------------------------------------------------------------------------
def encoder_reference(tokens, padding_mask, params, *, num_layers, num_heads):
    (wq, bq, wk, bk, wv, bv, wo, bo,
     g1, beta1, w1, b1, w2, b2, g2, beta2) = params["block"]
    emb_table = params["emb"]
    D = emb_table.shape[1]
    B, S = tokens.shape
    H = num_heads
    dh = D // H
    cdt = jnp.bfloat16
    f32 = jnp.float32

    def ln(y, g, b):
        mu = jnp.mean(y, axis=-1, keepdims=True)
        var = jnp.mean((y - mu) ** 2, axis=-1, keepdims=True)
        return (y - mu) / jnp.sqrt(var + 1e-5) * g + b

    x = emb_table[tokens] * math.sqrt(D)
    x = math.sqrt(D) * x + params["pe"][None, :S, :]
    mask_bias = padding_mask[:, None, :, :] * (-1e9)        # (B,1,1,S)

    for _ in range(num_layers):
        xc = x.astype(cdt)
        q = jnp.einsum("bsd,de->bse", xc, wq, preferred_element_type=f32) + bq
        k = jnp.einsum("bsd,de->bse", xc, wk, preferred_element_type=f32) + bk
        v = jnp.einsum("bsd,de->bse", xc, wv, preferred_element_type=f32) + bv
        qh = q.astype(cdt).reshape(B, S, H, dh).transpose(0, 2, 1, 3)
        kh = k.astype(cdt).reshape(B, S, H, dh).transpose(0, 2, 1, 3)
        vh = v.astype(cdt).reshape(B, S, H, dh).transpose(0, 2, 1, 3)
        logits = jnp.einsum("bhqd,bhkd->bhqk", qh, kh,
                            preferred_element_type=f32) / math.sqrt(dh)
        logits = logits + mask_bias
        attnw = jax.nn.softmax(logits, axis=-1)
        ctx = jnp.einsum("bhqk,bhkd->bhqd", attnw.astype(cdt), vh,
                         preferred_element_type=f32)
        concat = ctx.transpose(0, 2, 1, 3).reshape(B, S, D)
        attn_out = jnp.einsum("bsd,de->bse", concat.astype(cdt), wo,
                              preferred_element_type=f32) + bo
        a = ln(x + attn_out, g1, beta1)
        h1 = jnp.maximum(
            jnp.einsum("bsd,df->bsf", a.astype(cdt), w1,
                       preferred_element_type=f32) + b1, 0.0)
        ff = jnp.einsum("bsf,fd->bsd", h1.astype(cdt), w2,
                        preferred_element_type=f32) + b2
        x = ln(a + ff, g2, beta2)
    return x


# ----------------------------------------------------------------------------
# Deterministic synthetic parameters (no checkpoint load).
# ----------------------------------------------------------------------------
def init_params(key, text_embedding_vectors, pe_positions, d_model, d_ff):
    ks = jax.random.split(key, 16)
    s = 0.02
    emb = jax.random.normal(ks[0], (text_embedding_vectors, d_model), jnp.float32)

    def w(k, shape):
        return (jax.random.normal(k, shape, jnp.float32) * s).astype(jnp.bfloat16)

    def b(k, n):
        return jax.random.normal(k, (1, n), jnp.float32) * 0.02

    wq = w(ks[1], (d_model, d_model)); bq = b(ks[7], d_model)
    wk = w(ks[2], (d_model, d_model)); bk = b(ks[8], d_model)
    wv = w(ks[3], (d_model, d_model)); bv = b(ks[9], d_model)
    wo = w(ks[4], (d_model, d_model)); bo = b(ks[10], d_model)
    w1 = w(ks[5], (d_model, d_ff));    b1 = b(ks[11], d_ff)
    w2 = w(ks[6], (d_ff, d_model));    b2 = b(ks[12], d_model)

    g1 = jnp.ones((1, d_model), jnp.float32)
    beta1 = jax.random.normal(ks[13], (1, d_model), jnp.float32) * 0.02
    g2 = jnp.ones((1, d_model), jnp.float32)
    beta2 = jax.random.normal(ks[14], (1, d_model), jnp.float32) * 0.02

    block = [wq, bq, wk, bk, wv, bv, wo, bo,
             g1, beta1, w1, b1, w2, b2, g2, beta2]

    return {"emb": emb,
            "pe": positional_encoding(pe_positions, d_model),
            "block": block}


if __name__ == "__main__":
    # Small but lane-dense shapes consistent with the module (DModel256).
    B, S = 4, 128
    d_model, num_heads, d_ff = 256, 2, 512      # head_dim = 128
    num_layers = 2
    text_embedding_vectors = 400                # embedding vocab rows
    pe_positions = 400                          # PE table length (>= S)

    key = jax.random.PRNGKey(0)
    k_tok, k_par = jax.random.split(key)

    tokens = jax.random.randint(k_tok, (B, S), 0, text_embedding_vectors,
                                dtype=jnp.int32)
    tokens = tokens.at[:, -16:].set(0)          # force some pad positions
    # Padding mask: 1.0 where token id == 0 (pad), shape (B, 1, S).
    padding_mask = (tokens == 0).astype(jnp.float32)[:, None, :]

    params = init_params(k_par, text_embedding_vectors, pe_positions,
                         d_model, d_ff)

    fwd = jax.jit(functools.partial(encoder_forward,
                                    num_layers=num_layers, num_heads=num_heads))
    out = jax.block_until_ready(fwd(tokens, padding_mask, params))

    ref = jax.block_until_ready(
        encoder_reference(tokens, padding_mask, params,
                          num_layers=num_layers, num_heads=num_heads))

    assert out.shape == (B, S, d_model)
    max_diff = float(jnp.max(jnp.abs(out - ref)))
    assert jnp.allclose(out, ref, rtol=1e-2, atol=1e-2), (
        "mismatch vs reference, max abs diff = %g" % max_diff)

    print("KERNEL_OK")
</pallas_src>

<mosaic_0001>
module attributes {stable_mosaic.version = 11 : i64} {
  func.func @encoder_stack_kernel(%arg0: i32, %arg1: memref<1x128x256xf32, #tpu.memory_space<vmem>>, %arg2: memref<1x1x128xf32, #tpu.memory_space<vmem>>, %arg3: memref<256x256xbf16, #tpu.memory_space<vmem>>, %arg4: memref<1x256xf32, #tpu.memory_space<vmem>>, %arg5: memref<256x256xbf16, #tpu.memory_space<vmem>>, %arg6: memref<1x256xf32, #tpu.memory_space<vmem>>, %arg7: memref<256x256xbf16, #tpu.memory_space<vmem>>, %arg8: memref<1x256xf32, #tpu.memory_space<vmem>>, %arg9: memref<256x256xbf16, #tpu.memory_space<vmem>>, %arg10: memref<1x256xf32, #tpu.memory_space<vmem>>, %arg11: memref<1x256xf32, #tpu.memory_space<vmem>>, %arg12: memref<1x256xf32, #tpu.memory_space<vmem>>, %arg13: memref<256x512xbf16, #tpu.memory_space<vmem>>, %arg14: memref<1x512xf32, #tpu.memory_space<vmem>>, %arg15: memref<512x256xbf16, #tpu.memory_space<vmem>>, %arg16: memref<1x256xf32, #tpu.memory_space<vmem>>, %arg17: memref<1x256xf32, #tpu.memory_space<vmem>>, %arg18: memref<1x256xf32, #tpu.memory_space<vmem>>, %arg19: memref<1x128x256xf32, #tpu.memory_space<vmem>>) attributes {dimension_semantics = [#tpu.dimension_semantics<parallel>], iteration_bounds = array<i64: 4>, scalar_prefetch = 0 : i64, scratch_operands = 0 : i64, tpu.core_type = #tpu.core_type<tc>, window_params = [{transform_indices = @transform_0, window_bounds = array<i64: 1, 128, 256>}, {transform_indices = @transform_1, window_bounds = array<i64: 1, 1, 128>}, {pipeline_mode = #tpu.pipeline_mode<synchronous>, transform_indices = @transform_2, window_bounds = array<i64: 256, 256>}, {pipeline_mode = #tpu.pipeline_mode<synchronous>, transform_indices = @transform_3, window_bounds = array<i64: 1, 256>}, {pipeline_mode = #tpu.pipeline_mode<synchronous>, transform_indices = @transform_4, window_bounds = array<i64: 256, 256>}, {pipeline_mode = #tpu.pipeline_mode<synchronous>, transform_indices = @transform_5, window_bounds = array<i64: 1, 256>}, {pipeline_mode = #tpu.pipeline_mode<synchronous>, transform_indices = @transform_6, window_bounds = array<i64: 256, 256>}, {pipeline_mode = #tpu.pipeline_mode<synchronous>, transform_indices = @transform_7, window_bounds = array<i64: 1, 256>}, {pipeline_mode = #tpu.pipeline_mode<synchronous>, transform_indices = @transform_8, window_bounds = array<i64: 256, 256>}, {pipeline_mode = #tpu.pipeline_mode<synchronous>, transform_indices = @transform_9, window_bounds = array<i64: 1, 256>}, {pipeline_mode = #tpu.pipeline_mode<synchronous>, transform_indices = @transform_10, window_bounds = array<i64: 1, 256>}, {pipeline_mode = #tpu.pipeline_mode<synchronous>, transform_indices = @transform_11, window_bounds = array<i64: 1, 256>}, {pipeline_mode = #tpu.pipeline_mode<synchronous>, transform_indices = @transform_12, window_bounds = array<i64: 256, 512>}, {pipeline_mode = #tpu.pipeline_mode<synchronous>, transform_indices = @transform_13, window_bounds = array<i64: 1, 512>}, {pipeline_mode = #tpu.pipeline_mode<synchronous>, transform_indices = @transform_14, window_bounds = array<i64: 512, 256>}, {pipeline_mode = #tpu.pipeline_mode<synchronous>, transform_indices = @transform_15, window_bounds = array<i64: 1, 256>}, {pipeline_mode = #tpu.pipeline_mode<synchronous>, transform_indices = @transform_16, window_bounds = array<i64: 1, 256>}, {pipeline_mode = #tpu.pipeline_mode<synchronous>, transform_indices = @transform_17, window_bounds = array<i64: 1, 256>}, {transform_indices = @transform_18, window_bounds = array<i64: 1, 128, 256>}]} {
    %c0 = arith.constant 0 : index
    %c0_0 = arith.constant 0 : index
    %0 = vector.load %arg3[%c0, %c0_0] : memref<256x256xbf16, #tpu.memory_space<vmem>>, vector<256x256xbf16>
    %c0_1 = arith.constant 0 : index
    %c0_2 = arith.constant 0 : index
    %1 = vector.load %arg5[%c0_1, %c0_2] : memref<256x256xbf16, #tpu.memory_space<vmem>>, vector<256x256xbf16>
    %c0_3 = arith.constant 0 : index
    %c0_4 = arith.constant 0 : index
    %2 = vector.load %arg7[%c0_3, %c0_4] : memref<256x256xbf16, #tpu.memory_space<vmem>>, vector<256x256xbf16>
    %c0_5 = arith.constant 0 : index
    %c0_6 = arith.constant 0 : index
    %3 = vector.load %arg9[%c0_5, %c0_6] : memref<256x256xbf16, #tpu.memory_space<vmem>>, vector<256x256xbf16>
    %c0_7 = arith.constant 0 : index
    %c0_8 = arith.constant 0 : index
    %4 = vector.load %arg13[%c0_7, %c0_8] : memref<256x512xbf16, #tpu.memory_space<vmem>>, vector<256x512xbf16>
    %c0_9 = arith.constant 0 : index
    %c0_10 = arith.constant 0 : index
    %5 = vector.load %arg15[%c0_9, %c0_10] : memref<512x256xbf16, #tpu.memory_space<vmem>>, vector<512x256xbf16>
    %c0_11 = arith.constant 0 : index
    %c0_12 = arith.constant 0 : index
    %6 = vector.load %arg4[%c0_11, %c0_12] : memref<1x256xf32, #tpu.memory_space<vmem>>, vector<1x256xf32>
    %c0_13 = arith.constant 0 : index
    %c0_14 = arith.constant 0 : index
    %7 = vector.load %arg6[%c0_13, %c0_14] : memref<1x256xf32, #tpu.memory_space<vmem>>, vector<1x256xf32>
    %c0_15 = arith.constant 0 : index
    %c0_16 = arith.constant 0 : index
    %8 = vector.load %arg8[%c0_15, %c0_16] : memref<1x256xf32, #tpu.memory_space<vmem>>, vector<1x256xf32>
    %c0_17 = arith.constant 0 : index
    %c0_18 = arith.constant 0 : index
    %9 = vector.load %arg10[%c0_17, %c0_18] : memref<1x256xf32, #tpu.memory_space<vmem>>, vector<1x256xf32>
    %c0_19 = arith.constant 0 : index
    %c0_20 = arith.constant 0 : index
    %10 = vector.load %arg14[%c0_19, %c0_20] : memref<1x512xf32, #tpu.memory_space<vmem>>, vector<1x512xf32>
    %c0_21 = arith.constant 0 : index
    %c0_22 = arith.constant 0 : index
    %11 = vector.load %arg16[%c0_21, %c0_22] : memref<1x256xf32, #tpu.memory_space<vmem>>, vector<1x256xf32>
    %c0_23 = arith.constant 0 : index
    %c0_24 = arith.constant 0 : index
    %12 = vector.load %arg11[%c0_23, %c0_24] : memref<1x256xf32, #tpu.memory_space<vmem>>, vector<1x256xf32>
    %c0_25 = arith.constant 0 : index
    %c0_26 = arith.constant 0 : index
    %13 = vector.load %arg12[%c0_25, %c0_26] : memref<1x256xf32, #tpu.memory_space<vmem>>, vector<1x256xf32>
    %c0_27 = arith.constant 0 : index
    %c0_28 = arith.constant 0 : index
    %14 = vector.load %arg17[%c0_27, %c0_28] : memref<1x256xf32, #tpu.memory_space<vmem>>, vector<1x256xf32>
    %c0_29 = arith.constant 0 : index
    %c0_30 = arith.constant 0 : index
    %15 = vector.load %arg18[%c0_29, %c0_30] : memref<1x256xf32, #tpu.memory_space<vmem>>, vector<1x256xf32>
    %c0_31 = arith.constant 0 : index
    %c0_32 = arith.constant 0 : index
    %c0_33 = arith.constant 0 : index
    %16 = vector.load %arg1[%c0_31, %c0_32, %c0_33] : memref<1x128x256xf32, #tpu.memory_space<vmem>>, vector<1x128x256xf32>
    %17 = vector.shape_cast %16 : vector<1x128x256xf32> to vector<128x256xf32>
    %c0_34 = arith.constant 0 : index
    %c0_35 = arith.constant 0 : index
    %c0_36 = arith.constant 0 : index
    %18 = vector.load %arg2[%c0_34, %c0_35, %c0_36] : memref<1x1x128xf32, #tpu.memory_space<vmem>>, vector<1x1x128xf32>
    %19 = vector.shape_cast %18 : vector<1x1x128xf32> to vector<1x128xf32>
    %cst = arith.constant -1.000000e+09 : f32
    %20 = vector.broadcast %cst : f32 to vector<1x128xf32>
    %21 = arith.mulf %19, %20 : vector<1x128xf32>
    %c0_i32 = arith.constant 0 : i32
    %c2_i32 = arith.constant 2 : i32
    %22 = arith.addi %c0_i32, %c2_i32 : i32
    %c1_i32 = arith.constant 1 : i32
    %23 = scf.for %arg20 = %c0_i32 to %22 step %c1_i32 iter_args(%arg21 = %17) -> (vector<128x256xf32>)  : i32 {
      %27 = arith.truncf %arg21 : vector<128x256xf32> to vector<128x256xbf16>
      %cst_40 = arith.constant dense<0.000000e+00> : vector<128x256xf32>
      %28 = tpu.matmul %27, %0, %cst_40 {dimension_numbers = #tpu.dot_dimension_numbers<[1], [0], [0], [1], [0, 0, 1, 1], [], []>} : vector<128x256xbf16>, vector<256x256xbf16>, vector<128x256xf32> -> vector<128x256xf32>
      %29 = vector.broadcast %6 : vector<1x256xf32> to vector<128x256xf32>
      %30 = arith.addf %28, %29 : vector<128x256xf32>
      %cst_41 = arith.constant dense<0.000000e+00> : vector<128x256xf32>
      %31 = tpu.matmul %27, %1, %cst_41 {dimension_numbers = #tpu.dot_dimension_numbers<[1], [0], [0], [1], [0, 0, 1, 1], [], []>} : vector<128x256xbf16>, vector<256x256xbf16>, vector<128x256xf32> -> vector<128x256xf32>
      %32 = vector.broadcast %7 : vector<1x256xf32> to vector<128x256xf32>
      %33 = arith.addf %31, %32 : vector<128x256xf32>
      %cst_42 = arith.constant dense<0.000000e+00> : vector<128x256xf32>
      %34 = tpu.matmul %27, %2, %cst_42 {dimension_numbers = #tpu.dot_dimension_numbers<[1], [0], [0], [1], [0, 0, 1, 1], [], []>} : vector<128x256xbf16>, vector<256x256xbf16>, vector<128x256xf32> -> vector<128x256xf32>
      %35 = vector.broadcast %8 : vector<1x256xf32> to vector<128x256xf32>
      %36 = arith.addf %34, %35 : vector<128x256xf32>
      %37 = arith.truncf %30 : vector<128x256xf32> to vector<128x256xbf16>
      %38 = arith.truncf %33 : vector<128x256xf32> to vector<128x256xbf16>
      %39 = arith.truncf %36 : vector<128x256xf32> to vector<128x256xbf16>
      %cst_43 = arith.constant 0.000000e+00 : f32
      %40 = vector.broadcast %cst_43 : f32 to vector<128x256xf32>
      %41 = vector.extract_strided_slice %37 {offsets = [0, 0], sizes = [128, 128], strides = [1, 1]} : vector<128x256xbf16> to vector<128x128xbf16>
      %42 = vector.extract_strided_slice %38 {offsets = [0, 0], sizes = [128, 128], strides = [1, 1]} : vector<128x256xbf16> to vector<128x128xbf16>
      %cst_44 = arith.constant dense<0.000000e+00> : vector<128x128xf32>
      %43 = tpu.matmul %41, %42, %cst_44 {dimension_numbers = #tpu.dot_dimension_numbers<[1], [1], [0], [0], [0, 0, 1, 0], [], []>} : vector<128x128xbf16>, vector<128x128xbf16>, vector<128x128xf32> -> vector<128x128xf32>
      %cst_45 = arith.constant 0.0883883461 : f32
      %44 = vector.broadcast %cst_45 : f32 to vector<128x128xf32>
      %45 = arith.mulf %43, %44 : vector<128x128xf32>
      %46 = vector.broadcast %21 : vector<1x128xf32> to vector<128x128xf32>
      %47 = arith.addf %45, %46 : vector<128x128xf32>
      %cst_46 = arith.constant dense<0xFF800000> : vector<128xf32>
      %48 = vector.multi_reduction <maximumf>, %47, %cst_46 [1] : vector<128x128xf32> to vector<128xf32>
      %49 = vector.shape_cast %48 : vector<128xf32> to vector<128x1xf32>
      %50 = vector.broadcast %49 : vector<128x1xf32> to vector<128x128xf32>
      %51 = arith.subf %47, %50 : vector<128x128xf32>
      %52 = math.exp %51 : vector<128x128xf32>
      %cst_47 = arith.constant dense<0.000000e+00> : vector<128xf32>
      %53 = vector.multi_reduction <add>, %52, %cst_47 [1] : vector<128x128xf32> to vector<128xf32>
      %54 = vector.shape_cast %53 : vector<128xf32> to vector<128x1xf32>
      %55 = tpu.reciprocal %54 {approx = true} : vector<128x1xf32> -> vector<128x1xf32>
      %56 = vector.broadcast %55 : vector<128x1xf32> to vector<128x128xf32>
      %57 = arith.mulf %52, %56 : vector<128x128xf32>
      %58 = arith.truncf %57 : vector<128x128xf32> to vector<128x128xbf16>
      %59 = vector.extract_strided_slice %39 {offsets = [0, 0], sizes = [128, 128], strides = [1, 1]} : vector<128x256xbf16> to vector<128x128xbf16>
      %cst_48 = arith.constant dense<0.000000e+00> : vector<128x128xf32>
      %60 = tpu.matmul %58, %59, %cst_48 {dimension_numbers = #tpu.dot_dimension_numbers<[1], [0], [0], [1], [0, 0, 1, 1], [], []>} : vector<128x128xbf16>, vector<128x128xbf16>, vector<128x128xf32> -> vector<128x128xf32>
      %61 = arith.truncf %60 : vector<128x128xf32> to vector<128x128xbf16>
      %62 = vector.extract_strided_slice %3 {offsets = [0, 0], sizes = [128, 256], strides = [1, 1]} : vector<256x256xbf16> to vector<128x256xbf16>
      %cst_49 = arith.constant dense<0.000000e+00> : vector<128x256xf32>
      %63 = tpu.matmul %61, %62, %cst_49 {dimension_numbers = #tpu.dot_dimension_numbers<[1], [0], [0], [1], [0, 0, 1, 1], [], []>} : vector<128x128xbf16>, vector<128x256xbf16>, vector<128x256xf32> -> vector<128x256xf32>
      %64 = arith.addf %40, %63 : vector<128x256xf32>
      %65 = vector.extract_strided_slice %37 {offsets = [0, 128], sizes = [128, 128], strides = [1, 1]} : vector<128x256xbf16> to vector<128x128xbf16>
      %66 = vector.extract_strided_slice %38 {offsets = [0, 128], sizes = [128, 128], strides = [1, 1]} : vector<128x256xbf16> to vector<128x128xbf16>
      %cst_50 = arith.constant dense<0.000000e+00> : vector<128x128xf32>
      %67 = tpu.matmul %65, %66, %cst_50 {dimension_numbers = #tpu.dot_dimension_numbers<[1], [1], [0], [0], [0, 0, 1, 0], [], []>} : vector<128x128xbf16>, vector<128x128xbf16>, vector<128x128xf32> -> vector<128x128xf32>
      %cst_51 = arith.constant 0.0883883461 : f32
      %68 = vector.broadcast %cst_51 : f32 to vector<128x128xf32>
      %69 = arith.mulf %67, %68 : vector<128x128xf32>
      %70 = vector.broadcast %21 : vector<1x128xf32> to vector<128x128xf32>
      %71 = arith.addf %69, %70 : vector<128x128xf32>
      %cst_52 = arith.constant dense<0xFF800000> : vector<128xf32>
      %72 = vector.multi_reduction <maximumf>, %71, %cst_52 [1] : vector<128x128xf32> to vector<128xf32>
      %73 = vector.shape_cast %72 : vector<128xf32> to vector<128x1xf32>
      %74 = vector.broadcast %73 : vector<128x1xf32> to vector<128x128xf32>
      %75 = arith.subf %71, %74 : vector<128x128xf32>
      %76 = math.exp %75 : vector<128x128xf32>
      %cst_53 = arith.constant dense<0.000000e+00> : vector<128xf32>
      %77 = vector.multi_reduction <add>, %76, %cst_53 [1] : vector<128x128xf32> to vector<128xf32>
      %78 = vector.shape_cast %77 : vector<128xf32> to vector<128x1xf32>
      %79 = tpu.reciprocal %78 {approx = true} : vector<128x1xf32> -> vector<128x1xf32>
      %80 = vector.broadcast %79 : vector<128x1xf32> to vector<128x128xf32>
      %81 = arith.mulf %76, %80 : vector<128x128xf32>
      %82 = arith.truncf %81 : vector<128x128xf32> to vector<128x128xbf16>
      %83 = vector.extract_strided_slice %39 {offsets = [0, 128], sizes = [128, 128], strides = [1, 1]} : vector<128x256xbf16> to vector<128x128xbf16>
      %cst_54 = arith.constant dense<0.000000e+00> : vector<128x128xf32>
      %84 = tpu.matmul %82, %83, %cst_54 {dimension_numbers = #tpu.dot_dimension_numbers<[1], [0], [0], [1], [0, 0, 1, 1], [], []>} : vector<128x128xbf16>, vector<128x128xbf16>, vector<128x128xf32> -> vector<128x128xf32>
      %85 = arith.truncf %84 : vector<128x128xf32> to vector<128x128xbf16>
      %86 = vector.extract_strided_slice %3 {offsets = [128, 0], sizes = [128, 256], strides = [1, 1]} : vector<256x256xbf16> to vector<128x256xbf16>
      %cst_55 = arith.constant dense<0.000000e+00> : vector<128x256xf32>
      %87 = tpu.matmul %85, %86, %cst_55 {dimension_numbers = #tpu.dot_dimension_numbers<[1], [0], [0], [1], [0, 0, 1, 1], [], []>} : vector<128x128xbf16>, vector<128x256xbf16>, vector<128x256xf32> -> vector<128x256xf32>
      %88 = arith.addf %64, %87 : vector<128x256xf32>
      %89 = vector.broadcast %9 : vector<1x256xf32> to vector<128x256xf32>
      %90 = arith.addf %88, %89 : vector<128x256xf32>
      %91 = arith.addf %arg21, %90 : vector<128x256xf32>
      %cst_56 = arith.constant dense<0.000000e+00> : vector<128xf32>
      %92 = vector.multi_reduction <add>, %91, %cst_56 [1] : vector<128x256xf32> to vector<128xf32>
      %93 = vector.shape_cast %92 : vector<128xf32> to vector<128x1xf32>
      %cst_57 = arith.constant 2.560000e+02 : f32
      %94 = vector.broadcast %cst_57 : f32 to vector<128x1xf32>
      %95 = arith.divf %93, %94 : vector<128x1xf32>
      %96 = arith.mulf %91, %91 : vector<128x256xf32>
      %cst_58 = arith.constant dense<0.000000e+00> : vector<128xf32>
      %97 = vector.multi_reduction <add>, %96, %cst_58 [1] : vector<128x256xf32> to vector<128xf32>
      %98 = vector.shape_cast %97 : vector<128xf32> to vector<128x1xf32>
      %cst_59 = arith.constant 2.560000e+02 : f32
      %99 = vector.broadcast %cst_59 : f32 to vector<128x1xf32>
      %100 = arith.divf %98, %99 : vector<128x1xf32>
      %101 = arith.mulf %95, %95 : vector<128x1xf32>
      %102 = arith.subf %100, %101 : vector<128x1xf32>
      %103 = vector.broadcast %95 : vector<128x1xf32> to vector<128x256xf32>
      %104 = arith.subf %91, %103 : vector<128x256xf32>
      %cst_60 = arith.constant 9.99999974E-6 : f32
      %105 = vector.broadcast %cst_60 : f32 to vector<128x1xf32>
      %106 = arith.addf %102, %105 : vector<128x1xf32>
      %107 = math.rsqrt %106 : vector<128x1xf32>
      %108 = vector.broadcast %107 : vector<128x1xf32> to vector<128x256xf32>
      %109 = arith.mulf %104, %108 : vector<128x256xf32>
      %110 = vector.broadcast %12 : vector<1x256xf32> to vector<128x256xf32>
      %111 = arith.mulf %109, %110 : vector<128x256xf32>
      %112 = vector.broadcast %13 : vector<1x256xf32> to vector<128x256xf32>
      %113 = arith.addf %111, %112 : vector<128x256xf32>
      %114 = arith.truncf %113 : vector<128x256xf32> to vector<128x256xbf16>
      %cst_61 = arith.constant dense<0.000000e+00> : vector<128x512xf32>
      %115 = tpu.matmul %114, %4, %cst_61 {dimension_numbers = #tpu.dot_dimension_numbers<[1], [0], [0], [1], [0, 0, 1, 1], [], []>} : vector<128x256xbf16>, vector<256x512xbf16>, vector<128x512xf32> -> vector<128x512xf32>
      %116 = vector.broadcast %10 : vector<1x512xf32> to vector<128x512xf32>
      %117 = arith.addf %115, %116 : vector<128x512xf32>
      %cst_62 = arith.constant 0.000000e+00 : f32
      %118 = vector.broadcast %cst_62 : f32 to vector<128x512xf32>
      %119 = arith.maximumf %117, %118 : vector<128x512xf32>
      %120 = arith.truncf %119 : vector<128x512xf32> to vector<128x512xbf16>
      %cst_63 = arith.constant dense<0.000000e+00> : vector<128x256xf32>
      %121 = tpu.matmul %120, %5, %cst_63 {dimension_numbers = #tpu.dot_dimension_numbers<[1], [0], [0], [1], [0, 0, 1, 1], [], []>} : vector<128x512xbf16>, vector<512x256xbf16>, vector<128x256xf32> -> vector<128x256xf32>
      %122 = vector.broadcast %11 : vector<1x256xf32> to vector<128x256xf32>
      %123 = arith.addf %121, %122 : vector<128x256xf32>
      %124 = arith.addf %113, %123 : vector<128x256xf32>
      %cst_64 = arith.constant dense<0.000000e+00> : vector<128xf32>
      %125 = vector.multi_reduction <add>, %124, %cst_64 [1] : vector<128x256xf32> to vector<128xf32>
      %126 = vector.shape_cast %125 : vector<128xf32> to vector<128x1xf32>
      %cst_65 = arith.constant 2.560000e+02 : f32
      %127 = vector.broadcast %cst_65 : f32 to vector<128x1xf32>
      %128 = arith.divf %126, %127 : vector<128x1xf32>
      %129 = arith.mulf %124, %124 : vector<128x256xf32>
      %cst_66 = arith.constant dense<0.000000e+00> : vector<128xf32>
      %130 = vector.multi_reduction <add>, %129, %cst_66 [1] : vector<128x256xf32> to vector<128xf32>
      %131 = vector.shape_cast %130 : vector<128xf32> to vector<128x1xf32>
      %cst_67 = arith.constant 2.560000e+02 : f32
      %132 = vector.broadcast %cst_67 : f32 to vector<128x1xf32>
      %133 = arith.divf %131, %132 : vector<128x1xf32>
      %134 = arith.mulf %128, %128 : vector<128x1xf32>
      %135 = arith.subf %133, %134 : vector<128x1xf32>
      %136 = vector.broadcast %128 : vector<128x1xf32> to vector<128x256xf32>
      %137 = arith.subf %124, %136 : vector<128x256xf32>
      %cst_68 = arith.constant 9.99999974E-6 : f32
      %138 = vector.broadcast %cst_68 : f32 to vector<128x1xf32>
      %139 = arith.addf %135, %138 : vector<128x1xf32>
      %140 = math.rsqrt %139 : vector<128x1xf32>
      %141 = vector.broadcast %140 : vector<128x1xf32> to vector<128x256xf32>
      %142 = arith.mulf %137, %141 : vector<128x256xf32>
      %143 = vector.broadcast %14 : vector<1x256xf32> to vector<128x256xf32>
      %144 = arith.mulf %142, %143 : vector<128x256xf32>
      %145 = vector.broadcast %15 : vector<1x256xf32> to vector<128x256xf32>
      %146 = arith.addf %144, %145 : vector<128x256xf32>
      scf.yield %146 : vector<128x256xf32>
    }
    %c0_37 = arith.constant 0 : index
    %c0_38 = arith.constant 0 : index
    %c0_39 = arith.constant 0 : index
    %24 = vector.load %arg19[%c0_37, %c0_38, %c0_39] : memref<1x128x256xf32, #tpu.memory_space<vmem>>, vector<1x128x256xf32>
    %25 = vector.shape_cast %24 : vector<1x128x256xf32> to vector<128x256xf32>
    %26 = vector.shape_cast %23 : vector<128x256xf32> to vector<1x128x256xf32>
    tpu.vector_store %arg19[%c0_37, %c0_38, %c0_39], %26 {strides = array<i32>} : memref<1x128x256xf32, #tpu.memory_space<vmem>>, vector<1x128x256xf32>,
    return
  }
  func.func @transform_0(%arg0: i32) -> (i32, i32, i32) {
    %c0_i32 = arith.constant 0 : i32
    %c0_i32_0 = arith.constant 0 : i32
    %c0_i32_1 = arith.constant 0 : i32
    return %arg0, %c0_i32, %c0_i32_0 : i32, i32, i32
  }
  func.func @transform_1(%arg0: i32) -> (i32, i32, i32) {
    %c0_i32 = arith.constant 0 : i32
    %c0_i32_0 = arith.constant 0 : i32
    %c0_i32_1 = arith.constant 0 : i32
    return %arg0, %c0_i32, %c0_i32_0 : i32, i32, i32
  }
  func.func @transform_2(%arg0: i32) -> (i32, i32) {
    %c0_i32 = arith.constant 0 : i32
    %c0_i32_0 = arith.constant 0 : i32
    %c0_i32_1 = arith.constant 0 : i32
    return %c0_i32, %c0_i32_0 : i32, i32
  }
  func.func @transform_3(%arg0: i32) -> (i32, i32) {
    %c0_i32 = arith.constant 0 : i32
    %c0_i32_0 = arith.constant 0 : i32
    %c0_i32_1 = arith.constant 0 : i32
    return %c0_i32, %c0_i32_0 : i32, i32
  }
  func.func @transform_4(%arg0: i32) -> (i32, i32) {
    %c0_i32 = arith.constant 0 : i32
    %c0_i32_0 = arith.constant 0 : i32
    %c0_i32_1 = arith.constant 0 : i32
    return %c0_i32, %c0_i32_0 : i32, i32
  }
  func.func @transform_5(%arg0: i32) -> (i32, i32) {
    %c0_i32 = arith.constant 0 : i32
    %c0_i32_0 = arith.constant 0 : i32
    %c0_i32_1 = arith.constant 0 : i32
    return %c0_i32, %c0_i32_0 : i32, i32
  }
  func.func @transform_6(%arg0: i32) -> (i32, i32) {
    %c0_i32 = arith.constant 0 : i32
    %c0_i32_0 = arith.constant 0 : i32
    %c0_i32_1 = arith.constant 0 : i32
    return %c0_i32, %c0_i32_0 : i32, i32
  }
  func.func @transform_7(%arg0: i32) -> (i32, i32) {
    %c0_i32 = arith.constant 0 : i32
    %c0_i32_0 = arith.constant 0 : i32
    %c0_i32_1 = arith.constant 0 : i32
    return %c0_i32, %c0_i32_0 : i32, i32
  }
  func.func @transform_8(%arg0: i32) -> (i32, i32) {
    %c0_i32 = arith.constant 0 : i32
    %c0_i32_0 = arith.constant 0 : i32
    %c0_i32_1 = arith.constant 0 : i32
    return %c0_i32, %c0_i32_0 : i32, i32
  }
  func.func @transform_9(%arg0: i32) -> (i32, i32) {
    %c0_i32 = arith.constant 0 : i32
    %c0_i32_0 = arith.constant 0 : i32
    %c0_i32_1 = arith.constant 0 : i32
    return %c0_i32, %c0_i32_0 : i32, i32
  }
  func.func @transform_10(%arg0: i32) -> (i32, i32) {
    %c0_i32 = arith.constant 0 : i32
    %c0_i32_0 = arith.constant 0 : i32
    %c0_i32_1 = arith.constant 0 : i32
    return %c0_i32, %c0_i32_0 : i32, i32
  }
  func.func @transform_11(%arg0: i32) -> (i32, i32) {
    %c0_i32 = arith.constant 0 : i32
    %c0_i32_0 = arith.constant 0 : i32
    %c0_i32_1 = arith.constant 0 : i32
    return %c0_i32, %c0_i32_0 : i32, i32
  }
  func.func @transform_12(%arg0: i32) -> (i32, i32) {
    %c0_i32 = arith.constant 0 : i32
    %c0_i32_0 = arith.constant 0 : i32
    %c0_i32_1 = arith.constant 0 : i32
    return %c0_i32, %c0_i32_0 : i32, i32
  }
  func.func @transform_13(%arg0: i32) -> (i32, i32) {
    %c0_i32 = arith.constant 0 : i32
    %c0_i32_0 = arith.constant 0 : i32
    %c0_i32_1 = arith.constant 0 : i32
    return %c0_i32, %c0_i32_0 : i32, i32
  }
  func.func @transform_14(%arg0: i32) -> (i32, i32) {
    %c0_i32 = arith.constant 0 : i32
    %c0_i32_0 = arith.constant 0 : i32
    %c0_i32_1 = arith.constant 0 : i32
    return %c0_i32, %c0_i32_0 : i32, i32
  }
  func.func @transform_15(%arg0: i32) -> (i32, i32) {
    %c0_i32 = arith.constant 0 : i32
    %c0_i32_0 = arith.constant 0 : i32
    %c0_i32_1 = arith.constant 0 : i32
    return %c0_i32, %c0_i32_0 : i32, i32
  }
  func.func @transform_16(%arg0: i32) -> (i32, i32) {
    %c0_i32 = arith.constant 0 : i32
    %c0_i32_0 = arith.constant 0 : i32
    %c0_i32_1 = arith.constant 0 : i32
    return %c0_i32, %c0_i32_0 : i32, i32
  }
  func.func @transform_17(%arg0: i32) -> (i32, i32) {
    %c0_i32 = arith.constant 0 : i32
    %c0_i32_0 = arith.constant 0 : i32
    %c0_i32_1 = arith.constant 0 : i32
    return %c0_i32, %c0_i32_0 : i32, i32
  }
  func.func @transform_18(%arg0: i32) -> (i32, i32, i32) {
    %c0_i32 = arith.constant 0 : i32
    %c0_i32_0 = arith.constant 0 : i32
    %c0_i32_1 = arith.constant 0 : i32
    return %arg0, %c0_i32, %c0_i32_0 : i32, i32, i32
  }
}

</mosaic_0001>

<llo_original>
// kernel: encoder_forward.1
$region0: #{encoder_forward.1}
  #allocation0 [shape = 'u32[]', space=smem, size = 0x4, offset = 0x4, fixed_abs, tag = 'smem constant byte address 0x4 - core index']
  #allocation1 [shape = 'u32[144,128]{1,0:T(1,128)}', space=vmem, size = 0x12000, scoped, tag = 'internal scratch']
  %s0 = inlined_call_operand.hbm [shape: f32[4,128,256], index: 0, kind: input, shape index: {}]
  %s1 = inlined_call_operand.hbm [shape: f32[4,1,128], index: 1, kind: input, shape index: {}]
  %s2 = inlined_call_operand.hbm [shape: bf16[256,256], index: 2, kind: input, shape index: {}]
  %s3 = inlined_call_operand.hbm [shape: f32[1,256], index: 3, kind: input, shape index: {}]
  %s4 = inlined_call_operand.hbm [shape: bf16[256,256], index: 4, kind: input, shape index: {}]
  %s5 = inlined_call_operand.hbm [shape: f32[1,256], index: 5, kind: input, shape index: {}]
  %s6 = inlined_call_operand.hbm [shape: bf16[256,256], index: 6, kind: input, shape index: {}]
  %s7 = inlined_call_operand.hbm [shape: f32[1,256], index: 7, kind: input, shape index: {}]
  %s8 = inlined_call_operand.hbm [shape: bf16[256,256], index: 8, kind: input, shape index: {}]
  %s9 = inlined_call_operand.hbm [shape: f32[1,256], index: 9, kind: input, shape index: {}]
  %s10 = inlined_call_operand.hbm [shape: f32[1,256], index: 10, kind: input, shape index: {}]
  %s11 = inlined_call_operand.hbm [shape: f32[1,256], index: 11, kind: input, shape index: {}]
  %s12 = inlined_call_operand.hbm [shape: bf16[256,512], index: 12, kind: input, shape index: {}]
  %s13 = inlined_call_operand.hbm [shape: f32[1,512], index: 13, kind: input, shape index: {}]
  %s14 = inlined_call_operand.hbm [shape: bf16[512,256], index: 14, kind: input, shape index: {}]
  %s15 = inlined_call_operand.hbm [shape: f32[1,256], index: 15, kind: input, shape index: {}]
  %s16 = inlined_call_operand.hbm [shape: f32[1,256], index: 16, kind: input, shape index: {}]
  %s17 = inlined_call_operand.hbm [shape: f32[1,256], index: 17, kind: input, shape index: {}]
  %s18 = inlined_call_operand.hbm [shape: f32[4,128,256], index: 18, kind: output, shape index: {}]
  %s19 = sld [smem:[#allocation0]]
  $region184: #{encoder_forward.1} parent=0
    _
  %s21 = ssub.s32 1, %s19
  %s22 = scalar_select 0, %s21, %s19
  $region1: #{encoder_forward.1} parent=0
    #allocation2 [shape = 'u8[262144]{0}', space=vmem, size = 0x40000, scoped, tag = 'input window, operand 0']
    #allocation3 [shape = 's32[2]{0}', space=sflag, size = 0x8, scoped, tag = 'scoped memory for encoder_forward.1']
    #allocation4 [shape = 's32[2]{0}', space=sflag, size = 0x8, scoped, tag = 'scoped memory for encoder_forward.1']
    #allocation5 [shape = 'u8[1024]{0}', space=vmem, size = 0x400, scoped, tag = 'input window, operand 1']
    #allocation6 [shape = 's32[2]{0}', space=sflag, size = 0x8, scoped, tag = 'scoped memory for encoder_forward.1']
    #allocation7 [shape = 'u8[131072]{0}', space=vmem, size = 0x20000, scoped, tag = 'input window, operand 2, single buffered']
    #allocation8 [shape = 'u8[1024]{0}', space=vmem, size = 0x400, scoped, tag = 'input window, operand 3, single buffered']
    #allocation9 [shape = 's32[1]{0}', space=sflag, size = 0x4, scoped, tag = 'scoped memory for encoder_forward.1']
    #allocation10 [shape = 'u8[131072]{0}', space=vmem, size = 0x20000, scoped, tag = 'input window, operand 4, single buffered']
    #allocation11 [shape = 'u8[1024]{0}', space=vmem, size = 0x400, scoped, tag = 'input window, operand 5, single buffered']
    #allocation12 [shape = 's32[1]{0}', space=sflag, size = 0x4, scoped, tag = 'scoped memory for encoder_forward.1']
    #allocation13 [shape = 'u8[131072]{0}', space=vmem, size = 0x20000, scoped, tag = 'input window, operand 6, single buffered']
    #allocation14 [shape = 'u8[1024]{0}', space=vmem, size = 0x400, scoped, tag = 'input window, operand 7, single buffered']
    #allocation15 [shape = 's32[1]{0}', space=sflag, size = 0x4, scoped, tag = 'scoped memory for encoder_forward.1']
    #allocation16 [shape = 'u8[131072]{0}', space=vmem, size = 0x20000, scoped, tag = 'input window, operand 8, single buffered']
    #allocation17 [shape = 'u8[1024]{0}', space=vmem, size = 0x400, scoped, tag = 'input window, operand 9, single buffered']
    #allocation18 [shape = 's32[1]{0}', space=sflag, size = 0x4, scoped, tag = 'scoped memory for encoder_forward.1']
    #allocation19 [shape = 'u8[1024]{0}', space=vmem, size = 0x400, scoped, tag = 'input window, operand 10, single buffered']
    #allocation20 [shape = 'u8[1024]{0}', space=vmem, size = 0x400, scoped, tag = 'input window, operand 11, single buffered']
    #allocation21 [shape = 's32[1]{0}', space=sflag, size = 0x4, scoped, tag = 'scoped memory for encoder_forward.1']
    #allocation22 [shape = 'u8[262144]{0}', space=vmem, size = 0x40000, scoped, tag = 'input window, operand 12, single buffered']
    #allocation23 [shape = 'u8[2048]{0}', space=vmem, size = 0x800, scoped, tag = 'input window, operand 13, single buffered']
    #allocation24 [shape = 's32[1]{0}', space=sflag, size = 0x4, scoped, tag = 'scoped memory for encoder_forward.1']
    #allocation25 [shape = 'u8[262144]{0}', space=vmem, size = 0x40000, scoped, tag = 'input window, operand 14, single buffered']
    #allocation26 [shape = 'u8[1024]{0}', space=vmem, size = 0x400, scoped, tag = 'input window, operand 15, single buffered']
    #allocation27 [shape = 's32[1]{0}', space=sflag, size = 0x4, scoped, tag = 'scoped memory for encoder_forward.1']
    #allocation28 [shape = 'u8[1024]{0}', space=vmem, size = 0x400, scoped, tag = 'input window, operand 16, single buffered']
    #allocation29 [shape = 'u8[1024]{0}', space=vmem, size = 0x400, scoped, tag = 'input window, operand 17, single buffered']
    #allocation30 [shape = 's32[1]{0}', space=sflag, size = 0x4, scoped, tag = 'scoped memory for encoder_forward.1']
    #allocation31 [shape = 'u8[262144]{0}', space=vmem, size = 0x40000, scoped, tag = 'output window, operand 0']
    %23 = vsyncpa [#allocation3], 0
    %s24 = scalar_lea.sflag [#allocation3], 1
    %25 = vsyncpa %s24, 0
    %26 = vsyncpa [#allocation6], 0
    %s27 = scalar_lea.sflag [#allocation6], 1
    %28 = vsyncpa %s27, 0
    %29 = vsyncpa [#allocation9], 0
    %30 = vsyncpa [#allocation12], 0
    %31 = vsyncpa [#allocation15], 0
    %32 = vsyncpa [#allocation18], 0
    %33 = vsyncpa [#allocation21], 0
    %34 = vsyncpa [#allocation24], 0
    %35 = vsyncpa [#allocation27], 0
    %36 = vsyncpa [#allocation30], 0
    %37 = vsyncpa [#allocation4], 0
    %s38 = scalar_lea.sflag [#allocation4], 1
    %39 = vsyncpa %s38, 0
    loop: start=0, step=1, limit=6
    $region2: #{encoder_forward.1} parent=1 // loop_pre_header
      _
    $region3: #{encoder_forward.1} parent=1 // loop_header
      %s41 = sphi 0, %s45
      %p42 = scmp.ge.s32.totalorder %s41, 6
      %s51 = sphi 0, %s53
      %s54 = sphi 0, %s51
      %s55 = sphi 0, %s54
      %s71 = sphi 0, %s55
      %s77 = sphi 0, %s79
      %s80 = sphi 0, %s77
      %s81 = sphi 0, %s80
      %s97 = sphi 0, %s81
      %s101 = sphi 0, %s101
      %s103 = sphi 0, %s101
      %s104 = sphi 0, %s103
      %s118 = sphi 0, %s104
      %s122 = sphi 0, %s122
      %s124 = sphi 0, %s122
      %s125 = sphi 0, %s124
      %s139 = sphi 0, %s125
      %s143 = sphi 0, %s143
      %s145 = sphi 0, %s143
      %s146 = sphi 0, %s145
      %s160 = sphi 0, %s146
      %s164 = sphi 0, %s164
      %s166 = sphi 0, %s164
      %s167 = sphi 0, %s166
      %s181 = sphi 0, %s167
      %s185 = sphi 0, %s185
      %s187 = sphi 0, %s185
      %s188 = sphi 0, %s187
      %s202 = sphi 0, %s188
      %s206 = sphi 0, %s206
      %s208 = sphi 0, %s206
      %s209 = sphi 0, %s208
      %s223 = sphi 0, %s209
      %s227 = sphi 0, %s227
      %s229 = sphi 0, %s227
      %s230 = sphi 0, %s229
      %s244 = sphi 0, %s230
      %s248 = sphi 0, %s248
      %s250 = sphi 0, %s248
      %s251 = sphi 0, %s250
      %s265 = sphi 0, %s251
      %s269 = sphi 0, %s269
      %s271 = sphi 0, %s269
      %s272 = sphi 0, %s271
      %s286 = sphi 0, %s272
      %s290 = sphi 0, %s290
      %s292 = sphi 0, %s290
      %s293 = sphi 0, %s292
      %s307 = sphi 0, %s293
      %s311 = sphi 0, %s311
      %s313 = sphi 0, %s311
      %s314 = sphi 0, %s313
      %s328 = sphi 0, %s314
      %s332 = sphi 0, %s332
      %s334 = sphi 0, %s332
      %s335 = sphi 0, %s334
      %s349 = sphi 0, %s335
      %s353 = sphi 0, %s353
      %s355 = sphi 0, %s353
      %s356 = sphi 0, %s355
      %s370 = sphi 0, %s356
      %s374 = sphi 0, %s374
      %s376 = sphi 0, %s374
      %s377 = sphi 0, %s376
      %s391 = sphi 0, %s377
      %s395 = sphi 0, %s395
      %s397 = sphi 0, %s395
      %s398 = sphi 0, %s397
      %s412 = sphi 0, %s398
      %s416 = sphi 0, %s416
      %s418 = sphi 0, %s416
      %s419 = sphi 0, %s418
      %s433 = sphi 0, %s419
      %s439 = sphi 0, %s441
      %s442 = sphi 0, %s439
      %s443 = sphi 0, %s442
      %s459 = sphi 0, %s443
    $region4: #{encoder_forward.1} parent=1 // loop_header_branch
      %44 = sbr.rel (%p42) target = $region8
    $region5: #{encoder_forward.1} parent=1 // loop_body
      %s46 = ssub.s32 %s41, 1
      %s47 = ssub.s32 %s41, 2
      %s48 = sadd.s32 %s41, 1
      %s49 = ssub.s32 %s41, %s48
      %p50 = scmp.eq.s32.totalorder %s49, 0
      %s52 = sadd.s32 %s51, 1
      %s53 = scalar_select %p50, %s51, %s52
      %p56 = pneg %p50
      %p57 = scmp.eq.s32.totalorder %s41, 3
      %p58 = por %p56, %p57
      %p59 = scmp.ne.s32.totalorder %s51, %s54
      %p60 = scmp.eq.s32.totalorder %s41, 0
      %p61 = por %p59, %p60
      %p62 = scmp.ne.s32.totalorder %s51, %s54
      %p63 = scmp.eq.s32.totalorder %s46, 3
      %p64 = por %p62, %p63
      %p65 = scmp.ne.s32.totalorder %s54, %s55
      %p66 = scmp.eq.s32.totalorder %s46, 0
      %p67 = por %p65, %p66
      %p68 = scmp.ne.s32.totalorder %s54, %s55
      %p69 = scmp.eq.s32.totalorder %s47, 3
      %p70 = por %p68, %p69
      %p72 = scmp.ne.s32.totalorder %s55, %s71
      %p73 = scmp.eq.s32.totalorder %s47, 0
      %p74 = por %p72, %p73
      %s75 = ssub.s32 %s41, %s48
      %p76 = scmp.eq.s32.totalorder %s75, 0
      %s78 = sadd.s32 %s77, 1
      %s79 = scalar_select %p76, %s77, %s78
      %p82 = pneg %p76
      %p83 = scmp.eq.s32.totalorder %s41, 3
      %p84 = por %p82, %p83
      %p85 = scmp.ne.s32.totalorder %s77, %s80
      %p86 = scmp.eq.s32.totalorder %s41, 0
      %p87 = por %p85, %p86
      %p88 = scmp.ne.s32.totalorder %s77, %s80
      %p89 = scmp.eq.s32.totalorder %s46, 3
      %p90 = por %p88, %p89
      %p91 = scmp.ne.s32.totalorder %s80, %s81
      %p92 = scmp.eq.s32.totalorder %s46, 0
      %p93 = por %p91, %p92
      %p94 = scmp.ne.s32.totalorder %s80, %s81
      %p95 = scmp.eq.s32.totalorder %s47, 3
      %p96 = por %p94, %p95
      %p98 = scmp.ne.s32.totalorder %s81, %s97
      %p99 = scmp.eq.s32.totalorder %s47, 0
      %p100 = por %p98, %p99
      %s102 = sadd.s32 %s101, 1
      %p105 = scmp.eq.s32.totalorder %s41, 3
      %p106 = scmp.ne.s32.totalorder %s101, %s103
      %p107 = scmp.eq.s32.totalorder %s41, 0
      %p108 = por %p106, %p107
      %p109 = scmp.ne.s32.totalorder %s101, %s103
      %p110 = scmp.eq.s32.totalorder %s46, 3
      %p111 = por %p109, %p110
      %p112 = scmp.ne.s32.totalorder %s103, %s104
      %p113 = scmp.eq.s32.totalorder %s46, 0
      %p114 = por %p112, %p113
      %p115 = scmp.ne.s32.totalorder %s103, %s104
      %p116 = scmp.eq.s32.totalorder %s47, 3
      %p117 = por %p115, %p116
      %p119 = scmp.ne.s32.totalorder %s104, %s118
      %p120 = scmp.eq.s32.totalorder %s47, 0
      %p121 = por %p119, %p120
      %s123 = sadd.s32 %s122, 1
      %p126 = scmp.eq.s32.totalorder %s41, 3
      %p127 = scmp.ne.s32.totalorder %s122, %s124
      %p128 = scmp.eq.s32.totalorder %s41, 0
      %p129 = por %p127, %p128
      %p130 = scmp.ne.s32.totalorder %s122, %s124
      %p131 = scmp.eq.s32.totalorder %s46, 3
      %p132 = por %p130, %p131
      %p133 = scmp.ne.s32.totalorder %s124, %s125
      %p134 = scmp.eq.s32.totalorder %s46, 0
      %p135 = por %p133, %p134
      %p136 = scmp.ne.s32.totalorder %s124, %s125
      %p137 = scmp.eq.s32.totalorder %s47, 3
      %p138 = por %p136, %p137
      %p140 = scmp.ne.s32.totalorder %s125, %s139
      %p141 = scmp.eq.s32.totalorder %s47, 0
      %p142 = por %p140, %p141
      %s144 = sadd.s32 %s143, 1
      %p147 = scmp.eq.s32.totalorder %s41, 3
      %p148 = scmp.ne.s32.totalorder %s143, %s145
      %p149 = scmp.eq.s32.totalorder %s41, 0
      %p150 = por %p148, %p149
      %p151 = scmp.ne.s32.totalorder %s143, %s145
      %p152 = scmp.eq.s32.totalorder %s46, 3
      %p153 = por %p151, %p152
      %p154 = scmp.ne.s32.totalorder %s145, %s146
      %p155 = scmp.eq.s32.totalorder %s46, 0
      %p156 = por %p154, %p155
      %p157 = scmp.ne.s32.totalorder %s145, %s146
      %p158 = scmp.eq.s32.totalorder %s47, 3
      %p159 = por %p157, %p158
      %p161 = scmp.ne.s32.totalorder %s146, %s160
      %p162 = scmp.eq.s32.totalorder %s47, 0
      %p163 = por %p161, %p162
      %s165 = sadd.s32 %s164, 1
      %p168 = scmp.eq.s32.totalorder %s41, 3
      %p169 = scmp.ne.s32.totalorder %s164, %s166
      %p170 = scmp.eq.s32.totalorder %s41, 0
      %p171 = por %p169, %p170
      %p172 = scmp.ne.s32.totalorder %s164, %s166
      %p173 = scmp.eq.s32.totalorder %s46, 3
      %p174 = por %p172, %p173
      %p175 = scmp.ne.s32.totalorder %s166, %s167
      %p176 = scmp.eq.s32.totalorder %s46, 0
      %p177 = por %p175, %p176
      %p178 = scmp.ne.s32.totalorder %s166, %s167
      %p179 = scmp.eq.s32.totalorder %s47, 3
      %p180 = por %p178, %p179
      %p182 = scmp.ne.s32.totalorder %s167, %s181
      %p183 = scmp.eq.s32.totalorder %s47, 0
      %p184 = por %p182, %p183
      %s186 = sadd.s32 %s185, 1
      %p189 = scmp.eq.s32.totalorder %s41, 3
      %p190 = scmp.ne.s32.totalorder %s185, %s187
      %p191 = scmp.eq.s32.totalorder %s41, 0
      %p192 = por %p190, %p191
      %p193 = scmp.ne.s32.totalorder %s185, %s187
      %p194 = scmp.eq.s32.totalorder %s46, 3
      %p195 = por %p193, %p194
      %p196 = scmp.ne.s32.totalorder %s187, %s188
      %p197 = scmp.eq.s32.totalorder %s46, 0
      %p198 = por %p196, %p197
      %p199 = scmp.ne.s32.totalorder %s187, %s188
      %p200 = scmp.eq.s32.totalorder %s47, 3
      %p201 = por %p199, %p200
      %p203 = scmp.ne.s32.totalorder %s188, %s202
      %p204 = scmp.eq.s32.totalorder %s47, 0
      %p205 = por %p203, %p204
      %s207 = sadd.s32 %s206, 1
      %p210 = scmp.eq.s32.totalorder %s41, 3
      %p211 = scmp.ne.s32.totalorder %s206, %s208
      %p212 = scmp.eq.s32.totalorder %s41, 0
      %p213 = por %p211, %p212
      %p214 = scmp.ne.s32.totalorder %s206, %s208
      %p215 = scmp.eq.s32.totalorder %s46, 3
      %p216 = por %p214, %p215
      %p217 = scmp.ne.s32.totalorder %s208, %s209
      %p218 = scmp.eq.s32.totalorder %s46, 0
      %p219 = por %p217, %p218
      %p220 = scmp.ne.s32.totalorder %s208, %s209
      %p221 = scmp.eq.s32.totalorder %s47, 3
      %p222 = por %p220, %p221
      %p224 = scmp.ne.s32.totalorder %s209, %s223
      %p225 = scmp.eq.s32.totalorder %s47, 0
      %p226 = por %p224, %p225
      %s228 = sadd.s32 %s227, 1
      %p231 = scmp.eq.s32.totalorder %s41, 3
      %p232 = scmp.ne.s32.totalorder %s227, %s229
      %p233 = scmp.eq.s32.totalorder %s41, 0
      %p234 = por %p232, %p233
      %p235 = scmp.ne.s32.totalorder %s227, %s229
      %p236 = scmp.eq.s32.totalorder %s46, 3
      %p237 = por %p235, %p236
      %p238 = scmp.ne.s32.totalorder %s229, %s230
      %p239 = scmp.eq.s32.totalorder %s46, 0
      %p240 = por %p238, %p239
      %p241 = scmp.ne.s32.totalorder %s229, %s230
      %p242 = scmp.eq.s32.totalorder %s47, 3
      %p243 = por %p241, %p242
      %p245 = scmp.ne.s32.totalorder %s230, %s244
      %p246 = scmp.eq.s32.totalorder %s47, 0
      %p247 = por %p245, %p246
      %s249 = sadd.s32 %s248, 1
      %p252 = scmp.eq.s32.totalorder %s41, 3
      %p253 = scmp.ne.s32.totalorder %s248, %s250
      %p254 = scmp.eq.s32.totalorder %s41, 0
      %p255 = por %p253, %p254
      %p256 = scmp.ne.s32.totalorder %s248, %s250
      %p257 = scmp.eq.s32.totalorder %s46, 3
      %p258 = por %p256, %p257
      %p259 = scmp.ne.s32.totalorder %s250, %s251
      %p260 = scmp.eq.s32.totalorder %s46, 0
      %p261 = por %p259, %p260
      %p262 = scmp.ne.s32.totalorder %s250, %s251
      %p263 = scmp.eq.s32.totalorder %s47, 3
      %p264 = por %p262, %p263
      %p266 = scmp.ne.s32.totalorder %s251, %s265
      %p267 = scmp.eq.s32.totalorder %s47, 0
      %p268 = por %p266, %p267
      %s270 = sadd.s32 %s269, 1
      %p273 = scmp.eq.s32.totalorder %s41, 3
      %p274 = scmp.ne.s32.totalorder %s269, %s271
      %p275 = scmp.eq.s32.totalorder %s41, 0
      %p276 = por %p274, %p275
      %p277 = scmp.ne.s32.totalorder %s269, %s271
      %p278 = scmp.eq.s32.totalorder %s46, 3
      %p279 = por %p277, %p278
      %p280 = scmp.ne.s32.totalorder %s271, %s272
      %p281 = scmp.eq.s32.totalorder %s46, 0
      %p282 = por %p280, %p281
      %p283 = scmp.ne.s32.totalorder %s271, %s272
      %p284 = scmp.eq.s32.totalorder %s47, 3
      %p285 = por %p283, %p284
      %p287 = scmp.ne.s32.totalorder %s272, %s286
      %p288 = scmp.eq.s32.totalorder %s47, 0
      %p289 = por %p287, %p288
      %s291 = sadd.s32 %s290, 1
      %p294 = scmp.eq.s32.totalorder %s41, 3
      %p295 = scmp.ne.s32.totalorder %s290, %s292
      %p296 = scmp.eq.s32.totalorder %s41, 0
      %p297 = por %p295, %p296
      %p298 = scmp.ne.s32.totalorder %s290, %s292
      %p299 = scmp.eq.s32.totalorder %s46, 3
      %p300 = por %p298, %p299
      %p301 = scmp.ne.s32.totalorder %s292, %s293
      %p302 = scmp.eq.s32.totalorder %s46, 0
      %p303 = por %p301, %p302
      %p304 = scmp.ne.s32.totalorder %s292, %s293
      %p305 = scmp.eq.s32.totalorder %s47, 3
      %p306 = por %p304, %p305
      %p308 = scmp.ne.s32.totalorder %s293, %s307
      %p309 = scmp.eq.s32.totalorder %s47, 0
      %p310 = por %p308, %p309
      %s312 = sadd.s32 %s311, 1
      %p315 = scmp.eq.s32.totalorder %s41, 3
      %p316 = scmp.ne.s32.totalorder %s311, %s313
      %p317 = scmp.eq.s32.totalorder %s41, 0
      %p318 = por %p316, %p317
      %p319 = scmp.ne.s32.totalorder %s311, %s313
      %p320 = scmp.eq.s32.totalorder %s46, 3
      %p321 = por %p319, %p320
      %p322 = scmp.ne.s32.totalorder %s313, %s314
      %p323 = scmp.eq.s32.totalorder %s46, 0
      %p324 = por %p322, %p323
      %p325 = scmp.ne.s32.totalorder %s313, %s314
      %p326 = scmp.eq.s32.totalorder %s47, 3
      %p327 = por %p325, %p326
      %p329 = scmp.ne.s32.totalorder %s314, %s328
      %p330 = scmp.eq.s32.totalorder %s47, 0
      %p331 = por %p329, %p330
      %s333 = sadd.s32 %s332, 1
      %p336 = scmp.eq.s32.totalorder %s41, 3
      %p337 = scmp.ne.s32.totalorder %s332, %s334
      %p338 = scmp.eq.s32.totalorder %s41, 0
      %p339 = por %p337, %p338
      %p340 = scmp.ne.s32.totalorder %s332, %s334
      %p341 = scmp.eq.s32.totalorder %s46, 3
      %p342 = por %p340, %p341
      %p343 = scmp.ne.s32.totalorder %s334, %s335
      %p344 = scmp.eq.s32.totalorder %s46, 0
      %p345 = por %p343, %p344
      %p346 = scmp.ne.s32.totalorder %s334, %s335
      %p347 = scmp.eq.s32.totalorder %s47, 3
      %p348 = por %p346, %p347
      %p350 = scmp.ne.s32.totalorder %s335, %s349
      %p351 = scmp.eq.s32.totalorder %s47, 0
      %p352 = por %p350, %p351
      %s354 = sadd.s32 %s353, 1
      %p357 = scmp.eq.s32.totalorder %s41, 3
      %p358 = scmp.ne.s32.totalorder %s353, %s355
      %p359 = scmp.eq.s32.totalorder %s41, 0
      %p360 = por %p358, %p359
      %p361 = scmp.ne.s32.totalorder %s353, %s355
      %p362 = scmp.eq.s32.totalorder %s46, 3
      %p363 = por %p361, %p362
      %p364 = scmp.ne.s32.totalorder %s355, %s356
      %p365 = scmp.eq.s32.totalorder %s46, 0
      %p366 = por %p364, %p365
      %p367 = scmp.ne.s32.totalorder %s355, %s356
      %p368 = scmp.eq.s32.totalorder %s47, 3
      %p369 = por %p367, %p368
      %p371 = scmp.ne.s32.totalorder %s356, %s370
      %p372 = scmp.eq.s32.totalorder %s47, 0
      %p373 = por %p371, %p372
      %s375 = sadd.s32 %s374, 1
      %p378 = scmp.eq.s32.totalorder %s41, 3
      %p379 = scmp.ne.s32.totalorder %s374, %s376
      %p380 = scmp.eq.s32.totalorder %s41, 0
      %p381 = por %p379, %p380
      %p382 = scmp.ne.s32.totalorder %s374, %s376
      %p383 = scmp.eq.s32.totalorder %s46, 3
      %p384 = por %p382, %p383
      %p385 = scmp.ne.s32.totalorder %s376, %s377
      %p386 = scmp.eq.s32.totalorder %s46, 0
      %p387 = por %p385, %p386
      %p388 = scmp.ne.s32.totalorder %s376, %s377
      %p389 = scmp.eq.s32.totalorder %s47, 3
      %p390 = por %p388, %p389
      %p392 = scmp.ne.s32.totalorder %s377, %s391
      %p393 = scmp.eq.s32.totalorder %s47, 0
      %p394 = por %p392, %p393
      %s396 = sadd.s32 %s395, 1
      %p399 = scmp.eq.s32.totalorder %s41, 3
      %p400 = scmp.ne.s32.totalorder %s395, %s397
      %p401 = scmp.eq.s32.totalorder %s41, 0
      %p402 = por %p400, %p401
      %p403 = scmp.ne.s32.totalorder %s395, %s397
      %p404 = scmp.eq.s32.totalorder %s46, 3
      %p405 = por %p403, %p404
      %p406 = scmp.ne.s32.totalorder %s397, %s398
      %p407 = scmp.eq.s32.totalorder %s46, 0
      %p408 = por %p406, %p407
      %p409 = scmp.ne.s32.totalorder %s397, %s398
      %p410 = scmp.eq.s32.totalorder %s47, 3
      %p411 = por %p409, %p410
      %p413 = scmp.ne.s32.totalorder %s398, %s412
      %p414 = scmp.eq.s32.totalorder %s47, 0
      %p415 = por %p413, %p414
      %s417 = sadd.s32 %s416, 1
      %p420 = scmp.eq.s32.totalorder %s41, 3
      %p421 = scmp.ne.s32.totalorder %s416, %s418
      %p422 = scmp.eq.s32.totalorder %s41, 0
      %p423 = por %p421, %p422
      %p424 = scmp.ne.s32.totalorder %s416, %s418
      %p425 = scmp.eq.s32.totalorder %s46, 3
      %p426 = por %p424, %p425
      %p427 = scmp.ne.s32.totalorder %s418, %s419
      %p428 = scmp.eq.s32.totalorder %s46, 0
      %p429 = por %p427, %p428
      %p430 = scmp.ne.s32.totalorder %s418, %s419
      %p431 = scmp.eq.s32.totalorder %s47, 3
      %p432 = por %p430, %p431
      %p434 = scmp.ne.s32.totalorder %s419, %s433
      %p435 = scmp.eq.s32.totalorder %s47, 0
      %p436 = por %p434, %p435
      %s437 = ssub.s32 %s41, %s48
      %p438 = scmp.eq.s32.totalorder %s437, 0
      %s440 = sadd.s32 %s439, 1
      %s441 = scalar_select %p438, %s439, %s440
      %p444 = pneg %p438
      %p445 = scmp.eq.s32.totalorder %s41, 3
      %p446 = por %p444, %p445
      %p447 = scmp.ne.s32.totalorder %s439, %s442
      %p448 = scmp.eq.s32.totalorder %s41, 0
      %p449 = por %p447, %p448
      %p450 = scmp.ne.s32.totalorder %s439, %s442
      %p451 = scmp.eq.s32.totalorder %s46, 3
      %p452 = por %p450, %p451
      %p453 = scmp.ne.s32.totalorder %s442, %s443
      %p454 = scmp.eq.s32.totalorder %s46, 0
      %p455 = por %p453, %p454
      %p456 = scmp.ne.s32.totalorder %s442, %s443
      %p457 = scmp.eq.s32.totalorder %s47, 3
      %p458 = por %p456, %p457
      %p460 = scmp.ne.s32.totalorder %s443, %s459
      %p461 = scmp.eq.s32.totalorder %s47, 0
      %p462 = por %p460, %p461
      %p463 = scmp.le.s32.totalorder 1, %s41
      %p464 = scmp.lt.s32.totalorder %s41, 5
      %p465 = pnand %p463, %p464
      %p466 = pneg %p465
      // Predicated region
      $region9: #{encoder_forward.1} parent=5 // pred_check
        _
      $region10: #{encoder_forward.1} parent=5 // pred_check_branch
        %468 = sbr.rel (%p465) target = $region12
      $region11: #{encoder_forward.1} parent=5 // pred_region
        %s469 = ssub.s32 %s41, 1
        // Predicated region
        $region13: #{encoder_forward.1} parent=11 // pred_check
          %p470 = pneg %p114
        $region14: #{encoder_forward.1} parent=11 // pred_check_branch
          %472 = sbr.rel (%p470) target = $region16
        $region15: #{encoder_forward.1} parent=11 // pred_region
          %s474 = ssub.s32 4096, 4096
          %475 = vsyncadd [#allocation6], %s474
          %s476 = sshll.u32 [#allocation7], 4
          %s477 = int_to_ptr.vmem [resolvable:$true] %s476
          %482 = dma.hbm_to_vmem [thread:$0]  %s2, 4096, %s477, [#allocation6], 128, 128, 8
        $region16: #{encoder_forward.1} parent=11 // pred_fallthru
          _
        // Predicated region
        $region17: #{encoder_forward.1} parent=11 // pred_check
          %p483 = pneg %p135
        $region18: #{encoder_forward.1} parent=11 // pred_check_branch
          %485 = sbr.rel (%p483) target = $region20
        $region19: #{encoder_forward.1} parent=11 // pred_region
          %s487 = ssub.s32 32, 32
          %488 = vsyncadd [#allocation9], %s487
          %s490 = sshll.u32 [#allocation8], 4
          %s491 = int_to_ptr.vmem [resolvable:$true] %s490
          %493 = dma.hbm_to_vmem [thread:$0]  %s3, 32, %s491, [#allocation9]
        $region20: #{encoder_forward.1} parent=11 // pred_fallthru
          _
        // Predicated region
        $region21: #{encoder_forward.1} parent=11 // pred_check
          %p494 = pneg %p156
        $region22: #{encoder_forward.1} parent=11 // pred_check_branch
          %496 = sbr.rel (%p494) target = $region24
        $region23: #{encoder_forward.1} parent=11 // pred_region
          %s498 = ssub.s32 4096, 4096
          %499 = vsyncadd [#allocation9], %s498
          %s500 = sshll.u32 [#allocation10], 4
          %s501 = int_to_ptr.vmem [resolvable:$true] %s500
          %506 = dma.hbm_to_vmem [thread:$0]  %s4, 4096, %s501, [#allocation9], 128, 128, 8
        $region24: #{encoder_forward.1} parent=11 // pred_fallthru
          _
        // Predicated region
        $region25: #{encoder_forward.1} parent=11 // pred_check
          %p507 = pneg %p177
        $region26: #{encoder_forward.1} parent=11 // pred_check_branch
          %509 = sbr.rel (%p507) target = $region28
        $region27: #{encoder_forward.1} parent=11 // pred_region
          %s511 = ssub.s32 32, 32
          %512 = vsyncadd [#allocation12], %s511
          %s514 = sshll.u32 [#allocation11], 4
          %s515 = int_to_ptr.vmem [resolvable:$true] %s514
          %517 = dma.hbm_to_vmem [thread:$0]  %s5, 32, %s515, [#allocation12]
        $region28: #{encoder_forward.1} parent=11 // pred_fallthru
          _
        // Predicated region
        $region29: #{encoder_forward.1} parent=11 // pred_check
          %p518 = pneg %p198
        $region30: #{encoder_forward.1} parent=11 // pred_check_branch
          %520 = sbr.rel (%p518) target = $region32
        $region31: #{encoder_forward.1} parent=11 // pred_region
          %s522 = ssub.s32 4096, 4096
          %523 = vsyncadd [#allocation12], %s522
          %s524 = sshll.u32 [#allocation13], 4
          %s525 = int_to_ptr.vmem [resolvable:$true] %s524
          %530 = dma.hbm_to_vmem [thread:$0]  %s6, 4096, %s525, [#allocation12], 128, 128, 8
        $region32: #{encoder_forward.1} parent=11 // pred_fallthru
          _
        // Predicated region
        $region33: #{encoder_forward.1} parent=11 // pred_check
          %p531 = pneg %p219
        $region34: #{encoder_forward.1} parent=11 // pred_check_branch
          %533 = sbr.rel (%p531) target = $region36
        $region35: #{encoder_forward.1} parent=11 // pred_region
          %s535 = ssub.s32 32, 32
          %536 = vsyncadd [#allocation15], %s535
          %s538 = sshll.u32 [#allocation14], 4
          %s539 = int_to_ptr.vmem [resolvable:$true] %s538
          %541 = dma.hbm_to_vmem [thread:$0]  %s7, 32, %s539, [#allocation15]
        $region36: #{encoder_forward.1} parent=11 // pred_fallthru
          _
        // Predicated region
        $region37: #{encoder_forward.1} parent=11 // pred_check
          %p542 = pneg %p240
        $region38: #{encoder_forward.1} parent=11 // pred_check_branch
          %544 = sbr.rel (%p542) target = $region40
        $region39: #{encoder_forward.1} parent=11 // pred_region
          %s546 = ssub.s32 4096, 4096
          %547 = vsyncadd [#allocation15], %s546
          %s548 = sshll.u32 [#allocation16], 4
          %s549 = int_to_ptr.vmem [resolvable:$true] %s548
          %554 = dma.hbm_to_vmem [thread:$0]  %s8, 4096, %s549, [#allocation15], 128, 128, 8
        $region40: #{encoder_forward.1} parent=11 // pred_fallthru
          _
        // Predicated region
        $region41: #{encoder_forward.1} parent=11 // pred_check
          %p555 = pneg %p261
        $region42: #{encoder_forward.1} parent=11 // pred_check_branch
          %557 = sbr.rel (%p555) target = $region44
        $region43: #{encoder_forward.1} parent=11 // pred_region
          %s559 = ssub.s32 32, 32
          %560 = vsyncadd [#allocation18], %s559
          %s562 = sshll.u32 [#allocation17], 4
          %s563 = int_to_ptr.vmem [resolvable:$true] %s562
          %565 = dma.hbm_to_vmem [thread:$0]  %s9, 32, %s563, [#allocation18]
        $region44: #{encoder_forward.1} parent=11 // pred_fallthru
          _
        // Predicated region
        $region45: #{encoder_forward.1} parent=11 // pred_check
          %p566 = pneg %p282
        $region46: #{encoder_forward.1} parent=11 // pred_check_branch
          %568 = sbr.rel (%p566) target = $region48
        $region47: #{encoder_forward.1} parent=11 // pred_region
          %s570 = ssub.s32 32, 32
          %571 = vsyncadd [#allocation18], %s570
          %s573 = sshll.u32 [#allocation19], 4
          %s574 = int_to_ptr.vmem [resolvable:$true] %s573
          %576 = dma.hbm_to_vmem [thread:$0]  %s10, 32, %s574, [#allocation18]
        $region48: #{encoder_forward.1} parent=11 // pred_fallthru
          _
        // Predicated region
        $region49: #{encoder_forward.1} parent=11 // pred_check
          %p577 = pneg %p303
        $region50: #{encoder_forward.1} parent=11 // pred_check_branch
          %579 = sbr.rel (%p577) target = $region52
        $region51: #{encoder_forward.1} parent=11 // pred_region
          %s581 = ssub.s32 32, 32
          %582 = vsyncadd [#allocation21], %s581
          %s584 = sshll.u32 [#allocation20], 4
          %s585 = int_to_ptr.vmem [resolvable:$true] %s584
          %587 = dma.hbm_to_vmem [thread:$0]  %s11, 32, %s585, [#allocation21]
        $region52: #{encoder_forward.1} parent=11 // pred_fallthru
          _
        // Predicated region
        $region53: #{encoder_forward.1} parent=11 // pred_check
          %p588 = pneg %p324
        $region54: #{encoder_forward.1} parent=11 // pred_check_branch
          %590 = sbr.rel (%p588) target = $region56
        $region55: #{encoder_forward.1} parent=11 // pred_region
          %s592 = ssub.s32 8192, 8192
          %593 = vsyncadd [#allocation21], %s592
          %s594 = sshll.u32 [#allocation22], 4
          %s595 = int_to_ptr.vmem [resolvable:$true] %s594
          %600 = dma.hbm_to_vmem [thread:$0]  %s12, 8192, %s595, [#allocation21], 256, 256, 16
        $region56: #{encoder_forward.1} parent=11 // pred_fallthru
          _
        // Predicated region
        $region57: #{encoder_forward.1} parent=11 // pred_check
          %p601 = pneg %p345
        $region58: #{encoder_forward.1} parent=11 // pred_check_branch
          %603 = sbr.rel (%p601) target = $region60
        $region59: #{encoder_forward.1} parent=11 // pred_region
          %s605 = ssub.s32 64, 64
          %606 = vsyncadd [#allocation24], %s605
          %s608 = sshll.u32 [#allocation23], 4
          %s609 = int_to_ptr.vmem [resolvable:$true] %s608
          %611 = dma.hbm_to_vmem [thread:$0]  %s13, 64, %s609, [#allocation24]
        $region60: #{encoder_forward.1} parent=11 // pred_fallthru
          _
        // Predicated region
        $region61: #{encoder_forward.1} parent=11 // pred_check
          %p612 = pneg %p366
        $region62: #{encoder_forward.1} parent=11 // pred_check_branch
          %614 = sbr.rel (%p612) target = $region64
        $region63: #{encoder_forward.1} parent=11 // pred_region
          %s616 = ssub.s32 8192, 8192
          %617 = vsyncadd [#allocation24], %s616
          %s618 = sshll.u32 [#allocation25], 4
          %s619 = int_to_ptr.vmem [resolvable:$true] %s618
          %624 = dma.hbm_to_vmem [thread:$0]  %s14, 8192, %s619, [#allocation24], 128, 128, 8
        $region64: #{encoder_forward.1} parent=11 // pred_fallthru
          _
        // Predicated region
        $region65: #{encoder_forward.1} parent=11 // pred_check
          %p625 = pneg %p387
        $region66: #{encoder_forward.1} parent=11 // pred_check_branch
          %627 = sbr.rel (%p625) target = $region68
        $region67: #{encoder_forward.1} parent=11 // pred_region
          %s629 = ssub.s32 32, 32
          %630 = vsyncadd [#allocation27], %s629
          %s632 = sshll.u32 [#allocation26], 4
          %s633 = int_to_ptr.vmem [resolvable:$true] %s632
          %635 = dma.hbm_to_vmem [thread:$0]  %s15, 32, %s633, [#allocation27]
        $region68: #{encoder_forward.1} parent=11 // pred_fallthru
          _
        // Predicated region
        $region69: #{encoder_forward.1} parent=11 // pred_check
          %p636 = pneg %p408
        $region70: #{encoder_forward.1} parent=11 // pred_check_branch
          %638 = sbr.rel (%p636) target = $region72
        $region71: #{encoder_forward.1} parent=11 // pred_region
          %s640 = ssub.s32 32, 32
          %641 = vsyncadd [#allocation27], %s640
          %s643 = sshll.u32 [#allocation28], 4
          %s644 = int_to_ptr.vmem [resolvable:$true] %s643
          %646 = dma.hbm_to_vmem [thread:$0]  %s16, 32, %s644, [#allocation27]
        $region72: #{encoder_forward.1} parent=11 // pred_fallthru
          _
        // Predicated region
        $region73: #{encoder_forward.1} parent=11 // pred_check
          %p647 = pneg %p429
        $region74: #{encoder_forward.1} parent=11 // pred_check_branch
          %649 = sbr.rel (%p647) target = $region76
        $region75: #{encoder_forward.1} parent=11 // pred_region
          %s651 = ssub.s32 32, 32
          %652 = vsyncadd [#allocation30], %s651
          %s654 = sshll.u32 [#allocation29], 4
          %s655 = int_to_ptr.vmem [resolvable:$true] %s654
          %657 = dma.hbm_to_vmem [thread:$0]  %s17, 32, %s655, [#allocation30]
        $region76: #{encoder_forward.1} parent=11 // pred_fallthru
          _
      $region12: #{encoder_forward.1} parent=5 // pred_fallthru
        _
      %p658 = scmp.lt.s32.totalorder %s41, 4
      // Predicated region
      $region77: #{encoder_forward.1} parent=5 // pred_check
        %p659 = pneg %p658
      $region78: #{encoder_forward.1} parent=5 // pred_check_branch
        %661 = sbr.rel (%p659) target = $region80
      $region79: #{encoder_forward.1} parent=5 // pred_region
        // Predicated region
        $region81: #{encoder_forward.1} parent=79 // pred_check
          %p662 = pneg %p61
        $region82: #{encoder_forward.1} parent=79 // pred_check_branch
          %664 = sbr.rel (%p662) target = $region84
        $region83: #{encoder_forward.1} parent=79 // pred_region
          %s665 = sand.u32 %s51, 1
          %s666 = scalar_lea.sflag [#allocation3], %s665
          %s667 = sand.u32 %s51, 1
          %s668 = smul.addr %s667, 256
          %s669 = scalar_lea.vmem [#allocation2], %s668
          %s671 = ssub.s32 4096, 4096
          %672 = vsyncadd %s666, %s671
          %s673 = smul.addr %s41, 32
          %s674 = smul.addr %s673, 128
          %s675 = scalar_lea.hbm %s0, %s674
          %s676 = sshll.u32 %s669, 4
          %s677 = int_to_ptr.vmem [resolvable:$true] %s676
          %682 = dma.hbm_to_vmem [thread:$0]  %s675, 4096, %s677, %s666, 256, 256, 16
        $region84: #{encoder_forward.1} parent=79 // pred_fallthru
          _
        // Predicated region
        $region85: #{encoder_forward.1} parent=79 // pred_check
          %p683 = pneg %p87
        $region86: #{encoder_forward.1} parent=79 // pred_check_branch
          %685 = sbr.rel (%p683) target = $region88
        $region87: #{encoder_forward.1} parent=79 // pred_region
          %s686 = sand.u32 %s41, 1
          %s687 = scalar_lea.sflag [#allocation6], %s686
          %s688 = sand.u32 %s77, 1
          %s689 = scalar_lea.vmem [#allocation5], %s688
          %s691 = ssub.s32 16, 16
          %692 = vsyncadd %s687, %s691
          %s693 = smul.addr %s41, 16
          %s694 = scalar_lea.hbm %s1, %s693
          %s696 = sshll.u32 %s689, 4
          %s697 = int_to_ptr.vmem [resolvable:$true] %s696
          %699 = dma.hbm_to_vmem [thread:$0]  %s694, 16, %s697, %s687
        $region88: #{encoder_forward.1} parent=79 // pred_fallthru
          _
      $region80: #{encoder_forward.1} parent=5 // pred_fallthru
        _
      %p700 = scmp.le.s32.totalorder 1, %s41
      %p701 = scmp.lt.s32.totalorder %s41, 5
      %p702 = pnand %p700, %p701
      %p703 = pneg %p702
      // Predicated region
      $region89: #{encoder_forward.1} parent=5 // pred_check
        _
      $region90: #{encoder_forward.1} parent=5 // pred_check_branch
        %705 = sbr.rel (%p702) target = $region92
      $region91: #{encoder_forward.1} parent=5 // pred_region
        %s706 = ssub.s32 %s41, 1
        %s707 = sand.u32 %s54, 1
        %s708 = scalar_lea.sflag [#allocation3], %s707
        %s709 = sand.u32 %s54, 1
        %s710 = smul.addr %s709, 256
        %s711 = scalar_lea.vmem [#allocation2], %s710
        // Predicated region
        $region93: #{encoder_forward.1} parent=91 // pred_check
          %p712 = pneg %p67
        $region94: #{encoder_forward.1} parent=91 // pred_check_branch
          %714 = sbr.rel (%p712) target = $region96
        $region95: #{encoder_forward.1} parent=91 // pred_region
          %715 = dma.done %s708, 4096
        $region96: #{encoder_forward.1} parent=91 // pred_fallthru
          _
        %s716 = sand.u32 %s46, 1
        %s717 = scalar_lea.sflag [#allocation6], %s716
        %s718 = sand.u32 %s80, 1
        %s719 = scalar_lea.vmem [#allocation5], %s718
        // Predicated region
        $region97: #{encoder_forward.1} parent=91 // pred_check
          %p720 = pneg %p93
        $region98: #{encoder_forward.1} parent=91 // pred_check_branch
          %722 = sbr.rel (%p720) target = $region100
        $region99: #{encoder_forward.1} parent=91 // pred_region
          %723 = dma.done %s717, 16
        $region100: #{encoder_forward.1} parent=91 // pred_fallthru
          _
        // Predicated region
        $region101: #{encoder_forward.1} parent=91 // pred_check
          %p724 = pneg %p114
        $region102: #{encoder_forward.1} parent=91 // pred_check_branch
          %726 = sbr.rel (%p724) target = $region104
        $region103: #{encoder_forward.1} parent=91 // pred_region
          %727 = dma.done [#allocation6], 4096
        $region104: #{encoder_forward.1} parent=91 // pred_fallthru
          _
        // Predicated region
        $region105: #{encoder_forward.1} parent=91 // pred_check
          %p728 = pneg %p135
        $region106: #{encoder_forward.1} parent=91 // pred_check_branch
          %730 = sbr.rel (%p728) target = $region108
        $region107: #{encoder_forward.1} parent=91 // pred_region
          %731 = dma.done [#allocation9], 32
        $region108: #{encoder_forward.1} parent=91 // pred_fallthru
          _
        // Predicated region
        $region109: #{encoder_forward.1} parent=91 // pred_check
          %p732 = pneg %p156
        $region110: #{encoder_forward.1} parent=91 // pred_check_branch
          %734 = sbr.rel (%p732) target = $region112
        $region111: #{encoder_forward.1} parent=91 // pred_region
          %735 = dma.done [#allocation9], 4096
        $region112: #{encoder_forward.1} parent=91 // pred_fallthru
          _
        // Predicated region
        $region113: #{encoder_forward.1} parent=91 // pred_check
          %p736 = pneg %p177
        $region114: #{encoder_forward.1} parent=91 // pred_check_branch
          %738 = sbr.rel (%p736) target = $region116
        $region115: #{encoder_forward.1} parent=91 // pred_region
          %739 = dma.done [#allocation12], 32
        $region116: #{encoder_forward.1} parent=91 // pred_fallthru
          _
        // Predicated region
        $region117: #{encoder_forward.1} parent=91 // pred_check
          %p740 = pneg %p198
        $region118: #{encoder_forward.1} parent=91 // pred_check_branch
          %742 = sbr.rel (%p740) target = $region120
        $region119: #{encoder_forward.1} parent=91 // pred_region
          %743 = dma.done [#allocation12], 4096
        $region120: #{encoder_forward.1} parent=91 // pred_fallthru
          _
        // Predicated region
        $region121: #{encoder_forward.1} parent=91 // pred_check
          %p744 = pneg %p219
        $region122: #{encoder_forward.1} parent=91 // pred_check_branch
          %746 = sbr.rel (%p744) target = $region124
        $region123: #{encoder_forward.1} parent=91 // pred_region
          %747 = dma.done [#allocation15], 32
        $region124: #{encoder_forward.1} parent=91 // pred_fallthru
          _
        // Predicated region
        $region125: #{encoder_forward.1} parent=91 // pred_check
          %p748 = pneg %p240
        $region126: #{encoder_forward.1} parent=91 // pred_check_branch
          %750 = sbr.rel (%p748) target = $region128
        $region127: #{encoder_forward.1} parent=91 // pred_region
          %751 = dma.done [#allocation15], 4096
        $region128: #{encoder_forward.1} parent=91 // pred_fallthru
          _
        // Predicated region
        $region129: #{encoder_forward.1} parent=91 // pred_check
          %p752 = pneg %p261
        $region130: #{encoder_forward.1} parent=91 // pred_check_branch
          %754 = sbr.rel (%p752) target = $region132
        $region131: #{encoder_forward.1} parent=91 // pred_region
          %755 = dma.done [#allocation18], 32
        $region132: #{encoder_forward.1} parent=91 // pred_fallthru
          _
        // Predicated region
        $region133: #{encoder_forward.1} parent=91 // pred_check
          %p756 = pneg %p282
        $region134: #{encoder_forward.1} parent=91 // pred_check_branch
          %758 = sbr.rel (%p756) target = $region136
        $region135: #{encoder_forward.1} parent=91 // pred_region
          %759 = dma.done [#allocation18], 32
        $region136: #{encoder_forward.1} parent=91 // pred_fallthru
          _
        // Predicated region
        $region137: #{encoder_forward.1} parent=91 // pred_check
          %p760 = pneg %p303
        $region138: #{encoder_forward.1} parent=91 // pred_check_branch
          %762 = sbr.rel (%p760) target = $region140
        $region139: #{encoder_forward.1} parent=91 // pred_region
          %763 = dma.done [#allocation21], 32
        $region140: #{encoder_forward.1} parent=91 // pred_fallthru
          _
        // Predicated region
        $region141: #{encoder_forward.1} parent=91 // pred_check
          %p764 = pneg %p324
        $region142: #{encoder_forward.1} parent=91 // pred_check_branch
          %766 = sbr.rel (%p764) target = $region144
        $region143: #{encoder_forward.1} parent=91 // pred_region
          %767 = dma.done [#allocation21], 8192
        $region144: #{encoder_forward.1} parent=91 // pred_fallthru
          _
        // Predicated region
        $region145: #{encoder_forward.1} parent=91 // pred_check
          %p768 = pneg %p345
        $region146: #{encoder_forward.1} parent=91 // pred_check_branch
          %770 = sbr.rel (%p768) target = $region148
        $region147: #{encoder_forward.1} parent=91 // pred_region
          %771 = dma.done [#allocation24], 64
        $region148: #{encoder_forward.1} parent=91 // pred_fallthru
          _
        // Predicated region
        $region149: #{encoder_forward.1} parent=91 // pred_check
          %p772 = pneg %p366
        $region150: #{encoder_forward.1} parent=91 // pred_check_branch
          %774 = sbr.rel (%p772) target = $region152
        $region151: #{encoder_forward.1} parent=91 // pred_region
          %775 = dma.done [#allocation24], 8192
        $region152: #{encoder_forward.1} parent=91 // pred_fallthru
          _
        // Predicated region
        $region153: #{encoder_forward.1} parent=91 // pred_check
          %p776 = pneg %p387
        $region154: #{encoder_forward.1} parent=91 // pred_check_branch
          %778 = sbr.rel (%p776) target = $region156
        $region155: #{encoder_forward.1} parent=91 // pred_region
          %779 = dma.done [#allocation27], 32
        $region156: #{encoder_forward.1} parent=91 // pred_fallthru
          _
        // Predicated region
        $region157: #{encoder_forward.1} parent=91 // pred_check
          %p780 = pneg %p408
        $region158: #{encoder_forward.1} parent=91 // pred_check_branch
          %782 = sbr.rel (%p780) target = $region160
        $region159: #{encoder_forward.1} parent=91 // pred_region
          %783 = dma.done [#allocation27], 32
        $region160: #{encoder_forward.1} parent=91 // pred_fallthru
          _
        // Predicated region
        $region161: #{encoder_forward.1} parent=91 // pred_check
          %p784 = pneg %p429
        $region162: #{encoder_forward.1} parent=91 // pred_check_branch
          %786 = sbr.rel (%p784) target = $region164
        $region163: #{encoder_forward.1} parent=91 // pred_region
          %787 = dma.done [#allocation30], 32
        $region164: #{encoder_forward.1} parent=91 // pred_fallthru
          _
        %s788 = sand.u32 %s54, 1
        %s789 = scalar_lea.sflag [#allocation3], %s788
        %s790 = sand.u32 %s54, 1
        %s791 = smul.addr %s790, 256
        %s792 = scalar_lea.vmem [#allocation2], %s791
        %p793 = pneg %p67
        %p794 = pneg %p64
        %s795 = sand.u32 %s46, 1
        %s796 = scalar_lea.sflag [#allocation6], %s795
        %s797 = sand.u32 %s80, 1
        %s798 = scalar_lea.vmem [#allocation5], %s797
        %p799 = pneg %p93
        %p800 = pneg %p90
        %p801 = pneg %p114
        %p802 = pneg %p111
        %p803 = pneg %p135
        %p804 = pneg %p132
        %p805 = pneg %p156
        %p806 = pneg %p153
        %p807 = pneg %p177
        %p808 = pneg %p174
        %p809 = pneg %p198
        %p810 = pneg %p195
        %p811 = pneg %p219
        %p812 = pneg %p216
        %p813 = pneg %p240
        %p814 = pneg %p237
        %p815 = pneg %p261
        %p816 = pneg %p258
        %p817 = pneg %p282
        %p818 = pneg %p279
        %p819 = pneg %p303
        %p820 = pneg %p300
        %p821 = pneg %p324
        %p822 = pneg %p321
        %p823 = pneg %p345
        %p824 = pneg %p342
        %p825 = pneg %p366
        %p826 = pneg %p363
        %p827 = pneg %p387
        %p828 = pneg %p384
        %p829 = pneg %p408
        %p830 = pneg %p405
        %p831 = pneg %p429
        %p832 = pneg %p426
        %p833 = pneg %p455
        %p834 = pneg %p452
        %s835 = sand.u32 %s442, 1
        %s836 = scalar_lea.sflag [#allocation4], %s835
        %s837 = sand.u32 %s442, 1
        %s838 = smul.addr %s837, 256
        %s839 = scalar_lea.vmem [#allocation31], %s838
        %v841 = vld [vmem:[#allocation7] sm:$0xff]
        %v842 = vld [vmem:[#allocation7 + $0x8] sm:$0xff]
        %v843 = vld [vmem:[#allocation7 + $0x10] sm:$0xff]
        %v844 = vld [vmem:[#allocation7 + $0x18] sm:$0xff]
        %v845 = vld [vmem:[#allocation7 + $0x20] sm:$0xff]
        %v846 = vld [vmem:[#allocation7 + $0x28] sm:$0xff]
        %v847 = vld [vmem:[#allocation7 + $0x30] sm:$0xff]
        %v848 = vld [vmem:[#allocation7 + $0x38] sm:$0xff]
        %v849 = vld [vmem:[#allocation7 + $0x40] sm:$0xff]
        %v850 = vld [vmem:[#allocation7 + $0x48] sm:$0xff]
        %v851 = vld [vmem:[#allocation7 + $0x50] sm:$0xff]
        %v852 = vld [vmem:[#allocation7 + $0x58] sm:$0xff]
        %v853 = vld [vmem:[#allocation7 + $0x60] sm:$0xff]
        %v854 = vld [vmem:[#allocation7 + $0x68] sm:$0xff]
        %v855 = vld [vmem:[#allocation7 + $0x70] sm:$0xff]
        %v856 = vld [vmem:[#allocation7 + $0x78] sm:$0xff]
        %v857 = vld [vmem:[#allocation7 + $0x80] sm:$0xff]
        %v858 = vld [vmem:[#allocation7 + $0x88] sm:$0xff]
        %v859 = vld [vmem:[#allocation7 + $0x90] sm:$0xff]
        %v860 = vld [vmem:[#allocation7 + $0x98] sm:$0xff]
        %v861 = vld [vmem:[#allocation7 + $0xa0] sm:$0xff]
        %v862 = vld [vmem:[#allocation7 + $0xa8] sm:$0xff]
        %v863 = vld [vmem:[#allocation7 + $0xb0] sm:$0xff]
        %v864 = vld [vmem:[#allocation7 + $0xb8] sm:$0xff]
        %v865 = vld [vmem:[#allocation7 + $0xc0] sm:$0xff]
        %v866 = vld [vmem:[#allocation7 + $0xc8] sm:$0xff]
        %v867 = vld [vmem:[#allocation7 + $0xd0] sm:$0xff]
        %v868 = vld [vmem:[#allocation7 + $0xd8] sm:$0xff]
        %v869 = vld [vmem:[#allocation7 + $0xe0] sm:$0xff]
        %v870 = vld [vmem:[#allocation7 + $0xe8] sm:$0xff]
        %v871 = vld [vmem:[#allocation7 + $0xf0] sm:$0xff]
        %v872 = vld [vmem:[#allocation7 + $0xf8] sm:$0xff]
        %v873 = vld [vmem:[#allocation10] sm:$0xff]
        %v874 = vld [vmem:[#allocation10 + $0x8] sm:$0xff]
        %v875 = vld [vmem:[#allocation10 + $0x10] sm:$0xff]
        %v876 = vld [vmem:[#allocation10 + $0x18] sm:$0xff]
        %v877 = vld [vmem:[#allocation10 + $0x20] sm:$0xff]
        %v878 = vld [vmem:[#allocation10 + $0x28] sm:$0xff]
        %v879 = vld [vmem:[#allocation10 + $0x30] sm:$0xff]
        %v880 = vld [vmem:[#allocation10 + $0x38] sm:$0xff]
        %v881 = vld [vmem:[#allocation10 + $0x40] sm:$0xff]
        %v882 = vld [vmem:[#allocation10 + $0x48] sm:$0xff]
        %v883 = vld [vmem:[#allocation10 + $0x50] sm:$0xff]
        %v884 = vld [vmem:[#allocation10 + $0x58] sm:$0xff]
        %v885 = vld [vmem:[#allocation10 + $0x60] sm:$0xff]
        %v886 = vld [vmem:[#allocation10 + $0x68] sm:$0xff]
        %v887 = vld [vmem:[#allocation10 + $0x70] sm:$0xff]
        %v888 = vld [vmem:[#allocation10 + $0x78] sm:$0xff]
        %v889 = vld [vmem:[#allocation10 + $0x80] sm:$0xff]
        %v890 = vld [vmem:[#allocation10 + $0x88] sm:$0xff]
        %v891 = vld [vmem:[#allocation10 + $0x90] sm:$0xff]
        %v892 = vld [vmem:[#allocation10 + $0x98] sm:$0xff]
        %v893 = vld [vmem:[#allocation10 + $0xa0] sm:$0xff]
        %v894 = vld [vmem:[#allocation10 + $0xa8] sm:$0xff]
        %v895 = vld [vmem:[#allocation10 + $0xb0] sm:$0xff]
        %v896 = vld [vmem:[#allocation10 + $0xb8] sm:$0xff]
        %v897 = vld [vmem:[#allocation10 + $0xc0] sm:$0xff]
        %v898 = vld [vmem:[#allocation10 + $0xc8] sm:$0xff]
        %v899 = vld [vmem:[#allocation10 + $0xd0] sm:$0xff]
        %v900 = vld [vmem:[#allocation10 + $0xd8] sm:$0xff]
        %v901 = vld [vmem:[#allocation10 + $0xe0] sm:$0xff]
        %v902 = vld [vmem:[#allocation10 + $0xe8] sm:$0xff]
        %v903 = vld [vmem:[#allocation10 + $0xf0] sm:$0xff]
        %v904 = vld [vmem:[#allocation10 + $0xf8] sm:$0xff]
        %v905 = vld [vmem:[#allocation13] sm:$0xff]
        %v906 = vld [vmem:[#allocation13 + $0x8] sm:$0xff]
        %v907 = vld [vmem:[#allocation13 + $0x10] sm:$0xff]
        %v908 = vld [vmem:[#allocation13 + $0x18] sm:$0xff]
        %v909 = vld [vmem:[#allocation13 + $0x20] sm:$0xff]
        %v910 = vld [vmem:[#allocation13 + $0x28] sm:$0xff]
        %v911 = vld [vmem:[#allocation13 + $0x30] sm:$0xff]
        %v912 = vld [vmem:[#allocation13 + $0x38] sm:$0xff]
        %v913 = vld [vmem:[#allocation13 + $0x40] sm:$0xff]
        %v914 = vld [vmem:[#allocation13 + $0x48] sm:$0xff]
        %v915 = vld [vmem:[#allocation13 + $0x50] sm:$0xff]
        %v916 = vld [vmem:[#allocation13 + $0x58] sm:$0xff]
        %v917 = vld [vmem:[#allocation13 + $0x60] sm:$0xff]
        %v918 = vld [vmem:[#allocation13 + $0x68] sm:$0xff]
        %v919 = vld [vmem:[#allocation13 + $0x70] sm:$0xff]
        %v920 = vld [vmem:[#allocation13 + $0x78] sm:$0xff]
        %v921 = vld [vmem:[#allocation13 + $0x80] sm:$0xff]
        %v922 = vld [vmem:[#allocation13 + $0x88] sm:$0xff]
        %v923 = vld [vmem:[#allocation13 + $0x90] sm:$0xff]
        %v924 = vld [vmem:[#allocation13 + $0x98] sm:$0xff]
        %v925 = vld [vmem:[#allocation13 + $0xa0] sm:$0xff]
        %v926 = vld [vmem:[#allocation13 + $0xa8] sm:$0xff]
        %v927 = vld [vmem:[#allocation13 + $0xb0] sm:$0xff]
        %v928 = vld [vmem:[#allocation13 + $0xb8] sm:$0xff]
        %v929 = vld [vmem:[#allocation13 + $0xc0] sm:$0xff]
        %v930 = vld [vmem:[#allocation13 + $0xc8] sm:$0xff]
        %v931 = vld [vmem:[#allocation13 + $0xd0] sm:$0xff]
        %v932 = vld [vmem:[#allocation13 + $0xd8] sm:$0xff]
        %v933 = vld [vmem:[#allocation13 + $0xe0] sm:$0xff]
        %v934 = vld [vmem:[#allocation13 + $0xe8] sm:$0xff]
        %v935 = vld [vmem:[#allocation13 + $0xf0] sm:$0xff]
        %v936 = vld [vmem:[#allocation13 + $0xf8] sm:$0xff]
        %v937 = vld [vmem:[#allocation16] sm:$0xff]
        %v938 = vld [vmem:[#allocation16 + $0x8] sm:$0xff]
        %v939 = vld [vmem:[#allocation16 + $0x10] sm:$0xff]
        %v940 = vld [vmem:[#allocation16 + $0x18] sm:$0xff]
        %v941 = vld [vmem:[#allocation16 + $0x20] sm:$0xff]
        %v942 = vld [vmem:[#allocation16 + $0x28] sm:$0xff]
        %v943 = vld [vmem:[#allocation16 + $0x30] sm:$0xff]
        %v944 = vld [vmem:[#allocation16 + $0x38] sm:$0xff]
        %v945 = vld [vmem:[#allocation16 + $0x40] sm:$0xff]
        %v946 = vld [vmem:[#allocation16 + $0x48] sm:$0xff]
        %v947 = vld [vmem:[#allocation16 + $0x50] sm:$0xff]
        %v948 = vld [vmem:[#allocation16 + $0x58] sm:$0xff]
        %v949 = vld [vmem:[#allocation16 + $0x60] sm:$0xff]
        %v950 = vld [vmem:[#allocation16 + $0x68] sm:$0xff]
        %v951 = vld [vmem:[#allocation16 + $0x70] sm:$0xff]
        %v952 = vld [vmem:[#allocation16 + $0x78] sm:$0xff]
        %v953 = vld [vmem:[#allocation16 + $0x80] sm:$0xff]
        %v954 = vld [vmem:[#allocation16 + $0x88] sm:$0xff]
        %v955 = vld [vmem:[#allocation16 + $0x90] sm:$0xff]
        %v956 = vld [vmem:[#allocation16 + $0x98] sm:$0xff]
        %v957 = vld [vmem:[#allocation16 + $0xa0] sm:$0xff]
        %v958 = vld [vmem:[#allocation16 + $0xa8] sm:$0xff]
        %v959 = vld [vmem:[#allocation16 + $0xb0] sm:$0xff]
        %v960 = vld [vmem:[#allocation16 + $0xb8] sm:$0xff]
        %v961 = vld [vmem:[#allocation16 + $0xc0] sm:$0xff]
        %v962 = vld [vmem:[#allocation16 + $0xc8] sm:$0xff]
        %v963 = vld [vmem:[#allocation16 + $0xd0] sm:$0xff]
        %v964 = vld [vmem:[#allocation16 + $0xd8] sm:$0xff]
        %v965 = vld [vmem:[#allocation16 + $0xe0] sm:$0xff]
        %v966 = vld [vmem:[#allocation16 + $0xe8] sm:$0xff]
        %v967 = vld [vmem:[#allocation16 + $0xf0] sm:$0xff]
        %v968 = vld [vmem:[#allocation16 + $0xf8] sm:$0xff]
        %v969 = vld [vmem:[#allocation22] sm:$0xff]
        %v970 = vld [vmem:[#allocation22 + $0x8] sm:$0xff]
        %v971 = vld [vmem:[#allocation22 + $0x10] sm:$0xff]
        %v972 = vld [vmem:[#allocation22 + $0x18] sm:$0xff]
        %v973 = vld [vmem:[#allocation22 + $0x20] sm:$0xff]
        %v974 = vld [vmem:[#allocation22 + $0x28] sm:$0xff]
        %v975 = vld [vmem:[#allocation22 + $0x30] sm:$0xff]
        %v976 = vld [vmem:[#allocation22 + $0x38] sm:$0xff]
        %v977 = vld [vmem:[#allocation22 + $0x40] sm:$0xff]
        %v978 = vld [vmem:[#allocation22 + $0x48] sm:$0xff]
        %v979 = vld [vmem:[#allocation22 + $0x50] sm:$0xff]
        %v980 = vld [vmem:[#allocation22 + $0x58] sm:$0xff]
        %v981 = vld [vmem:[#allocation22 + $0x60] sm:$0xff]
        %v982 = vld [vmem:[#allocation22 + $0x68] sm:$0xff]
        %v983 = vld [vmem:[#allocation22 + $0x70] sm:$0xff]
        %v984 = vld [vmem:[#allocation22 + $0x78] sm:$0xff]
        %v985 = vld [vmem:[#allocation22 + $0x80] sm:$0xff]
        %v986 = vld [vmem:[#allocation22 + $0x88] sm:$0xff]
        %v987 = vld [vmem:[#allocation22 + $0x90] sm:$0xff]
        %v988 = vld [vmem:[#allocation22 + $0x98] sm:$0xff]
        %v989 = vld [vmem:[#allocation22 + $0xa0] sm:$0xff]
        %v990 = vld [vmem:[#allocation22 + $0xa8] sm:$0xff]
        %v991 = vld [vmem:[#allocation22 + $0xb0] sm:$0xff]
        %v992 = vld [vmem:[#allocation22 + $0xb8] sm:$0xff]
        %v993 = vld [vmem:[#allocation22 + $0xc0] sm:$0xff]
        %v994 = vld [vmem:[#allocation22 + $0xc8] sm:$0xff]
        %v995 = vld [vmem:[#allocation22 + $0xd0] sm:$0xff]
        %v996 = vld [vmem:[#allocation22 + $0xd8] sm:$0xff]
        %v997 = vld [vmem:[#allocation22 + $0xe0] sm:$0xff]
        %v998 = vld [vmem:[#allocation22 + $0xe8] sm:$0xff]
        %v999 = vld [vmem:[#allocation22 + $0xf0] sm:$0xff]
        %v1000 = vld [vmem:[#allocation22 + $0xf8] sm:$0xff]
        %v1001 = vld [vmem:[#allocation22 + $0x100] sm:$0xff]
        %v1002 = vld [vmem:[#allocation22 + $0x108] sm:$0xff]
        %v1003 = vld [vmem:[#allocation22 + $0x110] sm:$0xff]
        %v1004 = vld [vmem:[#allocation22 + $0x118] sm:$0xff]
        %v1005 = vld [vmem:[#allocation22 + $0x120] sm:$0xff]
        %v1006 = vld [vmem:[#allocation22 + $0x128] sm:$0xff]
        %v1007 = vld [vmem:[#allocation22 + $0x130] sm:$0xff]
        %v1008 = vld [vmem:[#allocation22 + $0x138] sm:$0xff]
        %v1009 = vld [vmem:[#allocation22 + $0x140] sm:$0xff]
        %v1010 = vld [vmem:[#allocation22 + $0x148] sm:$0xff]
        %v1011 = vld [vmem:[#allocation22 + $0x150] sm:$0xff]
        %v1012 = vld [vmem:[#allocation22 + $0x158] sm:$0xff]
        %v1013 = vld [vmem:[#allocation22 + $0x160] sm:$0xff]
        %v1014 = vld [vmem:[#allocation22 + $0x168] sm:$0xff]
        %v1015 = vld [vmem:[#allocation22 + $0x170] sm:$0xff]
        %v1016 = vld [vmem:[#allocation22 + $0x178] sm:$0xff]
        %v1017 = vld [vmem:[#allocation22 + $0x180] sm:$0xff]
        %v1018 = vld [vmem:[#allocation22 + $0x188] sm:$0xff]
        %v1019 = vld [vmem:[#allocation22 + $0x190] sm:$0xff]
        %v1020 = vld [vmem:[#allocation22 + $0x198] sm:$0xff]
        %v1021 = vld [vmem:[#allocation22 + $0x1a0] sm:$0xff]
        %v1022 = vld [vmem:[#allocation22 + $0x1a8] sm:$0xff]
        %v1023 = vld [vmem:[#allocation22 + $0x1b0] sm:$0xff]
        %v1024 = vld [vmem:[#allocation22 + $0x1b8] sm:$0xff]
        %v1025 = vld [vmem:[#allocation22 + $0x1c0] sm:$0xff]
        %v1026 = vld [vmem:[#allocation22 + $0x1c8] sm:$0xff]
        %v1027 = vld [vmem:[#allocation22 + $0x1d0] sm:$0xff]
        %v1028 = vld [vmem:[#allocation22 + $0x1d8] sm:$0xff]
        %v1029 = vld [vmem:[#allocation22 + $0x1e0] sm:$0xff]
        %v1030 = vld [vmem:[#allocation22 + $0x1e8] sm:$0xff]
        %v1031 = vld [vmem:[#allocation22 + $0x1f0] sm:$0xff]
        %v1032 = vld [vmem:[#allocation22 + $0x1f8] sm:$0xff]
        %v1033 = vld [vmem:[#allocation25] sm:$0xff]
        %v1034 = vld [vmem:[#allocation25 + $0x8] sm:$0xff]
        %v1035 = vld [vmem:[#allocation25 + $0x10] sm:$0xff]
        %v1036 = vld [vmem:[#allocation25 + $0x18] sm:$0xff]
        %v1037 = vld [vmem:[#allocation25 + $0x20] sm:$0xff]
        %v1038 = vld [vmem:[#allocation25 + $0x28] sm:$0xff]
        %v1039 = vld [vmem:[#allocation25 + $0x30] sm:$0xff]
        %v1040 = vld [vmem:[#allocation25 + $0x38] sm:$0xff]
        %v1041 = vld [vmem:[#allocation25 + $0x40] sm:$0xff]
        %v1042 = vld [vmem:[#allocation25 + $0x48] sm:$0xff]
        %v1043 = vld [vmem:[#allocation25 + $0x50] sm:$0xff]
        %v1044 = vld [vmem:[#allocation25 + $0x58] sm:$0xff]
        %v1045 = vld [vmem:[#allocation25 + $0x60] sm:$0xff]
        %v1046 = vld [vmem:[#allocation25 + $0x68] sm:$0xff]
        %v1047 = vld [vmem:[#allocation25 + $0x70] sm:$0xff]
        %v1048 = vld [vmem:[#allocation25 + $0x78] sm:$0xff]
        %v1049 = vld [vmem:[#allocation25 + $0x80] sm:$0xff]
        %v1050 = vld [vmem:[#allocation25 + $0x88] sm:$0xff]
        %v1051 = vld [vmem:[#allocation25 + $0x90] sm:$0xff]
        %v1052 = vld [vmem:[#allocation25 + $0x98] sm:$0xff]
        %v1053 = vld [vmem:[#allocation25 + $0xa0] sm:$0xff]
        %v1054 = vld [vmem:[#allocation25 + $0xa8] sm:$0xff]
        %v1055 = vld [vmem:[#allocation25 + $0xb0] sm:$0xff]
        %v1056 = vld [vmem:[#allocation25 + $0xb8] sm:$0xff]
        %v1057 = vld [vmem:[#allocation25 + $0xc0] sm:$0xff]
        %v1058 = vld [vmem:[#allocation25 + $0xc8] sm:$0xff]
        %v1059 = vld [vmem:[#allocation25 + $0xd0] sm:$0xff]
        %v1060 = vld [vmem:[#allocation25 + $0xd8] sm:$0xff]
        %v1061 = vld [vmem:[#allocation25 + $0xe0] sm:$0xff]
        %v1062 = vld [vmem:[#allocation25 + $0xe8] sm:$0xff]
        %v1063 = vld [vmem:[#allocation25 + $0xf0] sm:$0xff]
        %v1064 = vld [vmem:[#allocation25 + $0xf8] sm:$0xff]
        %v1065 = vld [vmem:[#allocation25 + $0x100] sm:$0xff]
        %v1066 = vld [vmem:[#allocation25 + $0x108] sm:$0xff]
        %v1067 = vld [vmem:[#allocation25 + $0x110] sm:$0xff]
        %v1068 = vld [vmem:[#allocation25 + $0x118] sm:$0xff]
        %v1069 = vld [vmem:[#allocation25 + $0x120] sm:$0xff]
        %v1070 = vld [vmem:[#allocation25 + $0x128] sm:$0xff]
        %v1071 = vld [vmem:[#allocation25 + $0x130] sm:$0xff]
        %v1072 = vld [vmem:[#allocation25 + $0x138] sm:$0xff]
        %v1073 = vld [vmem:[#allocation25 + $0x140] sm:$0xff]
        %v1074 = vld [vmem:[#allocation25 + $0x148] sm:$0xff]
        %v1075 = vld [vmem:[#allocation25 + $0x150] sm:$0xff]
        %v1076 = vld [vmem:[#allocation25 + $0x158] sm:$0xff]
        %v1077 = vld [vmem:[#allocation25 + $0x160] sm:$0xff]
        %v1078 = vld [vmem:[#allocation25 + $0x168] sm:$0xff]
        %v1079 = vld [vmem:[#allocation25 + $0x170] sm:$0xff]
        %v1080 = vld [vmem:[#allocation25 + $0x178] sm:$0xff]
        %v1081 = vld [vmem:[#allocation25 + $0x180] sm:$0xff]
        %v1082 = vld [vmem:[#allocation25 + $0x188] sm:$0xff]
        %v1083 = vld [vmem:[#allocation25 + $0x190] sm:$0xff]
        %v1084 = vld [vmem:[#allocation25 + $0x198] sm:$0xff]
        %v1085 = vld [vmem:[#allocation25 + $0x1a0] sm:$0xff]
        %v1086 = vld [vmem:[#allocation25 + $0x1a8] sm:$0xff]
        %v1087 = vld [vmem:[#allocation25 + $0x1b0] sm:$0xff]
        %v1088 = vld [vmem:[#allocation25 + $0x1b8] sm:$0xff]
        %v1089 = vld [vmem:[#allocation25 + $0x1c0] sm:$0xff]
        %v1090 = vld [vmem:[#allocation25 + $0x1c8] sm:$0xff]
        %v1091 = vld [vmem:[#allocation25 + $0x1d0] sm:$0xff]
        %v1092 = vld [vmem:[#allocation25 + $0x1d8] sm:$0xff]
        %v1093 = vld [vmem:[#allocation25 + $0x1e0] sm:$0xff]
        %v1094 = vld [vmem:[#allocation25 + $0x1e8] sm:$0xff]
        %v1095 = vld [vmem:[#allocation25 + $0x1f0] sm:$0xff]
        %v1096 = vld [vmem:[#allocation25 + $0x1f8] sm:$0xff]
        %v1097 = vld [vmem:[#allocation8] sm:$0x3]
        %v1098 = vld [vmem:[#allocation11] sm:$0x3]
        %v1099 = vld [vmem:[#allocation14] sm:$0x3]
        %v1100 = vld [vmem:[#allocation17] sm:$0x3]
        %v1101 = vld [vmem:[#allocation23] sm:$0xf]
        %v1102 = vld [vmem:[#allocation26] sm:$0x3]
        %v1103 = vld [vmem:[#allocation19] sm:$0x3]
        %v1104 = vld [vmem:[#allocation20] sm:$0x3]
        %v1105 = vld [vmem:[#allocation28] sm:$0x3]
        %v1106 = vld [vmem:[#allocation29] sm:$0x3]
        %v1107 = vld [vmem:[%s711] sm:$0xff]
        %v1108 = vld [vmem:[%s711 + $0x8] sm:$0xff]
        %v1109 = vld [vmem:[%s711 + $0x10] sm:$0xff]
        %v1110 = vld [vmem:[%s711 + $0x18] sm:$0xff]
        %v1111 = vld [vmem:[%s711 + $0x20] sm:$0xff]
        %v1112 = vld [vmem:[%s711 + $0x28] sm:$0xff]
        %v1113 = vld [vmem:[%s711 + $0x30] sm:$0xff]
        %v1114 = vld [vmem:[%s711 + $0x38] sm:$0xff]
        %v1115 = vld [vmem:[%s711 + $0x40] sm:$0xff]
        %v1116 = vld [vmem:[%s711 + $0x48] sm:$0xff]
        %v1117 = vld [vmem:[%s711 + $0x50] sm:$0xff]
        %v1118 = vld [vmem:[%s711 + $0x58] sm:$0xff]
        %v1119 = vld [vmem:[%s711 + $0x60] sm:$0xff]
        %v1120 = vld [vmem:[%s711 + $0x68] sm:$0xff]
        %v1121 = vld [vmem:[%s711 + $0x70] sm:$0xff]
        %v1122 = vld [vmem:[%s711 + $0x78] sm:$0xff]
        %v1123 = vld [vmem:[%s711 + $0x80] sm:$0xff]
        %v1124 = vld [vmem:[%s711 + $0x88] sm:$0xff]
        %v1125 = vld [vmem:[%s711 + $0x90] sm:$0xff]
        %v1126 = vld [vmem:[%s711 + $0x98] sm:$0xff]
        %v1127 = vld [vmem:[%s711 + $0xa0] sm:$0xff]
        %v1128 = vld [vmem:[%s711 + $0xa8] sm:$0xff]
        %v1129 = vld [vmem:[%s711 + $0xb0] sm:$0xff]
        %v1130 = vld [vmem:[%s711 + $0xb8] sm:$0xff]
        %v1131 = vld [vmem:[%s711 + $0xc0] sm:$0xff]
        %v1132 = vld [vmem:[%s711 + $0xc8] sm:$0xff]
        %v1133 = vld [vmem:[%s711 + $0xd0] sm:$0xff]
        %v1134 = vld [vmem:[%s711 + $0xd8] sm:$0xff]
        %v1135 = vld [vmem:[%s711 + $0xe0] sm:$0xff]
        %v1136 = vld [vmem:[%s711 + $0xe8] sm:$0xff]
        %v1137 = vld [vmem:[%s711 + $0xf0] sm:$0xff]
        %v1138 = vld [vmem:[%s711 + $0xf8] sm:$0xff]
        %v1139 = vld [vmem:[%s719] sm:$0x1]
        %v1140 = vmul.f32 %v1139, -1e+09
        loop: start=0, step=1, limit=2
        $region165: #{encoder_forward.1} parent=91 // loop_pre_header
          _
        $region166: #{encoder_forward.1} parent=91 // loop_header
          %s1142 = sphi 0, %s1146
          %p1143 = scmp.ge.s32.totalorder %s1142, 2
          %v1147 = vphi %v1107, %v5319
          %v1148 = vphi %v1108, %v5320
          %v1149 = vphi %v1109, %v5321
          %v1150 = vphi %v1110, %v5322
          %v1151 = vphi %v1111, %v5323
          %v1152 = vphi %v1112, %v5324
          %v1153 = vphi %v1113, %v5325
          %v1154 = vphi %v1114, %v5326
          %v1155 = vphi %v1115, %v5327
          %v1156 = vphi %v1116, %v5328
          %v1157 = vphi %v1117, %v5329
          %v1158 = vphi %v1118, %v5330
          %v1159 = vphi %v1119, %v5331
          %v1160 = vphi %v1120, %v5332
          %v1161 = vphi %v1121, %v5333
          %v1162 = vphi %v1122, %v5334
          %v1163 = vphi %v1123, %v5335
          %v1164 = vphi %v1124, %v5336
          %v1165 = vphi %v1125, %v5337
          %v1166 = vphi %v1126, %v5338
          %v1167 = vphi %v1127, %v5339
          %v1168 = vphi %v1128, %v5340
          %v1169 = vphi %v1129, %v5341
          %v1170 = vphi %v1130, %v5342
          %v1171 = vphi %v1131, %v5343
          %v1172 = vphi %v1132, %v5344
          %v1173 = vphi %v1133, %v5345
          %v1174 = vphi %v1134, %v5346
          %v1175 = vphi %v1135, %v5347
          %v1176 = vphi %v1136, %v5348
          %v1177 = vphi %v1137, %v5349
          %v1178 = vphi %v1138, %v5350
        $region167: #{encoder_forward.1} parent=91 // loop_header_branch
          %1145 = sbr.rel (%p1143) target = $region171
        $region168: #{encoder_forward.1} parent=91 // loop_body
          %v1179 = vpack.c.bf16 %v1149, %v1147
          %v1180 = vpack.c.bf16 %v1150, %v1148
          %v1181 = vpack.c.bf16 %v1153, %v1151
          %v1182 = vpack.c.bf16 %v1154, %v1152
          %v1183 = vpack.c.bf16 %v1157, %v1155
          %v1184 = vpack.c.bf16 %v1158, %v1156
          %v1185 = vpack.c.bf16 %v1161, %v1159
          %v1186 = vpack.c.bf16 %v1162, %v1160
          %v1187 = vpack.c.bf16 %v1165, %v1163
          %v1188 = vpack.c.bf16 %v1166, %v1164
          %v1189 = vpack.c.bf16 %v1169, %v1167
          %v1190 = vpack.c.bf16 %v1170, %v1168
          %v1191 = vpack.c.bf16 %v1173, %v1171
          %v1192 = vpack.c.bf16 %v1174, %v1172
          %v1193 = vpack.c.bf16 %v1177, %v1175
          %v1194 = vpack.c.bf16 %v1178, %v1176
          %v1196 = vlaneseq
          %v1197 = vshrl.u32 %v1196, 7
          %v1198 = vsub.s32 0, %v1197
          %v1199 = vrot.slane %v1097, %v1198
          %v1200 = vlaneseq
          %v1201 = vshrl.u32 %v1200, 7
          %v1202 = vsub.s32 1, %v1201
          %v1203 = vrot.slane %v1097, %v1202
          %v1238 = vunpack.c.l.b16 %v841
          %v1239 = vunpack.c.h.b16 %v841
          %v1240 = vunpack.c.l.b16 %v842
          %v1241 = vunpack.c.h.b16 %v842
          %v1242 = vunpack.c.l.b16 %v843
          %v1243 = vunpack.c.h.b16 %v843
          %v1244 = vunpack.c.l.b16 %v844
          %v1245 = vunpack.c.h.b16 %v844
          %v1246 = vunpack.c.l.b16 %v845
          %v1247 = vunpack.c.h.b16 %v845
          %v1248 = vunpack.c.l.b16 %v846
          %v1249 = vunpack.c.h.b16 %v846
          %v1250 = vunpack.c.l.b16 %v847
          %v1251 = vunpack.c.h.b16 %v847
          %v1252 = vunpack.c.l.b16 %v848
          %v1253 = vunpack.c.h.b16 %v848
          %v1254 = vunpack.c.l.b16 %v849
          %v1255 = vunpack.c.h.b16 %v849
          %v1256 = vunpack.c.l.b16 %v850
          %v1257 = vunpack.c.h.b16 %v850
          %v1258 = vunpack.c.l.b16 %v851
          %v1259 = vunpack.c.h.b16 %v851
          %v1260 = vunpack.c.l.b16 %v852
          %v1261 = vunpack.c.h.b16 %v852
          %v1262 = vunpack.c.l.b16 %v853
          %v1263 = vunpack.c.h.b16 %v853
          %v1264 = vunpack.c.l.b16 %v854
          %v1265 = vunpack.c.h.b16 %v854
          %v1266 = vunpack.c.l.b16 %v855
          %v1267 = vunpack.c.h.b16 %v855
          %v1268 = vunpack.c.l.b16 %v856
          %v1269 = vunpack.c.h.b16 %v856
          %v1270 = vunpack.c.l.b16 %v857
          %v1271 = vunpack.c.h.b16 %v857
          %v1272 = vunpack.c.l.b16 %v858
          %v1273 = vunpack.c.h.b16 %v858
          %v1274 = vunpack.c.l.b16 %v859
          %v1275 = vunpack.c.h.b16 %v859
          %v1276 = vunpack.c.l.b16 %v860
          %v1277 = vunpack.c.h.b16 %v860
          %v1278 = vunpack.c.l.b16 %v861
          %v1279 = vunpack.c.h.b16 %v861
          %v1280 = vunpack.c.l.b16 %v862
          %v1281 = vunpack.c.h.b16 %v862
          %v1282 = vunpack.c.l.b16 %v863
          %v1283 = vunpack.c.h.b16 %v863
          %v1284 = vunpack.c.l.b16 %v864
          %v1285 = vunpack.c.h.b16 %v864
          %v1286 = vunpack.c.l.b16 %v865
          %v1287 = vunpack.c.h.b16 %v865
          %v1288 = vunpack.c.l.b16 %v866
          %v1289 = vunpack.c.h.b16 %v866
          %v1290 = vunpack.c.l.b16 %v867
          %v1291 = vunpack.c.h.b16 %v867
          %v1292 = vunpack.c.l.b16 %v868
          %v1293 = vunpack.c.h.b16 %v868
          %v1294 = vunpack.c.l.b16 %v869
          %v1295 = vunpack.c.h.b16 %v869
          %v1296 = vunpack.c.l.b16 %v870
          %v1297 = vunpack.c.h.b16 %v870
          %v1298 = vunpack.c.l.b16 %v871
          %v1299 = vunpack.c.h.b16 %v871
          %v1300 = vunpack.c.l.b16 %v872
          %v1301 = vunpack.c.h.b16 %v872
          %v1302 = vpack.c.b16 %v1240, %v1238
          %v1303 = vpack.c.b16 %v1241, %v1239
          %v1304 = vpack.c.b16 %v1244, %v1242
          %v1305 = vpack.c.b16 %v1245, %v1243
          %v1306 = vpack.c.b16 %v1248, %v1246
          %v1307 = vpack.c.b16 %v1249, %v1247
          %v1308 = vpack.c.b16 %v1252, %v1250
          %v1309 = vpack.c.b16 %v1253, %v1251
          %v1310 = vpack.c.b16 %v1256, %v1254
          %v1311 = vpack.c.b16 %v1257, %v1255
          %v1312 = vpack.c.b16 %v1260, %v1258
          %v1313 = vpack.c.b16 %v1261, %v1259
          %v1314 = vpack.c.b16 %v1264, %v1262
          %v1315 = vpack.c.b16 %v1265, %v1263
          %v1316 = vpack.c.b16 %v1268, %v1266
          %v1317 = vpack.c.b16 %v1269, %v1267
          %v1318 = vpack.c.b16 %v1272, %v1270
          %v1319 = vpack.c.b16 %v1273, %v1271
          %v1320 = vpack.c.b16 %v1276, %v1274
          %v1321 = vpack.c.b16 %v1277, %v1275
          %v1322 = vpack.c.b16 %v1280, %v1278
          %v1323 = vpack.c.b16 %v1281, %v1279
          %v1324 = vpack.c.b16 %v1284, %v1282
          %v1325 = vpack.c.b16 %v1285, %v1283
          %v1326 = vpack.c.b16 %v1288, %v1286
          %v1327 = vpack.c.b16 %v1289, %v1287
          %v1328 = vpack.c.b16 %v1292, %v1290
          %v1329 = vpack.c.b16 %v1293, %v1291
          %v1330 = vpack.c.b16 %v1296, %v1294
          %v1331 = vpack.c.b16 %v1297, %v1295
          %v1332 = vpack.c.b16 %v1300, %v1298
          %v1333 = vpack.c.b16 %v1301, %v1299
          %1366 = vmatprep.subr.bf16.mxu0 %v1303
          %1367 = vmatpush1.bf16.msra.mxu0 %v1302
          %1368 = vmatprep.subr.bf16.mxu0 %v1305
          %1369 = vmatpush1.bf16.msra.mxu0 %v1304
          %1370 = vmatprep.subr.bf16.mxu0 %v1307
          %1371 = vmatpush1.bf16.msra.mxu0 %v1306
          %1372 = vmatprep.subr.bf16.mxu0 %v1309
          %1373 = vmatpush1.bf16.msra.mxu0 %v1308
          %1374 = vmatprep.subr.bf16.mxu0 %v1311
          %1375 = vmatpush1.bf16.msra.mxu0 %v1310
          %1376 = vmatprep.subr.bf16.mxu0 %v1313
          %1377 = vmatpush1.bf16.msra.mxu0 %v1312
          %1378 = vmatprep.subr.bf16.mxu0 %v1315
          %1379 = vmatpush1.bf16.msra.mxu0 %v1314
          %1380 = vmatprep.subr.bf16.mxu0 %v1317
          %1381 = vmatpush1.bf16.msra.mxu0 %v1316
          %1382 = vmatprep.subr.bf16.mxu0 %v1319
          %1383 = vmatpush1.bf16.msra.mxu0 %v1318
          %1384 = vmatprep.subr.bf16.mxu0 %v1321
          %1385 = vmatpush1.bf16.msra.mxu0 %v1320
          %1386 = vmatprep.subr.bf16.mxu0 %v1323
          %1387 = vmatpush1.bf16.msra.mxu0 %v1322
          %1388 = vmatprep.subr.bf16.mxu0 %v1325
          %1389 = vmatpush1.bf16.msra.mxu0 %v1324
          %1390 = vmatprep.subr.bf16.mxu0 %v1327
          %1391 = vmatpush1.bf16.msra.mxu0 %v1326
          %1392 = vmatprep.subr.bf16.mxu0 %v1329
          %1393 = vmatpush1.bf16.msra.mxu0 %v1328
          %1394 = vmatprep.subr.bf16.mxu0 %v1331
          %1395 = vmatpush1.bf16.msra.mxu0 %v1330
          %1396 = vmatprep.subr.bf16.mxu0 %v1333
          %1397 = vmatpush1.bf16.msra.mxu0 %v1332
          %1398 = vmatprep.mubr.bf16.mxu0 %v1180
          %1399 = vmatmul.mubr.bf16.gmra.mrb[0].mxu0 %v1179
          %v1400 = vpop.f32.mrb[0].mxu0
          %v1401 = vadd.f32 %v1199, %v1400
          %v1402 = vpop.f32.mrb[0].mxu0
          %v1403 = vadd.f32 %v1203, %v1402
          %v1404 = vpop.f32.mrb[0].mxu0
          %v1405 = vadd.f32 %v1199, %v1404
          %v1406 = vpop.f32.mrb[0].mxu0
          %v1407 = vadd.f32 %v1203, %v1406
          %1408 = vmatprep.mubr.bf16.mxu0 %v1182
          %1409 = vmatmul.mubr.bf16.gmra.mrb[0].mxu0 %v1181
          %v1410 = vpop.f32.mrb[0].mxu0
          %v1411 = vadd.f32 %v1199, %v1410
          %v1412 = vpop.f32.mrb[0].mxu0
          %v1413 = vadd.f32 %v1203, %v1412
          %v1414 = vpop.f32.mrb[0].mxu0
          %v1415 = vadd.f32 %v1199, %v1414
          %v1416 = vpop.f32.mrb[0].mxu0
          %v1417 = vadd.f32 %v1203, %v1416
          %1418 = vmatprep.mubr.bf16.mxu0 %v1184
          %1419 = vmatmul.mubr.bf16.gmra.mrb[0].mxu0 %v1183
          %v1420 = vpop.f32.mrb[0].mxu0
          %v1421 = vadd.f32 %v1199, %v1420
          %v1422 = vpop.f32.mrb[0].mxu0
          %v1423 = vadd.f32 %v1203, %v1422
          %v1424 = vpop.f32.mrb[0].mxu0
          %v1425 = vadd.f32 %v1199, %v1424
          %v1426 = vpop.f32.mrb[0].mxu0
          %v1427 = vadd.f32 %v1203, %v1426
          %1428 = vmatprep.mubr.bf16.mxu0 %v1186
          %1429 = vmatmul.mubr.bf16.gmra.mrb[0].mxu0 %v1185
          %v1430 = vpop.f32.mrb[0].mxu0
          %v1431 = vadd.f32 %v1199, %v1430
          %v1432 = vpop.f32.mrb[0].mxu0
          %v1433 = vadd.f32 %v1203, %v1432
          %v1434 = vpop.f32.mrb[0].mxu0
          %v1435 = vadd.f32 %v1199, %v1434
          %v1436 = vpop.f32.mrb[0].mxu0
          %v1437 = vadd.f32 %v1203, %v1436
          %1438 = vmatprep.mubr.bf16.mxu0 %v1188
          %1439 = vmatmul.mubr.bf16.gmra.mrb[0].mxu0 %v1187
          %v1440 = vpop.f32.mrb[0].mxu0
          %v1441 = vadd.f32 %v1199, %v1440
          %v1442 = vpop.f32.mrb[0].mxu0
          %v1443 = vadd.f32 %v1203, %v1442
          %v1444 = vpop.f32.mrb[0].mxu0
          %v1445 = vadd.f32 %v1199, %v1444
          %v1446 = vpop.f32.mrb[0].mxu0
          %v1447 = vadd.f32 %v1203, %v1446
          %1448 = vmatprep.mubr.bf16.mxu0 %v1190
          %1449 = vmatmul.mubr.bf16.gmra.mrb[0].mxu0 %v1189
          %v1450 = vpop.f32.mrb[0].mxu0
          %v1451 = vadd.f32 %v1199, %v1450
          %v1452 = vpop.f32.mrb[0].mxu0
          %v1453 = vadd.f32 %v1203, %v1452
          %v1454 = vpop.f32.mrb[0].mxu0
          %v1455 = vadd.f32 %v1199, %v1454
          %v1456 = vpop.f32.mrb[0].mxu0
          %v1457 = vadd.f32 %v1203, %v1456
          %1458 = vmatprep.mubr.bf16.mxu0 %v1192
          %1459 = vmatmul.mubr.bf16.gmra.mrb[0].mxu0 %v1191
          %v1460 = vpop.f32.mrb[0].mxu0
          %v1461 = vadd.f32 %v1199, %v1460
          %v1462 = vpop.f32.mrb[0].mxu0
          %v1463 = vadd.f32 %v1203, %v1462
          %v1464 = vpop.f32.mrb[0].mxu0
          %v1465 = vadd.f32 %v1199, %v1464
          %v1466 = vpop.f32.mrb[0].mxu0
          %v1467 = vadd.f32 %v1203, %v1466
          %1468 = vmatprep.mubr.bf16.mxu0 %v1194
          %1469 = vmatmul.mubr.bf16.gmra.mrb[0].mxu0 %v1193
          %v1470 = vpop.f32.mrb[0].mxu0
          %v1471 = vadd.f32 %v1199, %v1470
          %v1472 = vpop.f32.mrb[0].mxu0
          %v1473 = vadd.f32 %v1203, %v1472
          %v1474 = vpop.f32.mrb[0].mxu0
          %v1475 = vadd.f32 %v1199, %v1474
          %v1476 = vpop.f32.mrb[0].mxu0
          %v1477 = vadd.f32 %v1203, %v1476
          %1478 = vdwg.mxu0
          %v1480 = vlaneseq
          %v1481 = vshrl.u32 %v1480, 7
          %v1482 = vsub.s32 0, %v1481
          %v1483 = vrot.slane %v1098, %v1482
          %v1484 = vlaneseq
          %v1485 = vshrl.u32 %v1484, 7
          %v1486 = vsub.s32 1, %v1485
          %v1487 = vrot.slane %v1098, %v1486
          %v1522 = vunpack.c.l.b16 %v873
          %v1523 = vunpack.c.h.b16 %v873
          %v1524 = vunpack.c.l.b16 %v874
          %v1525 = vunpack.c.h.b16 %v874
          %v1526 = vunpack.c.l.b16 %v875
          %v1527 = vunpack.c.h.b16 %v875
          %v1528 = vunpack.c.l.b16 %v876
          %v1529 = vunpack.c.h.b16 %v876
          %v1530 = vunpack.c.l.b16 %v877
          %v1531 = vunpack.c.h.b16 %v877
          %v1532 = vunpack.c.l.b16 %v878
          %v1533 = vunpack.c.h.b16 %v878
          %v1534 = vunpack.c.l.b16 %v879
          %v1535 = vunpack.c.h.b16 %v879
          %v1536 = vunpack.c.l.b16 %v880
          %v1537 = vunpack.c.h.b16 %v880
          %v1538 = vunpack.c.l.b16 %v881
          %v1539 = vunpack.c.h.b16 %v881
          %v1540 = vunpack.c.l.b16 %v882
          %v1541 = vunpack.c.h.b16 %v882
          %v1542 = vunpack.c.l.b16 %v883
          %v1543 = vunpack.c.h.b16 %v883
          %v1544 = vunpack.c.l.b16 %v884
          %v1545 = vunpack.c.h.b16 %v884
          %v1546 = vunpack.c.l.b16 %v885
          %v1547 = vunpack.c.h.b16 %v885
          %v1548 = vunpack.c.l.b16 %v886
          %v1549 = vunpack.c.h.b16 %v886
          %v1550 = vunpack.c.l.b16 %v887
          %v1551 = vunpack.c.h.b16 %v887
          %v1552 = vunpack.c.l.b16 %v888
          %v1553 = vunpack.c.h.b16 %v888
          %v1554 = vunpack.c.l.b16 %v889
          %v1555 = vunpack.c.h.b16 %v889
          %v1556 = vunpack.c.l.b16 %v890
          %v1557 = vunpack.c.h.b16 %v890
          %v1558 = vunpack.c.l.b16 %v891
          %v1559 = vunpack.c.h.b16 %v891
          %v1560 = vunpack.c.l.b16 %v892
          %v1561 = vunpack.c.h.b16 %v892
          %v1562 = vunpack.c.l.b16 %v893
          %v1563 = vunpack.c.h.b16 %v893
          %v1564 = vunpack.c.l.b16 %v894
          %v1565 = vunpack.c.h.b16 %v894
          %v1566 = vunpack.c.l.b16 %v895
          %v1567 = vunpack.c.h.b16 %v895
          %v1568 = vunpack.c.l.b16 %v896
          %v1569 = vunpack.c.h.b16 %v896
          %v1570 = vunpack.c.l.b16 %v897
          %v1571 = vunpack.c.h.b16 %v897
          %v1572 = vunpack.c.l.b16 %v898
          %v1573 = vunpack.c.h.b16 %v898
          %v1574 = vunpack.c.l.b16 %v899
          %v1575 = vunpack.c.h.b16 %v899
          %v1576 = vunpack.c.l.b16 %v900
          %v1577 = vunpack.c.h.b16 %v900
          %v1578 = vunpack.c.l.b16 %v901
          %v1579 = vunpack.c.h.b16 %v901
          %v1580 = vunpack.c.l.b16 %v902
          %v1581 = vunpack.c.h.b16 %v902
          %v1582 = vunpack.c.l.b16 %v903
          %v1583 = vunpack.c.h.b16 %v903
          %v1584 = vunpack.c.l.b16 %v904
          %v1585 = vunpack.c.h.b16 %v904
          %v1586 = vpack.c.b16 %v1524, %v1522
          %v1587 = vpack.c.b16 %v1525, %v1523
          %v1588 = vpack.c.b16 %v1528, %v1526
          %v1589 = vpack.c.b16 %v1529, %v1527
          %v1590 = vpack.c.b16 %v1532, %v1530
          %v1591 = vpack.c.b16 %v1533, %v1531
          %v1592 = vpack.c.b16 %v1536, %v1534
          %v1593 = vpack.c.b16 %v1537, %v1535
          %v1594 = vpack.c.b16 %v1540, %v1538
          %v1595 = vpack.c.b16 %v1541, %v1539
          %v1596 = vpack.c.b16 %v1544, %v1542
          %v1597 = vpack.c.b16 %v1545, %v1543
          %v1598 = vpack.c.b16 %v1548, %v1546
          %v1599 = vpack.c.b16 %v1549, %v1547
          %v1600 = vpack.c.b16 %v1552, %v1550
          %v1601 = vpack.c.b16 %v1553, %v1551
          %v1602 = vpack.c.b16 %v1556, %v1554
          %v1603 = vpack.c.b16 %v1557, %v1555
          %v1604 = vpack.c.b16 %v1560, %v1558
          %v1605 = vpack.c.b16 %v1561, %v1559
          %v1606 = vpack.c.b16 %v1564, %v1562
          %v1607 = vpack.c.b16 %v1565, %v1563
          %v1608 = vpack.c.b16 %v1568, %v1566
          %v1609 = vpack.c.b16 %v1569, %v1567
          %v1610 = vpack.c.b16 %v1572, %v1570
          %v1611 = vpack.c.b16 %v1573, %v1571
          %v1612 = vpack.c.b16 %v1576, %v1574
          %v1613 = vpack.c.b16 %v1577, %v1575
          %v1614 = vpack.c.b16 %v1580, %v1578
          %v1615 = vpack.c.b16 %v1581, %v1579
          %v1616 = vpack.c.b16 %v1584, %v1582
          %v1617 = vpack.c.b16 %v1585, %v1583
          %1650 = vmatprep.subr.bf16.mxu0 %v1587
          %1651 = vmatpush1.bf16.msra.mxu0 %v1586
          %1652 = vmatprep.subr.bf16.mxu0 %v1589
          %1653 = vmatpush1.bf16.msra.mxu0 %v1588
          %1654 = vmatprep.subr.bf16.mxu0 %v1591
          %1655 = vmatpush1.bf16.msra.mxu0 %v1590
          %1656 = vmatprep.subr.bf16.mxu0 %v1593
          %1657 = vmatpush1.bf16.msra.mxu0 %v1592
          %1658 = vmatprep.subr.bf16.mxu0 %v1595
          %1659 = vmatpush1.bf16.msra.mxu0 %v1594
          %1660 = vmatprep.subr.bf16.mxu0 %v1597
          %1661 = vmatpush1.bf16.msra.mxu0 %v1596
          %1662 = vmatprep.subr.bf16.mxu0 %v1599
          %1663 = vmatpush1.bf16.msra.mxu0 %v1598
          %1664 = vmatprep.subr.bf16.mxu0 %v1601
          %1665 = vmatpush1.bf16.msra.mxu0 %v1600
          %1666 = vmatprep.subr.bf16.mxu0 %v1603
          %1667 = vmatpush1.bf16.msra.mxu0 %v1602
          %1668 = vmatprep.subr.bf16.mxu0 %v1605
          %1669 = vmatpush1.bf16.msra.mxu0 %v1604
          %1670 = vmatprep.subr.bf16.mxu0 %v1607
          %1671 = vmatpush1.bf16.msra.mxu0 %v1606
          %1672 = vmatprep.subr.bf16.mxu0 %v1609
          %1673 = vmatpush1.bf16.msra.mxu0 %v1608
          %1674 = vmatprep.subr.bf16.mxu0 %v1611
          %1675 = vmatpush1.bf16.msra.mxu0 %v1610
          %1676 = vmatprep.subr.bf16.mxu0 %v1613
          %1677 = vmatpush1.bf16.msra.mxu0 %v1612
          %1678 = vmatprep.subr.bf16.mxu0 %v1615
          %1679 = vmatpush1.bf16.msra.mxu0 %v1614
          %1680 = vmatprep.subr.bf16.mxu0 %v1617
          %1681 = vmatpush1.bf16.msra.mxu0 %v1616
          %1682 = vmatprep.mubr.bf16.mxu0 %v1180
          %1683 = vmatmul.mubr.bf16.gmra.mrb[0].mxu0 %v1179
          %v1684 = vpop.f32.mrb[0].mxu0
          %v1685 = vadd.f32 %v1483, %v1684
          %v1686 = vpop.f32.mrb[0].mxu0
          %v1687 = vadd.f32 %v1487, %v1686
          %v1688 = vpop.f32.mrb[0].mxu0
          %v1689 = vadd.f32 %v1483, %v1688
          %v1690 = vpop.f32.mrb[0].mxu0
          %v1691 = vadd.f32 %v1487, %v1690
          %1692 = vmatprep.mubr.bf16.mxu0 %v1182
          %1693 = vmatmul.mubr.bf16.gmra.mrb[0].mxu0 %v1181
          %v1694 = vpop.f32.mrb[0].mxu0
          %v1695 = vadd.f32 %v1483, %v1694
          %v1696 = vpop.f32.mrb[0].mxu0
          %v1697 = vadd.f32 %v1487, %v1696
          %v1698 = vpop.f32.mrb[0].mxu0
          %v1699 = vadd.f32 %v1483, %v1698
          %v1700 = vpop.f32.mrb[0].mxu0
          %v1701 = vadd.f32 %v1487, %v1700
          %1702 = vmatprep.mubr.bf16.mxu0 %v1184
          %1703 = vmatmul.mubr.bf16.gmra.mrb[0].mxu0 %v1183
          %v1704 = vpop.f32.mrb[0].mxu0
          %v1705 = vadd.f32 %v1483, %v1704
          %v1706 = vpop.f32.mrb[0].mxu0
          %v1707 = vadd.f32 %v1487, %v1706
          %v1708 = vpop.f32.mrb[0].mxu0
          %v1709 = vadd.f32 %v1483, %v1708
          %v1710 = vpop.f32.mrb[0].mxu0
          %v1711 = vadd.f32 %v1487, %v1710
          %1712 = vmatprep.mubr.bf16.mxu0 %v1186
          %1713 = vmatmul.mubr.bf16.gmra.mrb[0].mxu0 %v1185
          %v1714 = vpop.f32.mrb[0].mxu0
          %v1715 = vadd.f32 %v1483, %v1714
          %v1716 = vpop.f32.mrb[0].mxu0
          %v1717 = vadd.f32 %v1487, %v1716
          %v1718 = vpop.f32.mrb[0].mxu0
          %v1719 = vadd.f32 %v1483, %v1718
          %v1720 = vpop.f32.mrb[0].mxu0
          %v1721 = vadd.f32 %v1487, %v1720
          %1722 = vmatprep.mubr.bf16.mxu0 %v1188
          %1723 = vmatmul.mubr.bf16.gmra.mrb[0].mxu0 %v1187
          %v1724 = vpop.f32.mrb[0].mxu0
          %v1725 = vadd.f32 %v1483, %v1724
          %v1726 = vpop.f32.mrb[0].mxu0
          %v1727 = vadd.f32 %v1487, %v1726
          %v1728 = vpop.f32.mrb[0].mxu0
          %v1729 = vadd.f32 %v1483, %v1728
          %v1730 = vpop.f32.mrb[0].mxu0
          %v1731 = vadd.f32 %v1487, %v1730
          %1732 = vmatprep.mubr.bf16.mxu0 %v1190
          %1733 = vmatmul.mubr.bf16.gmra.mrb[0].mxu0 %v1189
          %v1734 = vpop.f32.mrb[0].mxu0
          %v1735 = vadd.f32 %v1483, %v1734
          %v1736 = vpop.f32.mrb[0].mxu0
          %v1737 = vadd.f32 %v1487, %v1736
          %v1738 = vpop.f32.mrb[0].mxu0
          %v1739 = vadd.f32 %v1483, %v1738
          %v1740 = vpop.f32.mrb[0].mxu0
          %v1741 = vadd.f32 %v1487, %v1740
          %1742 = vmatprep.mubr.bf16.mxu0 %v1192
          %1743 = vmatmul.mubr.bf16.gmra.mrb[0].mxu0 %v1191
          %v1744 = vpop.f32.mrb[0].mxu0
          %v1745 = vadd.f32 %v1483, %v1744
          %v1746 = vpop.f32.mrb[0].mxu0
          %v1747 = vadd.f32 %v1487, %v1746
          %v1748 = vpop.f32.mrb[0].mxu0
          %v1749 = vadd.f32 %v1483, %v1748
          %v1750 = vpop.f32.mrb[0].mxu0
          %v1751 = vadd.f32 %v1487, %v1750
          %1752 = vmatprep.mubr.bf16.mxu0 %v1194
          %1753 = vmatmul.mubr.bf16.gmra.mrb[0].mxu0 %v1193
          %v1754 = vpop.f32.mrb[0].mxu0
          %v1755 = vadd.f32 %v1483, %v1754
          %v1756 = vpop.f32.mrb[0].mxu0
          %v1757 = vadd.f32 %v1487, %v1756
          %v1758 = vpop.f32.mrb[0].mxu0
          %v1759 = vadd.f32 %v1483, %v1758
          %v1760 = vpop.f32.mrb[0].mxu0
          %v1761 = vadd.f32 %v1487, %v1760
          %1762 = vdwg.mxu0
          %v1764 = vlaneseq
          %v1765 = vshrl.u32 %v1764, 7
          %v1766 = vsub.s32 0, %v1765
          %v1767 = vrot.slane %v1099, %v1766
          %v1768 = vlaneseq
          %v1769 = vshrl.u32 %v1768, 7
          %v1770 = vsub.s32 1, %v1769
          %v1771 = vrot.slane %v1099, %v1770
          %v1806 = vunpack.c.l.b16 %v905
          %v1807 = vunpack.c.h.b16 %v905
          %v1808 = vunpack.c.l.b16 %v906
          %v1809 = vunpack.c.h.b16 %v906
          %v1810 = vunpack.c.l.b16 %v907
          %v1811 = vunpack.c.h.b16 %v907
          %v1812 = vunpack.c.l.b16 %v908
          %v1813 = vunpack.c.h.b16 %v908
          %v1814 = vunpack.c.l.b16 %v909
          %v1815 = vunpack.c.h.b16 %v909
          %v1816 = vunpack.c.l.b16 %v910
          %v1817 = vunpack.c.h.b16 %v910
          %v1818 = vunpack.c.l.b16 %v911
          %v1819 = vunpack.c.h.b16 %v911
          %v1820 = vunpack.c.l.b16 %v912
          %v1821 = vunpack.c.h.b16 %v912
          %v1822 = vunpack.c.l.b16 %v913
          %v1823 = vunpack.c.h.b16 %v913
          %v1824 = vunpack.c.l.b16 %v914
          %v1825 = vunpack.c.h.b16 %v914
          %v1826 = vunpack.c.l.b16 %v915
          %v1827 = vunpack.c.h.b16 %v915
          %v1828 = vunpack.c.l.b16 %v916
          %v1829 = vunpack.c.h.b16 %v916
          %v1830 = vunpack.c.l.b16 %v917
          %v1831 = vunpack.c.h.b16 %v917
          %v1832 = vunpack.c.l.b16 %v918
          %v1833 = vunpack.c.h.b16 %v918
          %v1834 = vunpack.c.l.b16 %v919
          %v1835 = vunpack.c.h.b16 %v919
          %v1836 = vunpack.c.l.b16 %v920
          %v1837 = vunpack.c.h.b16 %v920
          %v1838 = vunpack.c.l.b16 %v921
          %v1839 = vunpack.c.h.b16 %v921
          %v1840 = vunpack.c.l.b16 %v922
          %v1841 = vunpack.c.h.b16 %v922
          %v1842 = vunpack.c.l.b16 %v923
          %v1843 = vunpack.c.h.b16 %v923
          %v1844 = vunpack.c.l.b16 %v924
          %v1845 = vunpack.c.h.b16 %v924
          %v1846 = vunpack.c.l.b16 %v925
          %v1847 = vunpack.c.h.b16 %v925
          %v1848 = vunpack.c.l.b16 %v926
          %v1849 = vunpack.c.h.b16 %v926
          %v1850 = vunpack.c.l.b16 %v927
          %v1851 = vunpack.c.h.b16 %v927
          %v1852 = vunpack.c.l.b16 %v928
          %v1853 = vunpack.c.h.b16 %v928
          %v1854 = vunpack.c.l.b16 %v929
          %v1855 = vunpack.c.h.b16 %v929
          %v1856 = vunpack.c.l.b16 %v930
          %v1857 = vunpack.c.h.b16 %v930
          %v1858 = vunpack.c.l.b16 %v931
          %v1859 = vunpack.c.h.b16 %v931
          %v1860 = vunpack.c.l.b16 %v932
          %v1861 = vunpack.c.h.b16 %v932
          %v1862 = vunpack.c.l.b16 %v933
          %v1863 = vunpack.c.h.b16 %v933
          %v1864 = vunpack.c.l.b16 %v934
          %v1865 = vunpack.c.h.b16 %v934
          %v1866 = vunpack.c.l.b16 %v935
          %v1867 = vunpack.c.h.b16 %v935
          %v1868 = vunpack.c.l.b16 %v936
          %v1869 = vunpack.c.h.b16 %v936
          %v1870 = vpack.c.b16 %v1808, %v1806
          %v1871 = vpack.c.b16 %v1809, %v1807
          %v1872 = vpack.c.b16 %v1812, %v1810
          %v1873 = vpack.c.b16 %v1813, %v1811
          %v1874 = vpack.c.b16 %v1816, %v1814
          %v1875 = vpack.c.b16 %v1817, %v1815
          %v1876 = vpack.c.b16 %v1820, %v1818
          %v1877 = vpack.c.b16 %v1821, %v1819
          %v1878 = vpack.c.b16 %v1824, %v1822
          %v1879 = vpack.c.b16 %v1825, %v1823
          %v1880 = vpack.c.b16 %v1828, %v1826
          %v1881 = vpack.c.b16 %v1829, %v1827
          %v1882 = vpack.c.b16 %v1832, %v1830
          %v1883 = vpack.c.b16 %v1833, %v1831
          %v1884 = vpack.c.b16 %v1836, %v1834
          %v1885 = vpack.c.b16 %v1837, %v1835
          %v1886 = vpack.c.b16 %v1840, %v1838
          %v1887 = vpack.c.b16 %v1841, %v1839
          %v1888 = vpack.c.b16 %v1844, %v1842
          %v1889 = vpack.c.b16 %v1845, %v1843
          %v1890 = vpack.c.b16 %v1848, %v1846
          %v1891 = vpack.c.b16 %v1849, %v1847
          %v1892 = vpack.c.b16 %v1852, %v1850
          %v1893 = vpack.c.b16 %v1853, %v1851
          %v1894 = vpack.c.b16 %v1856, %v1854
          %v1895 = vpack.c.b16 %v1857, %v1855
          %v1896 = vpack.c.b16 %v1860, %v1858
          %v1897 = vpack.c.b16 %v1861, %v1859
          %v1898 = vpack.c.b16 %v1864, %v1862
          %v1899 = vpack.c.b16 %v1865, %v1863
          %v1900 = vpack.c.b16 %v1868, %v1866
          %v1901 = vpack.c.b16 %v1869, %v1867
          %1934 = vmatprep.subr.bf16.mxu0 %v1871
          %1935 = vmatpush1.bf16.msra.mxu0 %v1870
          %1936 = vmatprep.subr.bf16.mxu0 %v1873
          %1937 = vmatpush1.bf16.msra.mxu0 %v1872
          %1938 = vmatprep.subr.bf16.mxu0 %v1875
          %1939 = vmatpush1.bf16.msra.mxu0 %v1874
          %1940 = vmatprep.subr.bf16.mxu0 %v1877
          %1941 = vmatpush1.bf16.msra.mxu0 %v1876
          %1942 = vmatprep.subr.bf16.mxu0 %v1879
          %1943 = vmatpush1.bf16.msra.mxu0 %v1878
          %1944 = vmatprep.subr.bf16.mxu0 %v1881
          %1945 = vmatpush1.bf16.msra.mxu0 %v1880
          %1946 = vmatprep.subr.bf16.mxu0 %v1883
          %1947 = vmatpush1.bf16.msra.mxu0 %v1882
          %1948 = vmatprep.subr.bf16.mxu0 %v1885
          %1949 = vmatpush1.bf16.msra.mxu0 %v1884
          %1950 = vmatprep.subr.bf16.mxu0 %v1887
          %1951 = vmatpush1.bf16.msra.mxu0 %v1886
          %1952 = vmatprep.subr.bf16.mxu0 %v1889
          %1953 = vmatpush1.bf16.msra.mxu0 %v1888
          %1954 = vmatprep.subr.bf16.mxu0 %v1891
          %1955 = vmatpush1.bf16.msra.mxu0 %v1890
          %1956 = vmatprep.subr.bf16.mxu0 %v1893
          %1957 = vmatpush1.bf16.msra.mxu0 %v1892
          %1958 = vmatprep.subr.bf16.mxu0 %v1895
          %1959 = vmatpush1.bf16.msra.mxu0 %v1894
          %1960 = vmatprep.subr.bf16.mxu0 %v1897
          %1961 = vmatpush1.bf16.msra.mxu0 %v1896
          %1962 = vmatprep.subr.bf16.mxu0 %v1899
          %1963 = vmatpush1.bf16.msra.mxu0 %v1898
          %1964 = vmatprep.subr.bf16.mxu0 %v1901
          %1965 = vmatpush1.bf16.msra.mxu0 %v1900
          %1966 = vmatprep.mubr.bf16.mxu0 %v1180
          %1967 = vmatmul.mubr.bf16.gmra.mrb[0].mxu0 %v1179
          %v1968 = vpop.f32.mrb[0].mxu0
          %v1969 = vadd.f32 %v1767, %v1968
          %v1970 = vpop.f32.mrb[0].mxu0
          %v1971 = vadd.f32 %v1771, %v1970
          %v1972 = vpop.f32.mrb[0].mxu0
          %v1973 = vadd.f32 %v1767, %v1972
          %v1974 = vpop.f32.mrb[0].mxu0
          %v1975 = vadd.f32 %v1771, %v1974
          %1976 = vmatprep.mubr.bf16.mxu0 %v1182
          %1977 = vmatmul.mubr.bf16.gmra.mrb[0].mxu0 %v1181
          %v1978 = vpop.f32.mrb[0].mxu0
          %v1979 = vadd.f32 %v1767, %v1978
          %v1980 = vpop.f32.mrb[0].mxu0
          %v1981 = vadd.f32 %v1771, %v1980
          %v1982 = vpop.f32.mrb[0].mxu0
          %v1983 = vadd.f32 %v1767, %v1982
          %v1984 = vpop.f32.mrb[0].mxu0
          %v1985 = vadd.f32 %v1771, %v1984
          %1986 = vmatprep.mubr.bf16.mxu0 %v1184
          %1987 = vmatmul.mubr.bf16.gmra.mrb[0].mxu0 %v1183
          %v1988 = vpop.f32.mrb[0].mxu0
          %v1989 = vadd.f32 %v1767, %v1988
          %v1990 = vpop.f32.mrb[0].mxu0
          %v1991 = vadd.f32 %v1771, %v1990
          %v1992 = vpop.f32.mrb[0].mxu0
          %v1993 = vadd.f32 %v1767, %v1992
          %v1994 = vpop.f32.mrb[0].mxu0
          %v1995 = vadd.f32 %v1771, %v1994
          %1996 = vmatprep.mubr.bf16.mxu0 %v1186
          %1997 = vmatmul.mubr.bf16.gmra.mrb[0].mxu0 %v1185
          %v1998 = vpop.f32.mrb[0].mxu0
          %v1999 = vadd.f32 %v1767, %v1998
          %v2000 = vpop.f32.mrb[0].mxu0
          %v2001 = vadd.f32 %v1771, %v2000
          %v2002 = vpop.f32.mrb[0].mxu0
          %v2003 = vadd.f32 %v1767, %v2002
          %v2004 = vpop.f32.mrb[0].mxu0
          %v2005 = vadd.f32 %v1771, %v2004
          %2006 = vmatprep.mubr.bf16.mxu0 %v1188
          %2007 = vmatmul.mubr.bf16.gmra.mrb[0].mxu0 %v1187
          %v2008 = vpop.f32.mrb[0].mxu0
          %v2009 = vadd.f32 %v1767, %v2008
          %v2010 = vpop.f32.mrb[0].mxu0
          %v2011 = vadd.f32 %v1771, %v2010
          %v2012 = vpop.f32.mrb[0].mxu0
          %v2013 = vadd.f32 %v1767, %v2012
          %v2014 = vpop.f32.mrb[0].mxu0
          %v2015 = vadd.f32 %v1771, %v2014
          %2016 = vmatprep.mubr.bf16.mxu0 %v1190
          %2017 = vmatmul.mubr.bf16.gmra.mrb[0].mxu0 %v1189
          %v2018 = vpop.f32.mrb[0].mxu0
          %v2019 = vadd.f32 %v1767, %v2018
          %v2020 = vpop.f32.mrb[0].mxu0
          %v2021 = vadd.f32 %v1771, %v2020
          %v2022 = vpop.f32.mrb[0].mxu0
          %v2023 = vadd.f32 %v1767, %v2022
          %v2024 = vpop.f32.mrb[0].mxu0
          %v2025 = vadd.f32 %v1771, %v2024
          %2026 = vmatprep.mubr.bf16.mxu0 %v1192
          %2027 = vmatmul.mubr.bf16.gmra.mrb[0].mxu0 %v1191
          %v2028 = vpop.f32.mrb[0].mxu0
          %v2029 = vadd.f32 %v1767, %v2028
          %v2030 = vpop.f32.mrb[0].mxu0
          %v2031 = vadd.f32 %v1771, %v2030
          %v2032 = vpop.f32.mrb[0].mxu0
          %v2033 = vadd.f32 %v1767, %v2032
          %v2034 = vpop.f32.mrb[0].mxu0
          %v2035 = vadd.f32 %v1771, %v2034
          %2036 = vmatprep.mubr.bf16.mxu0 %v1194
          %2037 = vmatmul.mubr.bf16.gmra.mrb[0].mxu0 %v1193
          %v2038 = vpop.f32.mrb[0].mxu0
          %v2039 = vadd.f32 %v1767, %v2038
          %v2040 = vpop.f32.mrb[0].mxu0
          %v2041 = vadd.f32 %v1771, %v2040
          %v2042 = vpop.f32.mrb[0].mxu0
          %v2043 = vadd.f32 %v1767, %v2042
          %v2044 = vpop.f32.mrb[0].mxu0
          %v2045 = vadd.f32 %v1771, %v2044
          %2046 = vdwg.mxu0
          %v2047 = vpack.c.bf16 %v1405, %v1401
          %v2048 = vpack.c.bf16 %v1407, %v1403
          %v2049 = vpack.c.bf16 %v1415, %v1411
          %v2050 = vpack.c.bf16 %v1417, %v1413
          %v2051 = vpack.c.bf16 %v1425, %v1421
          %v2052 = vpack.c.bf16 %v1427, %v1423
          %v2053 = vpack.c.bf16 %v1435, %v1431
          %v2054 = vpack.c.bf16 %v1437, %v1433
          %v2055 = vpack.c.bf16 %v1445, %v1441
          %v2056 = vpack.c.bf16 %v1447, %v1443
          %v2057 = vpack.c.bf16 %v1455, %v1451
          %v2058 = vpack.c.bf16 %v1457, %v1453
          %v2059 = vpack.c.bf16 %v1465, %v1461
          %v2060 = vpack.c.bf16 %v1467, %v1463
          %v2061 = vpack.c.bf16 %v1475, %v1471
          %v2062 = vpack.c.bf16 %v1477, %v1473
          %v2063 = vpack.c.bf16 %v1689, %v1685
          %v2064 = vpack.c.bf16 %v1691, %v1687
          %v2065 = vpack.c.bf16 %v1699, %v1695
          %v2066 = vpack.c.bf16 %v1701, %v1697
          %v2067 = vpack.c.bf16 %v1709, %v1705
          %v2068 = vpack.c.bf16 %v1711, %v1707
          %v2069 = vpack.c.bf16 %v1719, %v1715
          %v2070 = vpack.c.bf16 %v1721, %v1717
          %v2071 = vpack.c.bf16 %v1729, %v1725
          %v2072 = vpack.c.bf16 %v1731, %v1727
          %v2073 = vpack.c.bf16 %v1739, %v1735
          %v2074 = vpack.c.bf16 %v1741, %v1737
          %v2075 = vpack.c.bf16 %v1749, %v1745
          %v2076 = vpack.c.bf16 %v1751, %v1747
          %v2077 = vpack.c.bf16 %v1759, %v1755
          %v2078 = vpack.c.bf16 %v1761, %v1757
          %v2079 = vpack.c.bf16 %v1973, %v1969
          %v2080 = vpack.c.bf16 %v1975, %v1971
          %v2081 = vpack.c.bf16 %v1983, %v1979
          %v2082 = vpack.c.bf16 %v1985, %v1981
          %v2083 = vpack.c.bf16 %v1993, %v1989
          %v2084 = vpack.c.bf16 %v1995, %v1991
          %v2085 = vpack.c.bf16 %v2003, %v1999
          %v2086 = vpack.c.bf16 %v2005, %v2001
          %v2087 = vpack.c.bf16 %v2013, %v2009
          %v2088 = vpack.c.bf16 %v2015, %v2011
          %v2089 = vpack.c.bf16 %v2023, %v2019
          %v2090 = vpack.c.bf16 %v2025, %v2021
          %v2091 = vpack.c.bf16 %v2033, %v2029
          %v2092 = vpack.c.bf16 %v2035, %v2031
          %v2093 = vpack.c.bf16 %v2043, %v2039
          %v2094 = vpack.c.bf16 %v2045, %v2041
          %2095 = vmatprep.subr.bf16.mxu0 0
          %2096 = vmatpush1.bf16.xpose.msra.mxu0 %v2063
          %2097 = vmatprep.subr.bf16.mxu0 0
          %2098 = vmatpush1.bf16.xpose.msra.mxu0 %v2065
          %2099 = vmatprep.subr.bf16.mxu0 0
          %2100 = vmatpush1.bf16.xpose.msra.mxu0 %v2067
          %2101 = vmatprep.subr.bf16.mxu0 0
          %2102 = vmatpush1.bf16.xpose.msra.mxu0 %v2069
          %2103 = vmatprep.subr.bf16.mxu0 0
          %2104 = vmatpush1.bf16.xpose.msra.mxu0 %v2071
          %2105 = vmatprep.subr.bf16.mxu0 0
          %2106 = vmatpush1.bf16.xpose.msra.mxu0 %v2073
          %2107 = vmatprep.subr.bf16.mxu0 0
          %2108 = vmatpush1.bf16.xpose.msra.mxu0 %v2075
          %2109 = vmatprep.subr.bf16.mxu0 0
          %2110 = vmatpush1.bf16.xpose.msra.mxu0 %v2077
          %2111 = vmatprep.subr.bf16.mxu0 0
          %2112 = vmatpush1.bf16.xpose.msra.mxu0 0
          %2113 = vmatprep.subr.bf16.mxu0 0
          %2114 = vmatpush1.bf16.xpose.msra.mxu0 0
          %2115 = vmatprep.subr.bf16.mxu0 0
          %2116 = vmatpush1.bf16.xpose.msra.mxu0 0
          %2117 = vmatprep.subr.bf16.mxu0 0
          %2118 = vmatpush1.bf16.xpose.msra.mxu0 0
          %2119 = vmatprep.subr.bf16.mxu0 0
          %2120 = vmatpush1.bf16.xpose.msra.mxu0 0
          %2121 = vmatprep.subr.bf16.mxu0 0
          %2122 = vmatpush1.bf16.xpose.msra.mxu0 0
          %2123 = vmatprep.subr.bf16.mxu0 0
          %2124 = vmatpush1.bf16.xpose.msra.mxu0 0
          %2125 = vmatprep.subr.bf16.mxu0 0
          %2126 = vmatpush1.bf16.xpose.msra.mxu0 0
          %2127 = vmatprep.mubr.bf16.mxu0 0
          %2128 = vmatmul.mubr.bf16.gmra.mrb[0].mxu0 %v2047
          %v2129 = vpop.f32.mrb[0].mxu0
          %v2130 = vadd.f32 0.0, %v2129
          %v2131 = vpop.f32.mrb[0].mxu0
          %v2132 = vpop.f32.mrb[0].mxu0
          %v2133 = vadd.f32 0.0, %v2132
          %v2134 = vpop.f32.mrb[0].mxu0
          %2135 = vmatprep.mubr.bf16.mxu0 0
          %2136 = vmatmul.mubr.bf16.gmra.mrb[0].mxu0 %v2049
          %v2137 = vpop.f32.mrb[0].mxu0
          %v2138 = vadd.f32 0.0, %v2137
          %v2139 = vpop.f32.mrb[0].mxu0
          %v2140 = vpop.f32.mrb[0].mxu0
          %v2141 = vadd.f32 0.0, %v2140
          %v2142 = vpop.f32.mrb[0].mxu0
          %2143 = vmatprep.mubr.bf16.mxu0 0
          %2144 = vmatmul.mubr.bf16.gmra.mrb[0].mxu0 %v2051
          %v2145 = vpop.f32.mrb[0].mxu0
          %v2146 = vadd.f32 0.0, %v2145
          %v2147 = vpop.f32.mrb[0].mxu0
          %v2148 = vpop.f32.mrb[0].mxu0
          %v2149 = vadd.f32 0.0, %v2148
          %v2150 = vpop.f32.mrb[0].mxu0
          %2151 = vmatprep.mubr.bf16.mxu0 0
          %2152 = vmatmul.mubr.bf16.gmra.mrb[0].mxu0 %v2053
          %v2153 = vpop.f32.mrb[0].mxu0
          %v2154 = vadd.f32 0.0, %v2153
          %v2155 = vpop.f32.mrb[0].mxu0
          %v2156 = vpop.f32.mrb[0].mxu0
          %v2157 = vadd.f32 0.0, %v2156
          %v2158 = vpop.f32.mrb[0].mxu0
          %2159 = vmatprep.mubr.bf16.mxu0 0
          %2160 = vmatmul.mubr.bf16.gmra.mrb[0].mxu0 %v2055
          %v2161 = vpop.f32.mrb[0].mxu0
          %v2162 = vadd.f32 0.0, %v2161
          %v2163 = vpop.f32.mrb[0].mxu0
          %v2164 = vpop.f32.mrb[0].mxu0
          %v2165 = vadd.f32 0.0, %v2164
          %v2166 = vpop.f32.mrb[0].mxu0
          %2167 = vmatprep.mubr.bf16.mxu0 0
          %2168 = vmatmul.mubr.bf16.gmra.mrb[0].mxu0 %v2057
          %v2169 = vpop.f32.mrb[0].mxu0
          %v2170 = vadd.f32 0.0, %v2169
          %v2171 = vpop.f32.mrb[0].mxu0
          %v2172 = vpop.f32.mrb[0].mxu0
          %v2173 = vadd.f32 0.0, %v2172
          %v2174 = vpop.f32.mrb[0].mxu0
          %2175 = vmatprep.mubr.bf16.mxu0 0
          %2176 = vmatmul.mubr.bf16.gmra.mrb[0].mxu0 %v2059
          %v2177 = vpop.f32.mrb[0].mxu0
          %v2178 = vadd.f32 0.0, %v2177
          %v2179 = vpop.f32.mrb[0].mxu0
          %v2180 = vpop.f32.mrb[0].mxu0
          %v2181 = vadd.f32 0.0, %v2180
          %v2182 = vpop.f32.mrb[0].mxu0
          %2183 = vmatprep.mubr.bf16.mxu0 0
          %2184 = vmatmul.mubr.bf16.gmra.mrb[0].mxu0 %v2061
          %v2185 = vpop.f32.mrb[0].mxu0
          %v2186 = vadd.f32 0.0, %v2185
          %v2187 = vpop.f32.mrb[0].mxu0
          %v2188 = vpop.f32.mrb[0].mxu0
          %v2189 = vadd.f32 0.0, %v2188
          %v2190 = vpop.f32.mrb[0].mxu0
          %2191 = vdwg.mxu0
          %v2192 = vmul.f32 %v2130, 0.088388346
          %v2193 = vmul.f32 %v2133, 0.088388346
          %v2194 = vmul.f32 %v2138, 0.088388346
          %v2195 = vmul.f32 %v2141, 0.088388346
          %v2196 = vmul.f32 %v2146, 0.088388346
          %v2197 = vmul.f32 %v2149, 0.088388346
          %v2198 = vmul.f32 %v2154, 0.088388346
          %v2199 = vmul.f32 %v2157, 0.088388346
          %v2200 = vmul.f32 %v2162, 0.088388346
          %v2201 = vmul.f32 %v2165, 0.088388346
          %v2202 = vmul.f32 %v2170, 0.088388346
          %v2203 = vmul.f32 %v2173, 0.088388346
          %v2204 = vmul.f32 %v2178, 0.088388346
          %v2205 = vmul.f32 %v2181, 0.088388346
          %v2206 = vmul.f32 %v2186, 0.088388346
          %v2207 = vmul.f32 %v2189, 0.088388346
          %v2209 = vlaneseq
          %v2210 = vshrl.u32 %v2209, 7
          %v2211 = vsub.s32 0, %v2210
          %v2212 = vrot.slane %v1140, %v2211
          %v2214 = vadd.f32 %v2192, %v2212
          %v2215 = vadd.f32 %v2193, %v2212
          %v2216 = vadd.f32 %v2194, %v2212
          %v2217 = vadd.f32 %v2195, %v2212
          %v2218 = vadd.f32 %v2196, %v2212
          %v2219 = vadd.f32 %v2197, %v2212
          %v2220 = vadd.f32 %v2198, %v2212
          %v2221 = vadd.f32 %v2199, %v2212
          %v2222 = vadd.f32 %v2200, %v2212
          %v2223 = vadd.f32 %v2201, %v2212
          %v2224 = vadd.f32 %v2202, %v2212
          %v2225 = vadd.f32 %v2203, %v2212
          %v2226 = vadd.f32 %v2204, %v2212
          %v2227 = vadd.f32 %v2205, %v2212
          %v2228 = vadd.f32 %v2206, %v2212
          %v2229 = vadd.f32 %v2207, %v2212
          %2230 = vmax.xlane.f32.xlu0 %v2214
          %v2231 = vpop.xlane.xlu0 %2230
          %2232 = vmax.xlane.f32.xlu0 %v2215
          %v2233 = vpop.xlane.xlu0 %2232
          %2234 = vmax.xlane.f32.xlu0 %v2216
          %v2235 = vpop.xlane.xlu0 %2234
          %2236 = vmax.xlane.f32.xlu0 %v2217
          %v2237 = vpop.xlane.xlu0 %2236
          %2238 = vmax.xlane.f32.xlu0 %v2218
          %v2239 = vpop.xlane.xlu0 %2238
          %2240 = vmax.xlane.f32.xlu0 %v2219
          %v2241 = vpop.xlane.xlu0 %2240
          %2242 = vmax.xlane.f32.xlu0 %v2220
          %v2243 = vpop.xlane.xlu0 %2242
          %2244 = vmax.xlane.f32.xlu0 %v2221
          %v2245 = vpop.xlane.xlu0 %2244
          %2246 = vmax.xlane.f32.xlu0 %v2222
          %v2247 = vpop.xlane.xlu0 %2246
          %2248 = vmax.xlane.f32.xlu0 %v2223
          %v2249 = vpop.xlane.xlu0 %2248
          %2250 = vmax.xlane.f32.xlu0 %v2224
          %v2251 = vpop.xlane.xlu0 %2250
          %2252 = vmax.xlane.f32.xlu0 %v2225
          %v2253 = vpop.xlane.xlu0 %2252
          %2254 = vmax.xlane.f32.xlu0 %v2226
          %v2255 = vpop.xlane.xlu0 %2254
          %2256 = vmax.xlane.f32.xlu0 %v2227
          %v2257 = vpop.xlane.xlu0 %2256
          %2258 = vmax.xlane.f32.xlu0 %v2228
          %v2259 = vpop.xlane.xlu0 %2258
          %2260 = vmax.xlane.f32.xlu0 %v2229
          %v2261 = vpop.xlane.xlu0 %2260
          %v2262 = vsub.f32 %v2214, %v2231
          %v2263 = vsub.f32 %v2215, %v2233
          %v2264 = vsub.f32 %v2216, %v2235
          %v2265 = vsub.f32 %v2217, %v2237
          %v2266 = vsub.f32 %v2218, %v2239
          %v2267 = vsub.f32 %v2219, %v2241
          %v2268 = vsub.f32 %v2220, %v2243
          %v2269 = vsub.f32 %v2221, %v2245
          %v2270 = vsub.f32 %v2222, %v2247
          %v2271 = vsub.f32 %v2223, %v2249
          %v2272 = vsub.f32 %v2224, %v2251
          %v2273 = vsub.f32 %v2225, %v2253
          %v2274 = vsub.f32 %v2226, %v2255
          %v2275 = vsub.f32 %v2227, %v2257
          %v2276 = vsub.f32 %v2228, %v2259
          %v2277 = vsub.f32 %v2229, %v2261
          %v2278 = vmul.f32 %v2262, 1.442695
          %v2279 = vpow.pop %v2278
          %v2280 = vmul.f32 %v2263, 1.442695
          %v2281 = vpow.pop %v2280
          %v2282 = vmul.f32 %v2264, 1.442695
          %v2283 = vpow.pop %v2282
          %v2284 = vmul.f32 %v2265, 1.442695
          %v2285 = vpow.pop %v2284
          %v2286 = vmul.f32 %v2266, 1.442695
          %v2287 = vpow.pop %v2286
          %v2288 = vmul.f32 %v2267, 1.442695
          %v2289 = vpow.pop %v2288
          %v2290 = vmul.f32 %v2268, 1.442695
          %v2291 = vpow.pop %v2290
          %v2292 = vmul.f32 %v2269, 1.442695
          %v2293 = vpow.pop %v2292
          %v2294 = vmul.f32 %v2270, 1.442695
          %v2295 = vpow.pop %v2294
          %v2296 = vmul.f32 %v2271, 1.442695
          %v2297 = vpow.pop %v2296
          %v2298 = vmul.f32 %v2272, 1.442695
          %v2299 = vpow.pop %v2298
          %v2300 = vmul.f32 %v2273, 1.442695
          %v2301 = vpow.pop %v2300
          %v2302 = vmul.f32 %v2274, 1.442695
          %v2303 = vpow.pop %v2302
          %v2304 = vmul.f32 %v2275, 1.442695
          %v2305 = vpow.pop %v2304
          %v2306 = vmul.f32 %v2276, 1.442695
          %v2307 = vpow.pop %v2306
          %v2308 = vmul.f32 %v2277, 1.442695
          %v2309 = vpow.pop %v2308
          %2310 = vadd.xlane.f32.xlu0 %v2279
          %v2311 = vpop.xlane.xlu0 %2310
          %2312 = vadd.xlane.f32.xlu0 %v2281
          %v2313 = vpop.xlane.xlu0 %2312
          %2314 = vadd.xlane.f32.xlu0 %v2283
          %v2315 = vpop.xlane.xlu0 %2314
          %2316 = vadd.xlane.f32.xlu0 %v2285
          %v2317 = vpop.xlane.xlu0 %2316
          %2318 = vadd.xlane.f32.xlu0 %v2287
          %v2319 = vpop.xlane.xlu0 %2318
          %2320 = vadd.xlane.f32.xlu0 %v2289
          %v2321 = vpop.xlane.xlu0 %2320
          %2322 = vadd.xlane.f32.xlu0 %v2291
          %v2323 = vpop.xlane.xlu0 %2322
          %2324 = vadd.xlane.f32.xlu0 %v2293
          %v2325 = vpop.xlane.xlu0 %2324
          %2326 = vadd.xlane.f32.xlu0 %v2295
          %v2327 = vpop.xlane.xlu0 %2326
          %2328 = vadd.xlane.f32.xlu0 %v2297
          %v2329 = vpop.xlane.xlu0 %2328
          %2330 = vadd.xlane.f32.xlu0 %v2299
          %v2331 = vpop.xlane.xlu0 %2330
          %2332 = vadd.xlane.f32.xlu0 %v2301
          %v2333 = vpop.xlane.xlu0 %2332
          %2334 = vadd.xlane.f32.xlu0 %v2303
          %v2335 = vpop.xlane.xlu0 %2334
          %2336 = vadd.xlane.f32.xlu0 %v2305
          %v2337 = vpop.xlane.xlu0 %2336
          %2338 = vadd.xlane.f32.xlu0 %v2307
          %v2339 = vpop.xlane.xlu0 %2338
          %2340 = vadd.xlane.f32.xlu0 %v2309
          %v2341 = vpop.xlane.xlu0 %2340
          %v2342 = vrcp.pop %v2311
          %v2343 = vrcp.pop %v2313
          %v2344 = vrcp.pop %v2315
          %v2345 = vrcp.pop %v2317
          %v2346 = vrcp.pop %v2319
          %v2347 = vrcp.pop %v2321
          %v2348 = vrcp.pop %v2323
          %v2349 = vrcp.pop %v2325
          %v2350 = vrcp.pop %v2327
          %v2351 = vrcp.pop %v2329
          %v2352 = vrcp.pop %v2331
          %v2353 = vrcp.pop %v2333
          %v2354 = vrcp.pop %v2335
          %v2355 = vrcp.pop %v2337
          %v2356 = vrcp.pop %v2339
          %v2357 = vrcp.pop %v2341
          %v2358 = vmul.f32 %v2279, %v2342
          %v2359 = vmul.f32 %v2281, %v2343
          %v2360 = vmul.f32 %v2283, %v2344
          %v2361 = vmul.f32 %v2285, %v2345
          %v2362 = vmul.f32 %v2287, %v2346
          %v2363 = vmul.f32 %v2289, %v2347
          %v2364 = vmul.f32 %v2291, %v2348
          %v2365 = vmul.f32 %v2293, %v2349
          %v2366 = vmul.f32 %v2295, %v2350
          %v2367 = vmul.f32 %v2297, %v2351
          %v2368 = vmul.f32 %v2299, %v2352
          %v2369 = vmul.f32 %v2301, %v2353
          %v2370 = vmul.f32 %v2303, %v2354
          %v2371 = vmul.f32 %v2305, %v2355
          %v2372 = vmul.f32 %v2307, %v2356
          %v2373 = vmul.f32 %v2309, %v2357
          %v2374 = vpack.c.bf16 %v2359, %v2358
          %v2375 = vpack.c.bf16 %v2361, %v2360
          %v2376 = vpack.c.bf16 %v2363, %v2362
          %v2377 = vpack.c.bf16 %v2365, %v2364
          %v2378 = vpack.c.bf16 %v2367, %v2366
          %v2379 = vpack.c.bf16 %v2369, %v2368
          %v2380 = vpack.c.bf16 %v2371, %v2370
          %v2381 = vpack.c.bf16 %v2373, %v2372
          %2382 = vmatprep.subr.bf16.mxu0 0
          %2383 = vmatpush1.bf16.msra.mxu0 %v2079
          %2384 = vmatprep.subr.bf16.mxu0 0
          %2385 = vmatpush1.bf16.msra.mxu0 %v2081
          %2386 = vmatprep.subr.bf16.mxu0 0
          %2387 = vmatpush1.bf16.msra.mxu0 %v2083
          %2388 = vmatprep.subr.bf16.mxu0 0
          %2389 = vmatpush1.bf16.msra.mxu0 %v2085
          %2390 = vmatprep.subr.bf16.mxu0 0
          %2391 = vmatpush1.bf16.msra.mxu0 %v2087
          %2392 = vmatprep.subr.bf16.mxu0 0
          %2393 = vmatpush1.bf16.msra.mxu0 %v2089
          %2394 = vmatprep.subr.bf16.mxu0 0
          %2395 = vmatpush1.bf16.msra.mxu0 %v2091
          %2396 = vmatprep.subr.bf16.mxu0 0
          %2397 = vmatpush1.bf16.msra.mxu0 %v2093
          %2398 = vmatprep.subr.bf16.mxu0 0
          %2399 = vmatpush1.bf16.msra.mxu0 0
          %2400 = vmatprep.subr.bf16.mxu0 0
          %2401 = vmatpush1.bf16.msra.mxu0 0
          %2402 = vmatprep.subr.bf16.mxu0 0
          %2403 = vmatpush1.bf16.msra.mxu0 0
          %2404 = vmatprep.subr.bf16.mxu0 0
          %2405 = vmatpush1.bf16.msra.mxu0 0
          %2406 = vmatprep.subr.bf16.mxu0 0
          %2407 = vmatpush1.bf16.msra.mxu0 0
          %2408 = vmatprep.subr.bf16.mxu0 0
          %2409 = vmatpush1.bf16.msra.mxu0 0
          %2410 = vmatprep.subr.bf16.mxu0 0
          %2411 = vmatpush1.bf16.msra.mxu0 0
          %2412 = vmatprep.subr.bf16.mxu0 0
          %2413 = vmatpush1.bf16.msra.mxu0 0
          %2414 = vmatprep.mubr.bf16.mxu0 0
          %2415 = vmatmul.mubr.bf16.gmra.mrb[0].mxu0 %v2374
          %v2416 = vpop.f32.mrb[0].mxu0
          %v2417 = vadd.f32 0.0, %v2416
          %v2418 = vpop.f32.mrb[0].mxu0
          %v2419 = vpop.f32.mrb[0].mxu0
          %v2420 = vadd.f32 0.0, %v2419
          %v2421 = vpop.f32.mrb[0].mxu0
          %2422 = vmatprep.mubr.bf16.mxu0 0
          %2423 = vmatmul.mubr.bf16.gmra.mrb[0].mxu0 %v2375
          %v2424 = vpop.f32.mrb[0].mxu0
          %v2425 = vadd.f32 0.0, %v2424
          %v2426 = vpop.f32.mrb[0].mxu0
          %v2427 = vpop.f32.mrb[0].mxu0
          %v2428 = vadd.f32 0.0, %v2427
          %v2429 = vpop.f32.mrb[0].mxu0
          %2430 = vmatprep.mubr.bf16.mxu0 0
          %2431 = vmatmul.mubr.bf16.gmra.mrb[0].mxu0 %v2376
          %v2432 = vpop.f32.mrb[0].mxu0
          %v2433 = vadd.f32 0.0, %v2432
          %v2434 = vpop.f32.mrb[0].mxu0
          %v2435 = vpop.f32.mrb[0].mxu0
          %v2436 = vadd.f32 0.0, %v2435
          %v2437 = vpop.f32.mrb[0].mxu0
          %2438 = vmatprep.mubr.bf16.mxu0 0
          %2439 = vmatmul.mubr.bf16.gmra.mrb[0].mxu0 %v2377
          %v2440 = vpop.f32.mrb[0].mxu0
          %v2441 = vadd.f32 0.0, %v2440
          %v2442 = vpop.f32.mrb[0].mxu0
          %v2443 = vpop.f32.mrb[0].mxu0
          %v2444 = vadd.f32 0.0, %v2443
          %v2445 = vpop.f32.mrb[0].mxu0
          %2446 = vmatprep.mubr.bf16.mxu0 0
          %2447 = vmatmul.mubr.bf16.gmra.mrb[0].mxu0 %v2378
          %v2448 = vpop.f32.mrb[0].mxu0
          %v2449 = vadd.f32 0.0, %v2448
          %v2450 = vpop.f32.mrb[0].mxu0
          %v2451 = vpop.f32.mrb[0].mxu0
          %v2452 = vadd.f32 0.0, %v2451
          %v2453 = vpop.f32.mrb[0].mxu0
          %2454 = vmatprep.mubr.bf16.mxu0 0
          %2455 = vmatmul.mubr.bf16.gmra.mrb[0].mxu0 %v2379
          %v2456 = vpop.f32.mrb[0].mxu0
          %v2457 = vadd.f32 0.0, %v2456
          %v2458 = vpop.f32.mrb[0].mxu0
          %v2459 = vpop.f32.mrb[0].mxu0
          %v2460 = vadd.f32 0.0, %v2459
          %v2461 = vpop.f32.mrb[0].mxu0
          %2462 = vmatprep.mubr.bf16.mxu0 0
          %2463 = vmatmul.mubr.bf16.gmra.mrb[0].mxu0 %v2380
          %v2464 = vpop.f32.mrb[0].mxu0
          %v2465 = vadd.f32 0.0, %v2464
          %v2466 = vpop.f32.mrb[0].mxu0
          %v2467 = vpop.f32.mrb[0].mxu0
          %v2468 = vadd.f32 0.0, %v2467
          %v2469 = vpop.f32.mrb[0].mxu0
          %2470 = vmatprep.mubr.bf16.mxu0 0
          %2471 = vmatmul.mubr.bf16.gmra.mrb[0].mxu0 %v2381
          %v2472 = vpop.f32.mrb[0].mxu0
          %v2473 = vadd.f32 0.0, %v2472
          %v2474 = vpop.f32.mrb[0].mxu0
          %v2475 = vpop.f32.mrb[0].mxu0
          %v2476 = vadd.f32 0.0, %v2475
          %v2477 = vpop.f32.mrb[0].mxu0
          %2478 = vdwg.mxu0
          %v2479 = vpack.c.bf16 %v2420, %v2417
          %v2480 = vpack.c.bf16 %v2428, %v2425
          %v2481 = vpack.c.bf16 %v2436, %v2433
          %v2482 = vpack.c.bf16 %v2444, %v2441
          %v2483 = vpack.c.bf16 %v2452, %v2449
          %v2484 = vpack.c.bf16 %v2460, %v2457
          %v2485 = vpack.c.bf16 %v2468, %v2465
          %v2486 = vpack.c.bf16 %v2476, %v2473
          %2487 = vmatprep.subr.bf16.mxu0 0
          %2488 = vmatpush1.bf16.xpose.msra.mxu0 %v2064
          %2489 = vmatprep.subr.bf16.mxu0 0
          %2490 = vmatpush1.bf16.xpose.msra.mxu0 %v2066
          %2491 = vmatprep.subr.bf16.mxu0 0
          %2492 = vmatpush1.bf16.xpose.msra.mxu0 %v2068
          %2493 = vmatprep.subr.bf16.mxu0 0
          %2494 = vmatpush1.bf16.xpose.msra.mxu0 %v2070
          %2495 = vmatprep.subr.bf16.mxu0 0
          %2496 = vmatpush1.bf16.xpose.msra.mxu0 %v2072
          %2497 = vmatprep.subr.bf16.mxu0 0
          %2498 = vmatpush1.bf16.xpose.msra.mxu0 %v2074
          %2499 = vmatprep.subr.bf16.mxu0 0
          %2500 = vmatpush1.bf16.xpose.msra.mxu0 %v2076
          %2501 = vmatprep.subr.bf16.mxu0 0
          %2502 = vmatpush1.bf16.xpose.msra.mxu0 %v2078
          %2503 = vmatprep.subr.bf16.mxu0 0
          %2504 = vmatpush1.bf16.xpose.msra.mxu0 0
          %2505 = vmatprep.subr.bf16.mxu0 0
          %2506 = vmatpush1.bf16.xpose.msra.mxu0 0
          %2507 = vmatprep.subr.bf16.mxu0 0
          %2508 = vmatpush1.bf16.xpose.msra.mxu0 0
          %2509 = vmatprep.subr.bf16.mxu0 0
          %2510 = vmatpush1.bf16.xpose.msra.mxu0 0
          %2511 = vmatprep.subr.bf16.mxu0 0
          %2512 = vmatpush1.bf16.xpose.msra.mxu0 0
          %2513 = vmatprep.subr.bf16.mxu0 0
          %2514 = vmatpush1.bf16.xpose.msra.mxu0 0
          %2515 = vmatprep.subr.bf16.mxu0 0
          %2516 = vmatpush1.bf16.xpose.msra.mxu0 0
          %2517 = vmatprep.subr.bf16.mxu0 0
          %2518 = vmatpush1.bf16.xpose.msra.mxu0 0
          %2519 = vmatprep.mubr.bf16.mxu0 0
          %2520 = vmatmul.mubr.bf16.gmra.mrb[0].mxu0 %v2048
          %v2521 = vpop.f32.mrb[0].mxu0
          %v2522 = vadd.f32 0.0, %v2521
          %v2523 = vpop.f32.mrb[0].mxu0
          %v2524 = vpop.f32.mrb[0].mxu0
          %v2525 = vadd.f32 0.0, %v2524
          %v2526 = vpop.f32.mrb[0].mxu0
          %2527 = vmatprep.mubr.bf16.mxu0 0
          %2528 = vmatmul.mubr.bf16.gmra.mrb[0].mxu0 %v2050
          %v2529 = vpop.f32.mrb[0].mxu0
          %v2530 = vadd.f32 0.0, %v2529
          %v2531 = vpop.f32.mrb[0].mxu0
          %v2532 = vpop.f32.mrb[0].mxu0
          %v2533 = vadd.f32 0.0, %v2532
          %v2534 = vpop.f32.mrb[0].mxu0
          %2535 = vmatprep.mubr.bf16.mxu0 0
          %2536 = vmatmul.mubr.bf16.gmra.mrb[0].mxu0 %v2052
          %v2537 = vpop.f32.mrb[0].mxu0
          %v2538 = vadd.f32 0.0, %v2537
          %v2539 = vpop.f32.mrb[0].mxu0
          %v2540 = vpop.f32.mrb[0].mxu0
          %v2541 = vadd.f32 0.0, %v2540
          %v2542 = vpop.f32.mrb[0].mxu0
          %2543 = vmatprep.mubr.bf16.mxu0 0
          %2544 = vmatmul.mubr.bf16.gmra.mrb[0].mxu0 %v2054
          %v2545 = vpop.f32.mrb[0].mxu0
          %v2546 = vadd.f32 0.0, %v2545
          %v2547 = vpop.f32.mrb[0].mxu0
          %v2548 = vpop.f32.mrb[0].mxu0
          %v2549 = vadd.f32 0.0, %v2548
          %v2550 = vpop.f32.mrb[0].mxu0
          %2551 = vmatprep.mubr.bf16.mxu0 0
          %2552 = vmatmul.mubr.bf16.gmra.mrb[0].mxu0 %v2056
          %v2553 = vpop.f32.mrb[0].mxu0
          %v2554 = vadd.f32 0.0, %v2553
          %v2555 = vpop.f32.mrb[0].mxu0
          %v2556 = vpop.f32.mrb[0].mxu0
          %v2557 = vadd.f32 0.0, %v2556
          %v2558 = vpop.f32.mrb[0].mxu0
          %2559 = vmatprep.mubr.bf16.mxu0 0
          %2560 = vmatmul.mubr.bf16.gmra.mrb[0].mxu0 %v2058
          %v2561 = vpop.f32.mrb[0].mxu0
          %v2562 = vadd.f32 0.0, %v2561
          %v2563 = vpop.f32.mrb[0].mxu0
          %v2564 = vpop.f32.mrb[0].mxu0
          %v2565 = vadd.f32 0.0, %v2564
          %v2566 = vpop.f32.mrb[0].mxu0
          %2567 = vmatprep.mubr.bf16.mxu0 0
          %2568 = vmatmul.mubr.bf16.gmra.mrb[0].mxu0 %v2060
          %v2569 = vpop.f32.mrb[0].mxu0
          %v2570 = vadd.f32 0.0, %v2569
          %v2571 = vpop.f32.mrb[0].mxu0
          %v2572 = vpop.f32.mrb[0].mxu0
          %v2573 = vadd.f32 0.0, %v2572
          %v2574 = vpop.f32.mrb[0].mxu0
          %2575 = vmatprep.mubr.bf16.mxu0 0
          %2576 = vmatmul.mubr.bf16.gmra.mrb[0].mxu0 %v2062
          %v2577 = vpop.f32.mrb[0].mxu0
          %v2578 = vadd.f32 0.0, %v2577
          %v2579 = vpop.f32.mrb[0].mxu0
          %v2580 = vpop.f32.mrb[0].mxu0
          %v2581 = vadd.f32 0.0, %v2580
          %v2582 = vpop.f32.mrb[0].mxu0
          %2583 = vdwg.mxu0
          %v2584 = vmul.f32 %v2522, 0.088388346
          %v2585 = vmul.f32 %v2525, 0.088388346
          %v2586 = vmul.f32 %v2530, 0.088388346
          %v2587 = vmul.f32 %v2533, 0.088388346
          %v2588 = vmul.f32 %v2538, 0.088388346
          %v2589 = vmul.f32 %v2541, 0.088388346
          %v2590 = vmul.f32 %v2546, 0.088388346
          %v2591 = vmul.f32 %v2549, 0.088388346
          %v2592 = vmul.f32 %v2554, 0.088388346
          %v2593 = vmul.f32 %v2557, 0.088388346
          %v2594 = vmul.f32 %v2562, 0.088388346
          %v2595 = vmul.f32 %v2565, 0.088388346
          %v2596 = vmul.f32 %v2570, 0.088388346
          %v2597 = vmul.f32 %v2573, 0.088388346
          %v2598 = vmul.f32 %v2578, 0.088388346
          %v2599 = vmul.f32 %v2581, 0.088388346
          %v2600 = vadd.f32 %v2584, %v2212
          %v2601 = vadd.f32 %v2585, %v2212
          %v2602 = vadd.f32 %v2586, %v2212
          %v2603 = vadd.f32 %v2587, %v2212
          %v2604 = vadd.f32 %v2588, %v2212
          %v2605 = vadd.f32 %v2589, %v2212
          %v2606 = vadd.f32 %v2590, %v2212
          %v2607 = vadd.f32 %v2591, %v2212
          %v2608 = vadd.f32 %v2592, %v2212
          %v2609 = vadd.f32 %v2593, %v2212
          %v2610 = vadd.f32 %v2594, %v2212
          %v2611 = vadd.f32 %v2595, %v2212
          %v2612 = vadd.f32 %v2596, %v2212
          %v2613 = vadd.f32 %v2597, %v2212
          %v2614 = vadd.f32 %v2598, %v2212
          %v2615 = vadd.f32 %v2599, %v2212
          %2616 = vmax.xlane.f32.xlu0 %v2600
          %v2617 = vpop.xlane.xlu0 %2616
          %2618 = vmax.xlane.f32.xlu0 %v2601
          %v2619 = vpop.xlane.xlu0 %2618
          %2620 = vmax.xlane.f32.xlu0 %v2602
          %v2621 = vpop.xlane.xlu0 %2620
          %2622 = vmax.xlane.f32.xlu0 %v2603
          %v2623 = vpop.xlane.xlu0 %2622
          %2624 = vmax.xlane.f32.xlu0 %v2604
          %v2625 = vpop.xlane.xlu0 %2624
          %2626 = vmax.xlane.f32.xlu0 %v2605
          %v2627 = vpop.xlane.xlu0 %2626
          %2628 = vmax.xlane.f32.xlu0 %v2606
          %v2629 = vpop.xlane.xlu0 %2628
          %2630 = vmax.xlane.f32.xlu0 %v2607
          %v2631 = vpop.xlane.xlu0 %2630
          %2632 = vmax.xlane.f32.xlu0 %v2608
          %v2633 = vpop.xlane.xlu0 %2632
          %2634 = vmax.xlane.f32.xlu0 %v2609
          %v2635 = vpop.xlane.xlu0 %2634
          %2636 = vmax.xlane.f32.xlu0 %v2610
          %v2637 = vpop.xlane.xlu0 %2636
          %2638 = vmax.xlane.f32.xlu0 %v2611
          %v2639 = vpop.xlane.xlu0 %2638
          %2640 = vmax.xlane.f32.xlu0 %v2612
          %v2641 = vpop.xlane.xlu0 %2640
          %2642 = vmax.xlane.f32.xlu0 %v2613
          %v2643 = vpop.xlane.xlu0 %2642
          %2644 = vmax.xlane.f32.xlu0 %v2614
          %v2645 = vpop.xlane.xlu0 %2644
          %2646 = vmax.xlane.f32.xlu0 %v2615
          %v2647 = vpop.xlane.xlu0 %2646
          %v2648 = vsub.f32 %v2600, %v2617
          %v2649 = vsub.f32 %v2601, %v2619
          %v2650 = vsub.f32 %v2602, %v2621
          %v2651 = vsub.f32 %v2603, %v2623
          %v2652 = vsub.f32 %v2604, %v2625
          %v2653 = vsub.f32 %v2605, %v2627
          %v2654 = vsub.f32 %v2606, %v2629
          %v2655 = vsub.f32 %v2607, %v2631
          %v2656 = vsub.f32 %v2608, %v2633
          %v2657 = vsub.f32 %v2609, %v2635
          %v2658 = vsub.f32 %v2610, %v2637
          %v2659 = vsub.f32 %v2611, %v2639
          %v2660 = vsub.f32 %v2612, %v2641
          %v2661 = vsub.f32 %v2613, %v2643
          %v2662 = vsub.f32 %v2614, %v2645
          %v2663 = vsub.f32 %v2615, %v2647
          %v2664 = vmul.f32 %v2648, 1.442695
          %v2665 = vpow.pop %v2664
          %v2666 = vmul.f32 %v2649, 1.442695
          %v2667 = vpow.pop %v2666
          %v2668 = vmul.f32 %v2650, 1.442695
          %v2669 = vpow.pop %v2668
          %v2670 = vmul.f32 %v2651, 1.442695
          %v2671 = vpow.pop %v2670
          %v2672 = vmul.f32 %v2652, 1.442695
          %v2673 = vpow.pop %v2672
          %v2674 = vmul.f32 %v2653, 1.442695
          %v2675 = vpow.pop %v2674
          %v2676 = vmul.f32 %v2654, 1.442695
          %v2677 = vpow.pop %v2676
          %v2678 = vmul.f32 %v2655, 1.442695
          %v2679 = vpow.pop %v2678
          %v2680 = vmul.f32 %v2656, 1.442695
          %v2681 = vpow.pop %v2680
          %v2682 = vmul.f32 %v2657, 1.442695
          %v2683 = vpow.pop %v2682
          %v2684 = vmul.f32 %v2658, 1.442695
          %v2685 = vpow.pop %v2684
          %v2686 = vmul.f32 %v2659, 1.442695
          %v2687 = vpow.pop %v2686
          %v2688 = vmul.f32 %v2660, 1.442695
          %v2689 = vpow.pop %v2688
          %v2690 = vmul.f32 %v2661, 1.442695
          %v2691 = vpow.pop %v2690
          %v2692 = vmul.f32 %v2662, 1.442695
          %v2693 = vpow.pop %v2692
          %v2694 = vmul.f32 %v2663, 1.442695
          %v2695 = vpow.pop %v2694
          %2696 = vadd.xlane.f32.xlu0 %v2665
          %v2697 = vpop.xlane.xlu0 %2696
          %2698 = vadd.xlane.f32.xlu0 %v2667
          %v2699 = vpop.xlane.xlu0 %2698
          %2700 = vadd.xlane.f32.xlu0 %v2669
          %v2701 = vpop.xlane.xlu0 %2700
          %2702 = vadd.xlane.f32.xlu0 %v2671
          %v2703 = vpop.xlane.xlu0 %2702
          %2704 = vadd.xlane.f32.xlu0 %v2673
          %v2705 = vpop.xlane.xlu0 %2704
          %2706 = vadd.xlane.f32.xlu0 %v2675
          %v2707 = vpop.xlane.xlu0 %2706
          %2708 = vadd.xlane.f32.xlu0 %v2677
          %v2709 = vpop.xlane.xlu0 %2708
          %2710 = vadd.xlane.f32.xlu0 %v2679
          %v2711 = vpop.xlane.xlu0 %2710
          %2712 = vadd.xlane.f32.xlu0 %v2681
          %v2713 = vpop.xlane.xlu0 %2712
          %2714 = vadd.xlane.f32.xlu0 %v2683
          %v2715 = vpop.xlane.xlu0 %2714
          %2716 = vadd.xlane.f32.xlu0 %v2685
          %v2717 = vpop.xlane.xlu0 %2716
          %2718 = vadd.xlane.f32.xlu0 %v2687
          %v2719 = vpop.xlane.xlu0 %2718
          %2720 = vadd.xlane.f32.xlu0 %v2689
          %v2721 = vpop.xlane.xlu0 %2720
          %2722 = vadd.xlane.f32.xlu0 %v2691
          %v2723 = vpop.xlane.xlu0 %2722
          %2724 = vadd.xlane.f32.xlu0 %v2693
          %v2725 = vpop.xlane.xlu0 %2724
          %2726 = vadd.xlane.f32.xlu0 %v2695
          %v2727 = vpop.xlane.xlu0 %2726
          %v2728 = vrcp.pop %v2697
          %v2729 = vrcp.pop %v2699
          %v2730 = vrcp.pop %v2701
          %v2731 = vrcp.pop %v2703
          %v2732 = vrcp.pop %v2705
          %v2733 = vrcp.pop %v2707
          %v2734 = vrcp.pop %v2709
          %v2735 = vrcp.pop %v2711
          %v2736 = vrcp.pop %v2713
          %v2737 = vrcp.pop %v2715
          %v2738 = vrcp.pop %v2717
          %v2739 = vrcp.pop %v2719
          %v2740 = vrcp.pop %v2721
          %v2741 = vrcp.pop %v2723
          %v2742 = vrcp.pop %v2725
          %v2743 = vrcp.pop %v2727
          %v2744 = vmul.f32 %v2665, %v2728
          %v2745 = vmul.f32 %v2667, %v2729
          %v2746 = vmul.f32 %v2669, %v2730
          %v2747 = vmul.f32 %v2671, %v2731
          %v2748 = vmul.f32 %v2673, %v2732
          %v2749 = vmul.f32 %v2675, %v2733
          %v2750 = vmul.f32 %v2677, %v2734
          %v2751 = vmul.f32 %v2679, %v2735
          %v2752 = vmul.f32 %v2681, %v2736
          %v2753 = vmul.f32 %v2683, %v2737
          %v2754 = vmul.f32 %v2685, %v2738
          %v2755 = vmul.f32 %v2687, %v2739
          %v2756 = vmul.f32 %v2689, %v2740
          %v2757 = vmul.f32 %v2691, %v2741
          %v2758 = vmul.f32 %v2693, %v2742
          %v2759 = vmul.f32 %v2695, %v2743
          %v2760 = vpack.c.bf16 %v2745, %v2744
          %v2761 = vpack.c.bf16 %v2747, %v2746
          %v2762 = vpack.c.bf16 %v2749, %v2748
          %v2763 = vpack.c.bf16 %v2751, %v2750
          %v2764 = vpack.c.bf16 %v2753, %v2752
          %v2765 = vpack.c.bf16 %v2755, %v2754
          %v2766 = vpack.c.bf16 %v2757, %v2756
          %v2767 = vpack.c.bf16 %v2759, %v2758
          %2768 = vmatprep.subr.bf16.mxu0 0
          %2769 = vmatpush1.bf16.msra.mxu0 %v2080
          %2770 = vmatprep.subr.bf16.mxu0 0
          %2771 = vmatpush1.bf16.msra.mxu0 %v2082
          %2772 = vmatprep.subr.bf16.mxu0 0
          %2773 = vmatpush1.bf16.msra.mxu0 %v2084
          %2774 = vmatprep.subr.bf16.mxu0 0
          %2775 = vmatpush1.bf16.msra.mxu0 %v2086
          %2776 = vmatprep.subr.bf16.mxu0 0
          %2777 = vmatpush1.bf16.msra.mxu0 %v2088
          %2778 = vmatprep.subr.bf16.mxu0 0
          %2779 = vmatpush1.bf16.msra.mxu0 %v2090
          %2780 = vmatprep.subr.bf16.mxu0 0
          %2781 = vmatpush1.bf16.msra.mxu0 %v2092
          %2782 = vmatprep.subr.bf16.mxu0 0
          %2783 = vmatpush1.bf16.msra.mxu0 %v2094
          %2784 = vmatprep.subr.bf16.mxu0 0
          %2785 = vmatpush1.bf16.msra.mxu0 0
          %2786 = vmatprep.subr.bf16.mxu0 0
          %2787 = vmatpush1.bf16.msra.mxu0 0
          %2788 = vmatprep.subr.bf16.mxu0 0
          %2789 = vmatpush1.bf16.msra.mxu0 0
          %2790 = vmatprep.subr.bf16.mxu0 0
          %2791 = vmatpush1.bf16.msra.mxu0 0
          %2792 = vmatprep.subr.bf16.mxu0 0
          %2793 = vmatpush1.bf16.msra.mxu0 0
          %2794 = vmatprep.subr.bf16.mxu0 0
          %2795 = vmatpush1.bf16.msra.mxu0 0
          %2796 = vmatprep.subr.bf16.mxu0 0
          %2797 = vmatpush1.bf16.msra.mxu0 0
          %2798 = vmatprep.subr.bf16.mxu0 0
          %2799 = vmatpush1.bf16.msra.mxu0 0
          %2800 = vmatprep.mubr.bf16.mxu0 0
          %2801 = vmatmul.mubr.bf16.gmra.mrb[0].mxu0 %v2760
          %v2802 = vpop.f32.mrb[0].mxu0
          %v2803 = vadd.f32 0.0, %v2802
          %v2804 = vpop.f32.mrb[0].mxu0
          %v2805 = vpop.f32.mrb[0].mxu0
          %v2806 = vadd.f32 0.0, %v2805
          %v2807 = vpop.f32.mrb[0].mxu0
          %2808 = vmatprep.mubr.bf16.mxu0 0
          %2809 = vmatmul.mubr.bf16.gmra.mrb[0].mxu0 %v2761
          %v2810 = vpop.f32.mrb[0].mxu0
          %v2811 = vadd.f32 0.0, %v2810
          %v2812 = vpop.f32.mrb[0].mxu0
          %v2813 = vpop.f32.mrb[0].mxu0
          %v2814 = vadd.f32 0.0, %v2813
          %v2815 = vpop.f32.mrb[0].mxu0
          %2816 = vmatprep.mubr.bf16.mxu0 0
          %2817 = vmatmul.mubr.bf16.gmra.mrb[0].mxu0 %v2762
          %v2818 = vpop.f32.mrb[0].mxu0
          %v2819 = vadd.f32 0.0, %v2818
          %v2820 = vpop.f32.mrb[0].mxu0
          %v2821 = vpop.f32.mrb[0].mxu0
          %v2822 = vadd.f32 0.0, %v2821
          %v2823 = vpop.f32.mrb[0].mxu0
          %2824 = vmatprep.mubr.bf16.mxu0 0
          %2825 = vmatmul.mubr.bf16.gmra.mrb[0].mxu0 %v2763
          %v2826 = vpop.f32.mrb[0].mxu0
          %v2827 = vadd.f32 0.0, %v2826
          %v2828 = vpop.f32.mrb[0].mxu0
          %v2829 = vpop.f32.mrb[0].mxu0
          %v2830 = vadd.f32 0.0, %v2829
          %v2831 = vpop.f32.mrb[0].mxu0
          %2832 = vmatprep.mubr.bf16.mxu0 0
          %2833 = vmatmul.mubr.bf16.gmra.mrb[0].mxu0 %v2764
          %v2834 = vpop.f32.mrb[0].mxu0
          %v2835 = vadd.f32 0.0, %v2834
          %v2836 = vpop.f32.mrb[0].mxu0
          %v2837 = vpop.f32.mrb[0].mxu0
          %v2838 = vadd.f32 0.0, %v2837
          %v2839 = vpop.f32.mrb[0].mxu0
          %2840 = vmatprep.mubr.bf16.mxu0 0
          %2841 = vmatmul.mubr.bf16.gmra.mrb[0].mxu0 %v2765
          %v2842 = vpop.f32.mrb[0].mxu0
          %v2843 = vadd.f32 0.0, %v2842
          %v2844 = vpop.f32.mrb[0].mxu0
          %v2845 = vpop.f32.mrb[0].mxu0
          %v2846 = vadd.f32 0.0, %v2845
          %v2847 = vpop.f32.mrb[0].mxu0
          %2848 = vmatprep.mubr.bf16.mxu0 0
          %2849 = vmatmul.mubr.bf16.gmra.mrb[0].mxu0 %v2766
          %v2850 = vpop.f32.mrb[0].mxu0
          %v2851 = vadd.f32 0.0, %v2850
          %v2852 = vpop.f32.mrb[0].mxu0
          %v2853 = vpop.f32.mrb[0].mxu0
          %v2854 = vadd.f32 0.0, %v2853
          %v2855 = vpop.f32.mrb[0].mxu0
          %2856 = vmatprep.mubr.bf16.mxu0 0
          %2857 = vmatmul.mubr.bf16.gmra.mrb[0].mxu0 %v2767
          %v2858 = vpop.f32.mrb[0].mxu0
          %v2859 = vadd.f32 0.0, %v2858
          %v2860 = vpop.f32.mrb[0].mxu0
          %v2861 = vpop.f32.mrb[0].mxu0
          %v2862 = vadd.f32 0.0, %v2861
          %v2863 = vpop.f32.mrb[0].mxu0
          %2864 = vdwg.mxu0
          %v2865 = vpack.c.bf16 %v2806, %v2803
          %v2866 = vpack.c.bf16 %v2814, %v2811
          %v2867 = vpack.c.bf16 %v2822, %v2819
          %v2868 = vpack.c.bf16 %v2830, %v2827
          %v2869 = vpack.c.bf16 %v2838, %v2835
          %v2870 = vpack.c.bf16 %v2846, %v2843
          %v2871 = vpack.c.bf16 %v2854, %v2851
          %v2872 = vpack.c.bf16 %v2862, %v2859
          %v2889 = vunpack.c.l.b16 %v953
          %v2890 = vunpack.c.h.b16 %v953
          %v2891 = vunpack.c.l.b16 %v954
          %v2892 = vunpack.c.h.b16 %v954
          %v2893 = vunpack.c.l.b16 %v955
          %v2894 = vunpack.c.h.b16 %v955
          %v2895 = vunpack.c.l.b16 %v956
          %v2896 = vunpack.c.h.b16 %v956
          %v2897 = vunpack.c.l.b16 %v957
          %v2898 = vunpack.c.h.b16 %v957
          %v2899 = vunpack.c.l.b16 %v958
          %v2900 = vunpack.c.h.b16 %v958
          %v2901 = vunpack.c.l.b16 %v959
          %v2902 = vunpack.c.h.b16 %v959
          %v2903 = vunpack.c.l.b16 %v960
          %v2904 = vunpack.c.h.b16 %v960
          %v2905 = vunpack.c.l.b16 %v961
          %v2906 = vunpack.c.h.b16 %v961
          %v2907 = vunpack.c.l.b16 %v962
          %v2908 = vunpack.c.h.b16 %v962
          %v2909 = vunpack.c.l.b16 %v963
          %v2910 = vunpack.c.h.b16 %v963
          %v2911 = vunpack.c.l.b16 %v964
          %v2912 = vunpack.c.h.b16 %v964
          %v2913 = vunpack.c.l.b16 %v965
          %v2914 = vunpack.c.h.b16 %v965
          %v2915 = vunpack.c.l.b16 %v966
          %v2916 = vunpack.c.h.b16 %v966
          %v2917 = vunpack.c.l.b16 %v967
          %v2918 = vunpack.c.h.b16 %v967
          %v2919 = vunpack.c.l.b16 %v968
          %v2920 = vunpack.c.h.b16 %v968
          %v2921 = vpack.c.b16 %v2891, %v2889
          %v2922 = vpack.c.b16 %v2892, %v2890
          %v2923 = vpack.c.b16 %v2895, %v2893
          %v2924 = vpack.c.b16 %v2896, %v2894
          %v2925 = vpack.c.b16 %v2899, %v2897
          %v2926 = vpack.c.b16 %v2900, %v2898
          %v2927 = vpack.c.b16 %v2903, %v2901
          %v2928 = vpack.c.b16 %v2904, %v2902
          %v2929 = vpack.c.b16 %v2907, %v2905
          %v2930 = vpack.c.b16 %v2908, %v2906
          %v2931 = vpack.c.b16 %v2911, %v2909
          %v2932 = vpack.c.b16 %v2912, %v2910
          %v2933 = vpack.c.b16 %v2915, %v2913
          %v2934 = vpack.c.b16 %v2916, %v2914
          %v2935 = vpack.c.b16 %v2919, %v2917
          %v2936 = vpack.c.b16 %v2920, %v2918
          %2953 = vmatprep.subr.bf16.mxu0 %v2922
          %2954 = vmatpush1.bf16.msra.mxu0 %v2921
          %2955 = vmatprep.subr.bf16.mxu0 %v2924
          %2956 = vmatpush1.bf16.msra.mxu0 %v2923
          %2957 = vmatprep.subr.bf16.mxu0 %v2926
          %2958 = vmatpush1.bf16.msra.mxu0 %v2925
          %2959 = vmatprep.subr.bf16.mxu0 %v2928
          %2960 = vmatpush1.bf16.msra.mxu0 %v2927
          %2961 = vmatprep.subr.bf16.mxu0 %v2930
          %2962 = vmatpush1.bf16.msra.mxu0 %v2929
          %2963 = vmatprep.subr.bf16.mxu0 %v2932
          %2964 = vmatpush1.bf16.msra.mxu0 %v2931
          %2965 = vmatprep.subr.bf16.mxu0 %v2934
          %2966 = vmatpush1.bf16.msra.mxu0 %v2933
          %2967 = vmatprep.subr.bf16.mxu0 %v2936
          %2968 = vmatpush1.bf16.msra.mxu0 %v2935
          %2969 = vmatprep.subr.bf16.mxu0 0
          %2970 = vmatpush1.bf16.msra.mxu0 0
          %2971 = vmatprep.subr.bf16.mxu0 0
          %2972 = vmatpush1.bf16.msra.mxu0 0
          %2973 = vmatprep.subr.bf16.mxu0 0
          %2974 = vmatpush1.bf16.msra.mxu0 0
          %2975 = vmatprep.subr.bf16.mxu0 0
          %2976 = vmatpush1.bf16.msra.mxu0 0
          %2977 = vmatprep.subr.bf16.mxu0 0
          %2978 = vmatpush1.bf16.msra.mxu0 0
          %2979 = vmatprep.subr.bf16.mxu0 0
          %2980 = vmatpush1.bf16.msra.mxu0 0
          %2981 = vmatprep.subr.bf16.mxu0 0
          %2982 = vmatpush1.bf16.msra.mxu0 0
          %2983 = vmatprep.subr.bf16.mxu0 0
          %2984 = vmatpush1.bf16.msra.mxu0 0
          %2985 = vmatprep.mubr.bf16.mxu0 0
          %2986 = vmatmul.mubr.bf16.gmra.mrb[0].mxu0 %v2865
          %v2987 = vpop.f32.mrb[0].mxu0
          %v2988 = vadd.f32 0.0, %v2987
          %v2989 = vpop.f32.mrb[0].mxu0
          %v2990 = vadd.f32 0.0, %v2989
          %v2991 = vpop.f32.mrb[0].mxu0
          %v2992 = vadd.f32 0.0, %v2991
          %v2993 = vpop.f32.mrb[0].mxu0
          %v2994 = vadd.f32 0.0, %v2993
          %2995 = vmatprep.mubr.bf16.mxu0 0
          %2996 = vmatmul.mubr.bf16.gmra.mrb[0].mxu0 %v2866
          %v2997 = vpop.f32.mrb[0].mxu0
          %v2998 = vadd.f32 0.0, %v2997
          %v2999 = vpop.f32.mrb[0].mxu0
          %v3000 = vadd.f32 0.0, %v2999
          %v3001 = vpop.f32.mrb[0].mxu0
          %v3002 = vadd.f32 0.0, %v3001
          %v3003 = vpop.f32.mrb[0].mxu0
          %v3004 = vadd.f32 0.0, %v3003
          %3005 = vmatprep.mubr.bf16.mxu0 0
          %3006 = vmatmul.mubr.bf16.gmra.mrb[0].mxu0 %v2867
          %v3007 = vpop.f32.mrb[0].mxu0
          %v3008 = vadd.f32 0.0, %v3007
          %v3009 = vpop.f32.mrb[0].mxu0
          %v3010 = vadd.f32 0.0, %v3009
          %v3011 = vpop.f32.mrb[0].mxu0
          %v3012 = vadd.f32 0.0, %v3011
          %v3013 = vpop.f32.mrb[0].mxu0
          %v3014 = vadd.f32 0.0, %v3013
          %3015 = vmatprep.mubr.bf16.mxu0 0
          %3016 = vmatmul.mubr.bf16.gmra.mrb[0].mxu0 %v2868
          %v3017 = vpop.f32.mrb[0].mxu0
          %v3018 = vadd.f32 0.0, %v3017
          %v3019 = vpop.f32.mrb[0].mxu0
          %v3020 = vadd.f32 0.0, %v3019
          %v3021 = vpop.f32.mrb[0].mxu0
          %v3022 = vadd.f32 0.0, %v3021
          %v3023 = vpop.f32.mrb[0].mxu0
          %v3024 = vadd.f32 0.0, %v3023
          %3025 = vmatprep.mubr.bf16.mxu0 0
          %3026 = vmatmul.mubr.bf16.gmra.mrb[0].mxu0 %v2869
          %v3027 = vpop.f32.mrb[0].mxu0
          %v3028 = vadd.f32 0.0, %v3027
          %v3029 = vpop.f32.mrb[0].mxu0
          %v3030 = vadd.f32 0.0, %v3029
          %v3031 = vpop.f32.mrb[0].mxu0
          %v3032 = vadd.f32 0.0, %v3031
          %v3033 = vpop.f32.mrb[0].mxu0
          %v3034 = vadd.f32 0.0, %v3033
          %3035 = vmatprep.mubr.bf16.mxu0 0
          %3036 = vmatmul.mubr.bf16.gmra.mrb[0].mxu0 %v2870
          %v3037 = vpop.f32.mrb[0].mxu0
          %v3038 = vadd.f32 0.0, %v3037
          %v3039 = vpop.f32.mrb[0].mxu0
          %v3040 = vadd.f32 0.0, %v3039
          %v3041 = vpop.f32.mrb[0].mxu0
          %v3042 = vadd.f32 0.0, %v3041
          %v3043 = vpop.f32.mrb[0].mxu0
          %v3044 = vadd.f32 0.0, %v3043
          %3045 = vmatprep.mubr.bf16.mxu0 0
          %3046 = vmatmul.mubr.bf16.gmra.mrb[0].mxu0 %v2871
          %v3047 = vpop.f32.mrb[0].mxu0
          %v3048 = vadd.f32 0.0, %v3047
          %v3049 = vpop.f32.mrb[0].mxu0
          %v3050 = vadd.f32 0.0, %v3049
          %v3051 = vpop.f32.mrb[0].mxu0
          %v3052 = vadd.f32 0.0, %v3051
          %v3053 = vpop.f32.mrb[0].mxu0
          %v3054 = vadd.f32 0.0, %v3053
          %3055 = vmatprep.mubr.bf16.mxu0 0
          %3056 = vmatmul.mubr.bf16.gmra.mrb[0].mxu0 %v2872
          %v3057 = vpop.f32.mrb[0].mxu0
          %v3058 = vadd.f32 0.0, %v3057
          %v3059 = vpop.f32.mrb[0].mxu0
          %v3060 = vadd.f32 0.0, %v3059
          %v3061 = vpop.f32.mrb[0].mxu0
          %v3062 = vadd.f32 0.0, %v3061
          %v3063 = vpop.f32.mrb[0].mxu0
          %v3064 = vadd.f32 0.0, %v3063
          %3065 = vdwg.mxu0
          %v3082 = vunpack.c.l.b16 %v937
          %v3083 = vunpack.c.h.b16 %v937
          %v3084 = vunpack.c.l.b16 %v938
          %v3085 = vunpack.c.h.b16 %v938
          %v3086 = vunpack.c.l.b16 %v939
          %v3087 = vunpack.c.h.b16 %v939
          %v3088 = vunpack.c.l.b16 %v940
          %v3089 = vunpack.c.h.b16 %v940
          %v3090 = vunpack.c.l.b16 %v941
          %v3091 = vunpack.c.h.b16 %v941
          %v3092 = vunpack.c.l.b16 %v942
          %v3093 = vunpack.c.h.b16 %v942
          %v3094 = vunpack.c.l.b16 %v943
          %v3095 = vunpack.c.h.b16 %v943
          %v3096 = vunpack.c.l.b16 %v944
          %v3097 = vunpack.c.h.b16 %v944
          %v3098 = vunpack.c.l.b16 %v945
          %v3099 = vunpack.c.h.b16 %v945
          %v3100 = vunpack.c.l.b16 %v946
          %v3101 = vunpack.c.h.b16 %v946
          %v3102 = vunpack.c.l.b16 %v947
          %v3103 = vunpack.c.h.b16 %v947
          %v3104 = vunpack.c.l.b16 %v948
          %v3105 = vunpack.c.h.b16 %v948
          %v3106 = vunpack.c.l.b16 %v949
          %v3107 = vunpack.c.h.b16 %v949
          %v3108 = vunpack.c.l.b16 %v950
          %v3109 = vunpack.c.h.b16 %v950
          %v3110 = vunpack.c.l.b16 %v951
          %v3111 = vunpack.c.h.b16 %v951
          %v3112 = vunpack.c.l.b16 %v952
          %v3113 = vunpack.c.h.b16 %v952
          %v3114 = vpack.c.b16 %v3084, %v3082
          %v3115 = vpack.c.b16 %v3085, %v3083
          %v3116 = vpack.c.b16 %v3088, %v3086
          %v3117 = vpack.c.b16 %v3089, %v3087
          %v3118 = vpack.c.b16 %v3092, %v3090
          %v3119 = vpack.c.b16 %v3093, %v3091
          %v3120 = vpack.c.b16 %v3096, %v3094
          %v3121 = vpack.c.b16 %v3097, %v3095
          %v3122 = vpack.c.b16 %v3100, %v3098
          %v3123 = vpack.c.b16 %v3101, %v3099
          %v3124 = vpack.c.b16 %v3104, %v3102
          %v3125 = vpack.c.b16 %v3105, %v3103
          %v3126 = vpack.c.b16 %v3108, %v3106
          %v3127 = vpack.c.b16 %v3109, %v3107
          %v3128 = vpack.c.b16 %v3112, %v3110
          %v3129 = vpack.c.b16 %v3113, %v3111
          %3146 = vmatprep.subr.bf16.mxu0 %v3115
          %3147 = vmatpush1.bf16.msra.mxu0 %v3114
          %3148 = vmatprep.subr.bf16.mxu0 %v3117
          %3149 = vmatpush1.bf16.msra.mxu0 %v3116
          %3150 = vmatprep.subr.bf16.mxu0 %v3119
          %3151 = vmatpush1.bf16.msra.mxu0 %v3118
          %3152 = vmatprep.subr.bf16.mxu0 %v3121
          %3153 = vmatpush1.bf16.msra.mxu0 %v3120
          %3154 = vmatprep.subr.bf16.mxu0 %v3123
          %3155 = vmatpush1.bf16.msra.mxu0 %v3122
          %3156 = vmatprep.subr.bf16.mxu0 %v3125
          %3157 = vmatpush1.bf16.msra.mxu0 %v3124
          %3158 = vmatprep.subr.bf16.mxu0 %v3127
          %3159 = vmatpush1.bf16.msra.mxu0 %v3126
          %3160 = vmatprep.subr.bf16.mxu0 %v3129
          %3161 = vmatpush1.bf16.msra.mxu0 %v3128
          %3162 = vmatprep.subr.bf16.mxu0 0
          %3163 = vmatpush1.bf16.msra.mxu0 0
          %3164 = vmatprep.subr.bf16.mxu0 0
          %3165 = vmatpush1.bf16.msra.mxu0 0
          %3166 = vmatprep.subr.bf16.mxu0 0
          %3167 = vmatpush1.bf16.msra.mxu0 0
          %3168 = vmatprep.subr.bf16.mxu0 0
          %3169 = vmatpush1.bf16.msra.mxu0 0
          %3170 = vmatprep.subr.bf16.mxu0 0
          %3171 = vmatpush1.bf16.msra.mxu0 0
          %3172 = vmatprep.subr.bf16.mxu0 0
          %3173 = vmatpush1.bf16.msra.mxu0 0
          %3174 = vmatprep.subr.bf16.mxu0 0
          %3175 = vmatpush1.bf16.msra.mxu0 0
          %3176 = vmatprep.subr.bf16.mxu0 0
          %3177 = vmatpush1.bf16.msra.mxu0 0
          %3178 = vmatprep.mubr.bf16.mxu0 0
          %3179 = vmatmul.mubr.bf16.gmra.mrb[0].mxu0 %v2479
          %v3180 = vpop.f32.mrb[0].mxu0
          %v3181 = vadd.f32 %v2988, %v3180
          %v3182 = vpop.f32.mrb[0].mxu0
          %v3183 = vadd.f32 %v2990, %v3182
          %v3184 = vpop.f32.mrb[0].mxu0
          %v3185 = vadd.f32 %v2992, %v3184
          %v3186 = vpop.f32.mrb[0].mxu0
          %v3187 = vadd.f32 %v2994, %v3186
          %3188 = vmatprep.mubr.bf16.mxu0 0
          %3189 = vmatmul.mubr.bf16.gmra.mrb[0].mxu0 %v2480
          %v3190 = vpop.f32.mrb[0].mxu0
          %v3191 = vadd.f32 %v2998, %v3190
          %v3192 = vpop.f32.mrb[0].mxu0
          %v3193 = vadd.f32 %v3000, %v3192
          %v3194 = vpop.f32.mrb[0].mxu0
          %v3195 = vadd.f32 %v3002, %v3194
          %v3196 = vpop.f32.mrb[0].mxu0
          %v3197 = vadd.f32 %v3004, %v3196
          %3198 = vmatprep.mubr.bf16.mxu0 0
          %3199 = vmatmul.mubr.bf16.gmra.mrb[0].mxu0 %v2481
          %v3200 = vpop.f32.mrb[0].mxu0
          %v3201 = vadd.f32 %v3008, %v3200
          %v3202 = vpop.f32.mrb[0].mxu0
          %v3203 = vadd.f32 %v3010, %v3202
          %v3204 = vpop.f32.mrb[0].mxu0
          %v3205 = vadd.f32 %v3012, %v3204
          %v3206 = vpop.f32.mrb[0].mxu0
          %v3207 = vadd.f32 %v3014, %v3206
          %3208 = vmatprep.mubr.bf16.mxu0 0
          %3209 = vmatmul.mubr.bf16.gmra.mrb[0].mxu0 %v2482
          %v3210 = vpop.f32.mrb[0].mxu0
          %v3211 = vadd.f32 %v3018, %v3210
          %v3212 = vpop.f32.mrb[0].mxu0
          %v3213 = vadd.f32 %v3020, %v3212
          %v3214 = vpop.f32.mrb[0].mxu0
          %v3215 = vadd.f32 %v3022, %v3214
          %v3216 = vpop.f32.mrb[0].mxu0
          %v3217 = vadd.f32 %v3024, %v3216
          %3218 = vmatprep.mubr.bf16.mxu0 0
          %3219 = vmatmul.mubr.bf16.gmra.mrb[0].mxu0 %v2483
          %v3220 = vpop.f32.mrb[0].mxu0
          %v3221 = vadd.f32 %v3028, %v3220
          %v3222 = vpop.f32.mrb[0].mxu0
          %v3223 = vadd.f32 %v3030, %v3222
          %v3224 = vpop.f32.mrb[0].mxu0
          %v3225 = vadd.f32 %v3032, %v3224
          %v3226 = vpop.f32.mrb[0].mxu0
          %v3227 = vadd.f32 %v3034, %v3226
          %3228 = vmatprep.mubr.bf16.mxu0 0
          %3229 = vmatmul.mubr.bf16.gmra.mrb[0].mxu0 %v2484
          %v3230 = vpop.f32.mrb[0].mxu0
          %v3231 = vadd.f32 %v3038, %v3230
          %v3232 = vpop.f32.mrb[0].mxu0
          %v3233 = vadd.f32 %v3040, %v3232
          %v3234 = vpop.f32.mrb[0].mxu0
          %v3235 = vadd.f32 %v3042, %v3234
          %v3236 = vpop.f32.mrb[0].mxu0
          %v3237 = vadd.f32 %v3044, %v3236
          %3238 = vmatprep.mubr.bf16.mxu0 0
          %3239 = vmatmul.mubr.bf16.gmra.mrb[0].mxu0 %v2485
          %v3240 = vpop.f32.mrb[0].mxu0
          %v3241 = vadd.f32 %v3048, %v3240
          %v3242 = vpop.f32.mrb[0].mxu0
          %v3243 = vadd.f32 %v3050, %v3242
          %v3244 = vpop.f32.mrb[0].mxu0
          %v3245 = vadd.f32 %v3052, %v3244
          %v3246 = vpop.f32.mrb[0].mxu0
          %v3247 = vadd.f32 %v3054, %v3246
          %3248 = vmatprep.mubr.bf16.mxu0 0
          %3249 = vmatmul.mubr.bf16.gmra.mrb[0].mxu0 %v2486
          %v3250 = vpop.f32.mrb[0].mxu0
          %v3251 = vadd.f32 %v3058, %v3250
          %v3252 = vpop.f32.mrb[0].mxu0
          %v3253 = vadd.f32 %v3060, %v3252
          %v3254 = vpop.f32.mrb[0].mxu0
          %v3255 = vadd.f32 %v3062, %v3254
          %v3256 = vpop.f32.mrb[0].mxu0
          %v3257 = vadd.f32 %v3064, %v3256
          %3258 = vdwg.mxu0
          %v3260 = vlaneseq
          %v3261 = vshrl.u32 %v3260, 7
          %v3262 = vsub.s32 0, %v3261
          %v3263 = vrot.slane %v1100, %v3262
          %v3264 = vlaneseq
          %v3265 = vshrl.u32 %v3264, 7
          %v3266 = vsub.s32 1, %v3265
          %v3267 = vrot.slane %v1100, %v3266
          %v3270 = vadd.f32 %v3181, %v3263
          %v3271 = vadd.f32 %v3183, %v3267
          %v3272 = vadd.f32 %v3185, %v3263
          %v3273 = vadd.f32 %v3187, %v3267
          %v3274 = vadd.f32 %v3191, %v3263
          %v3275 = vadd.f32 %v3193, %v3267
          %v3276 = vadd.f32 %v3195, %v3263
          %v3277 = vadd.f32 %v3197, %v3267
          %v3278 = vadd.f32 %v3201, %v3263
          %v3279 = vadd.f32 %v3203, %v3267
          %v3280 = vadd.f32 %v3205, %v3263
          %v3281 = vadd.f32 %v3207, %v3267
          %v3282 = vadd.f32 %v3211, %v3263
          %v3283 = vadd.f32 %v3213, %v3267
          %v3284 = vadd.f32 %v3215, %v3263
          %v3285 = vadd.f32 %v3217, %v3267
          %v3286 = vadd.f32 %v3221, %v3263
          %v3287 = vadd.f32 %v3223, %v3267
          %v3288 = vadd.f32 %v3225, %v3263
          %v3289 = vadd.f32 %v3227, %v3267
          %v3290 = vadd.f32 %v3231, %v3263
          %v3291 = vadd.f32 %v3233, %v3267
          %v3292 = vadd.f32 %v3235, %v3263
          %v3293 = vadd.f32 %v3237, %v3267
          %v3294 = vadd.f32 %v3241, %v3263
          %v3295 = vadd.f32 %v3243, %v3267
          %v3296 = vadd.f32 %v3245, %v3263
          %v3297 = vadd.f32 %v3247, %v3267
          %v3298 = vadd.f32 %v3251, %v3263
          %v3299 = vadd.f32 %v3253, %v3267
          %v3300 = vadd.f32 %v3255, %v3263
          %v3301 = vadd.f32 %v3257, %v3267
          %v3302 = vadd.f32 %v1147, %v3270
          %v3303 = vadd.f32 %v1148, %v3271
          %v3304 = vadd.f32 %v1149, %v3272
          %v3305 = vadd.f32 %v1150, %v3273
          %v3306 = vadd.f32 %v1151, %v3274
          %v3307 = vadd.f32 %v1152, %v3275
          %v3308 = vadd.f32 %v1153, %v3276
          %v3309 = vadd.f32 %v1154, %v3277
          %v3310 = vadd.f32 %v1155, %v3278
          %v3311 = vadd.f32 %v1156, %v3279
          %v3312 = vadd.f32 %v1157, %v3280
          %v3313 = vadd.f32 %v1158, %v3281
          %v3314 = vadd.f32 %v1159, %v3282
          %v3315 = vadd.f32 %v1160, %v3283
          %v3316 = vadd.f32 %v1161, %v3284
          %v3317 = vadd.f32 %v1162, %v3285
          %v3318 = vadd.f32 %v1163, %v3286
          %v3319 = vadd.f32 %v1164, %v3287
          %v3320 = vadd.f32 %v1165, %v3288
          %v3321 = vadd.f32 %v1166, %v3289
          %v3322 = vadd.f32 %v1167, %v3290
          %v3323 = vadd.f32 %v1168, %v3291
          %v3324 = vadd.f32 %v1169, %v3292
          %v3325 = vadd.f32 %v1170, %v3293
          %v3326 = vadd.f32 %v1171, %v3294
          %v3327 = vadd.f32 %v1172, %v3295
          %v3328 = vadd.f32 %v1173, %v3296
          %v3329 = vadd.f32 %v1174, %v3297
          %v3330 = vadd.f32 %v1175, %v3298
          %v3331 = vadd.f32 %v1176, %v3299
          %v3332 = vadd.f32 %v1177, %v3300
          %v3333 = vadd.f32 %v1178, %v3301
          %v3334 = vadd.f32 %v3302, %v3303
          %3335 = vadd.xlane.f32.xlu0 %v3334
          %v3336 = vpop.xlane.xlu0 %3335
          %v3337 = vadd.f32 %v3304, %v3305
          %3338 = vadd.xlane.f32.xlu0 %v3337
          %v3339 = vpop.xlane.xlu0 %3338
          %v3340 = vadd.f32 %v3306, %v3307
          %3341 = vadd.xlane.f32.xlu0 %v3340
          %v3342 = vpop.xlane.xlu0 %3341
          %v3343 = vadd.f32 %v3308, %v3309
          %3344 = vadd.xlane.f32.xlu0 %v3343
          %v3345 = vpop.xlane.xlu0 %3344
          %v3346 = vadd.f32 %v3310, %v3311
          %3347 = vadd.xlane.f32.xlu0 %v3346
          %v3348 = vpop.xlane.xlu0 %3347
          %v3349 = vadd.f32 %v3312, %v3313
          %3350 = vadd.xlane.f32.xlu0 %v3349
          %v3351 = vpop.xlane.xlu0 %3350
          %v3352 = vadd.f32 %v3314, %v3315
          %3353 = vadd.xlane.f32.xlu0 %v3352
          %v3354 = vpop.xlane.xlu0 %3353
          %v3355 = vadd.f32 %v3316, %v3317
          %3356 = vadd.xlane.f32.xlu0 %v3355
          %v3357 = vpop.xlane.xlu0 %3356
          %v3358 = vadd.f32 %v3318, %v3319
          %3359 = vadd.xlane.f32.xlu0 %v3358
          %v3360 = vpop.xlane.xlu0 %3359
          %v3361 = vadd.f32 %v3320, %v3321
          %3362 = vadd.xlane.f32.xlu0 %v3361
          %v3363 = vpop.xlane.xlu0 %3362
          %v3364 = vadd.f32 %v3322, %v3323
          %3365 = vadd.xlane.f32.xlu0 %v3364
          %v3366 = vpop.xlane.xlu0 %3365
          %v3367 = vadd.f32 %v3324, %v3325
          %3368 = vadd.xlane.f32.xlu0 %v3367
          %v3369 = vpop.xlane.xlu0 %3368
          %v3370 = vadd.f32 %v3326, %v3327
          %3371 = vadd.xlane.f32.xlu0 %v3370
          %v3372 = vpop.xlane.xlu0 %3371
          %v3373 = vadd.f32 %v3328, %v3329
          %3374 = vadd.xlane.f32.xlu0 %v3373
          %v3375 = vpop.xlane.xlu0 %3374
          %v3376 = vadd.f32 %v3330, %v3331
          %3377 = vadd.xlane.f32.xlu0 %v3376
          %v3378 = vpop.xlane.xlu0 %3377
          %v3379 = vadd.f32 %v3332, %v3333
          %3380 = vadd.xlane.f32.xlu0 %v3379
          %v3381 = vpop.xlane.xlu0 %3380
          %v3382 = vrcp.pop 256.0
          %v3383 = vmul.f32 %v3336, %v3382
          %v3384 = vmul.f32 %v3339, %v3382
          %v3385 = vmul.f32 %v3342, %v3382
          %v3386 = vmul.f32 %v3345, %v3382
          %v3387 = vmul.f32 %v3348, %v3382
          %v3388 = vmul.f32 %v3351, %v3382
          %v3389 = vmul.f32 %v3354, %v3382
          %v3390 = vmul.f32 %v3357, %v3382
          %v3391 = vmul.f32 %v3360, %v3382
          %v3392 = vmul.f32 %v3363, %v3382
          %v3393 = vmul.f32 %v3366, %v3382
          %v3394 = vmul.f32 %v3369, %v3382
          %v3395 = vmul.f32 %v3372, %v3382
          %v3396 = vmul.f32 %v3375, %v3382
          %v3397 = vmul.f32 %v3378, %v3382
          %v3398 = vmul.f32 %v3381, %v3382
          %v3399 = vmul.f32 %v3302, %v3302
          %v3400 = vmul.f32 %v3303, %v3303
          %v3401 = vmul.f32 %v3304, %v3304
          %v3402 = vmul.f32 %v3305, %v3305
          %v3403 = vmul.f32 %v3306, %v3306
          %v3404 = vmul.f32 %v3307, %v3307
          %v3405 = vmul.f32 %v3308, %v3308
          %v3406 = vmul.f32 %v3309, %v3309
          %v3407 = vmul.f32 %v3310, %v3310
          %v3408 = vmul.f32 %v3311, %v3311
          %v3409 = vmul.f32 %v3312, %v3312
          %v3410 = vmul.f32 %v3313, %v3313
          %v3411 = vmul.f32 %v3314, %v3314
          %v3412 = vmul.f32 %v3315, %v3315
          %v3413 = vmul.f32 %v3316, %v3316
          %v3414 = vmul.f32 %v3317, %v3317
          %v3415 = vmul.f32 %v3318, %v3318
          %v3416 = vmul.f32 %v3319, %v3319
          %v3417 = vmul.f32 %v3320, %v3320
          %v3418 = vmul.f32 %v3321, %v3321
          %v3419 = vmul.f32 %v3322, %v3322
          %v3420 = vmul.f32 %v3323, %v3323
          %v3421 = vmul.f32 %v3324, %v3324
          %v3422 = vmul.f32 %v3325, %v3325
          %v3423 = vmul.f32 %v3326, %v3326
          %v3424 = vmul.f32 %v3327, %v3327
          %v3425 = vmul.f32 %v3328, %v3328
          %v3426 = vmul.f32 %v3329, %v3329
          %v3427 = vmul.f32 %v3330, %v3330
          %v3428 = vmul.f32 %v3331, %v3331
          %v3429 = vmul.f32 %v3332, %v3332
          %v3430 = vmul.f32 %v3333, %v3333
          %v3431 = vadd.f32 %v3399, %v3400
          %3432 = vadd.xlane.f32.xlu0 %v3431
          %v3433 = vpop.xlane.xlu0 %3432
          %v3434 = vadd.f32 %v3401, %v3402
          %3435 = vadd.xlane.f32.xlu0 %v3434
          %v3436 = vpop.xlane.xlu0 %3435
          %v3437 = vadd.f32 %v3403, %v3404
          %3438 = vadd.xlane.f32.xlu0 %v3437
          %v3439 = vpop.xlane.xlu0 %3438
          %v3440 = vadd.f32 %v3405, %v3406
          %3441 = vadd.xlane.f32.xlu0 %v3440
          %v3442 = vpop.xlane.xlu0 %3441
          %v3443 = vadd.f32 %v3407, %v3408
          %3444 = vadd.xlane.f32.xlu0 %v3443
          %v3445 = vpop.xlane.xlu0 %3444
          %v3446 = vadd.f32 %v3409, %v3410
          %3447 = vadd.xlane.f32.xlu0 %v3446
          %v3448 = vpop.xlane.xlu0 %3447
          %v3449 = vadd.f32 %v3411, %v3412
          %3450 = vadd.xlane.f32.xlu0 %v3449
          %v3451 = vpop.xlane.xlu0 %3450
          %v3452 = vadd.f32 %v3413, %v3414
          %3453 = vadd.xlane.f32.xlu0 %v3452
          %v3454 = vpop.xlane.xlu0 %3453
          %v3455 = vadd.f32 %v3415, %v3416
          %3456 = vadd.xlane.f32.xlu0 %v3455
          %v3457 = vpop.xlane.xlu0 %3456
          %v3458 = vadd.f32 %v3417, %v3418
          %3459 = vadd.xlane.f32.xlu0 %v3458
          %v3460 = vpop.xlane.xlu0 %3459
          %v3461 = vadd.f32 %v3419, %v3420
          %3462 = vadd.xlane.f32.xlu0 %v3461
          %v3463 = vpop.xlane.xlu0 %3462
          %v3464 = vadd.f32 %v3421, %v3422
          %3465 = vadd.xlane.f32.xlu0 %v3464
          %v3466 = vpop.xlane.xlu0 %3465
          %v3467 = vadd.f32 %v3423, %v3424
          %3468 = vadd.xlane.f32.xlu0 %v3467
          %v3469 = vpop.xlane.xlu0 %3468
          %v3470 = vadd.f32 %v3425, %v3426
          %3471 = vadd.xlane.f32.xlu0 %v3470
          %v3472 = vpop.xlane.xlu0 %3471
          %v3473 = vadd.f32 %v3427, %v3428
          %3474 = vadd.xlane.f32.xlu0 %v3473
          %v3475 = vpop.xlane.xlu0 %3474
          %v3476 = vadd.f32 %v3429, %v3430
          %3477 = vadd.xlane.f32.xlu0 %v3476
          %v3478 = vpop.xlane.xlu0 %3477
          %v3479 = vmul.f32 %v3433, %v3382
          %v3480 = vmul.f32 %v3436, %v3382
          %v3481 = vmul.f32 %v3439, %v3382
          %v3482 = vmul.f32 %v3442, %v3382
          %v3483 = vmul.f32 %v3445, %v3382
          %v3484 = vmul.f32 %v3448, %v3382
          %v3485 = vmul.f32 %v3451, %v3382
          %v3486 = vmul.f32 %v3454, %v3382
          %v3487 = vmul.f32 %v3457, %v3382
          %v3488 = vmul.f32 %v3460, %v3382
          %v3489 = vmul.f32 %v3463, %v3382
          %v3490 = vmul.f32 %v3466, %v3382
          %v3491 = vmul.f32 %v3469, %v3382
          %v3492 = vmul.f32 %v3472, %v3382
          %v3493 = vmul.f32 %v3475, %v3382
          %v3494 = vmul.f32 %v3478, %v3382
          %v3495 = vmul.f32 %v3383, %v3383
          %v3496 = vmul.f32 %v3384, %v3384
          %v3497 = vmul.f32 %v3385, %v3385
          %v3498 = vmul.f32 %v3386, %v3386
          %v3499 = vmul.f32 %v3387, %v3387
          %v3500 = vmul.f32 %v3388, %v3388
          %v3501 = vmul.f32 %v3389, %v3389
          %v3502 = vmul.f32 %v3390, %v3390
          %v3503 = vmul.f32 %v3391, %v3391
          %v3504 = vmul.f32 %v3392, %v3392
          %v3505 = vmul.f32 %v3393, %v3393
          %v3506 = vmul.f32 %v3394, %v3394
          %v3507 = vmul.f32 %v3395, %v3395
          %v3508 = vmul.f32 %v3396, %v3396
          %v3509 = vmul.f32 %v3397, %v3397
          %v3510 = vmul.f32 %v3398, %v3398
          %v3511 = vsub.f32 %v3479, %v3495
          %v3512 = vsub.f32 %v3480, %v3496
          %v3513 = vsub.f32 %v3481, %v3497
          %v3514 = vsub.f32 %v3482, %v3498
          %v3515 = vsub.f32 %v3483, %v3499
          %v3516 = vsub.f32 %v3484, %v3500
          %v3517 = vsub.f32 %v3485, %v3501
          %v3518 = vsub.f32 %v3486, %v3502
          %v3519 = vsub.f32 %v3487, %v3503
          %v3520 = vsub.f32 %v3488, %v3504
          %v3521 = vsub.f32 %v3489, %v3505
          %v3522 = vsub.f32 %v3490, %v3506
          %v3523 = vsub.f32 %v3491, %v3507
          %v3524 = vsub.f32 %v3492, %v3508
          %v3525 = vsub.f32 %v3493, %v3509
          %v3526 = vsub.f32 %v3494, %v3510
          %v3527 = vsub.f32 %v3302, %v3383
          %v3528 = vsub.f32 %v3303, %v3383
          %v3529 = vsub.f32 %v3304, %v3384
          %v3530 = vsub.f32 %v3305, %v3384
          %v3531 = vsub.f32 %v3306, %v3385
          %v3532 = vsub.f32 %v3307, %v3385
          %v3533 = vsub.f32 %v3308, %v3386
          %v3534 = vsub.f32 %v3309, %v3386
          %v3535 = vsub.f32 %v3310, %v3387
          %v3536 = vsub.f32 %v3311, %v3387
          %v3537 = vsub.f32 %v3312, %v3388
          %v3538 = vsub.f32 %v3313, %v3388
          %v3539 = vsub.f32 %v3314, %v3389
          %v3540 = vsub.f32 %v3315, %v3389
          %v3541 = vsub.f32 %v3316, %v3390
          %v3542 = vsub.f32 %v3317, %v3390
          %v3543 = vsub.f32 %v3318, %v3391
          %v3544 = vsub.f32 %v3319, %v3391
          %v3545 = vsub.f32 %v3320, %v3392
          %v3546 = vsub.f32 %v3321, %v3392
          %v3547 = vsub.f32 %v3322, %v3393
          %v3548 = vsub.f32 %v3323, %v3393
          %v3549 = vsub.f32 %v3324, %v3394
          %v3550 = vsub.f32 %v3325, %v3394
          %v3551 = vsub.f32 %v3326, %v3395
          %v3552 = vsub.f32 %v3327, %v3395
          %v3553 = vsub.f32 %v3328, %v3396
          %v3554 = vsub.f32 %v3329, %v3396
          %v3555 = vsub.f32 %v3330, %v3397
          %v3556 = vsub.f32 %v3331, %v3397
          %v3557 = vsub.f32 %v3332, %v3398
          %v3558 = vsub.f32 %v3333, %v3398
          %v3559 = vadd.f32 %v3511, 1e-05
          %v3560 = vadd.f32 %v3512, 1e-05
          %v3561 = vadd.f32 %v3513, 1e-05
          %v3562 = vadd.f32 %v3514, 1e-05
          %v3563 = vadd.f32 %v3515, 1e-05
          %v3564 = vadd.f32 %v3516, 1e-05
          %v3565 = vadd.f32 %v3517, 1e-05
          %v3566 = vadd.f32 %v3518, 1e-05
          %v3567 = vadd.f32 %v3519, 1e-05
          %v3568 = vadd.f32 %v3520, 1e-05
          %v3569 = vadd.f32 %v3521, 1e-05
          %v3570 = vadd.f32 %v3522, 1e-05
          %v3571 = vadd.f32 %v3523, 1e-05
          %v3572 = vadd.f32 %v3524, 1e-05
          %v3573 = vadd.f32 %v3525, 1e-05
          %v3574 = vadd.f32 %v3526, 1e-05
          %v3575 = vrsqrt.pop %v3559
          %v3576 = vrsqrt.pop %v3560
          %v3577 = vrsqrt.pop %v3561
          %v3578 = vrsqrt.pop %v3562
          %v3579 = vrsqrt.pop %v3563
          %v3580 = vrsqrt.pop %v3564
          %v3581 = vrsqrt.pop %v3565
          %v3582 = vrsqrt.pop %v3566
          %v3583 = vrsqrt.pop %v3567
          %v3584 = vrsqrt.pop %v3568
          %v3585 = vrsqrt.pop %v3569
          %v3586 = vrsqrt.pop %v3570
          %v3587 = vrsqrt.pop %v3571
          %v3588 = vrsqrt.pop %v3572
          %v3589 = vrsqrt.pop %v3573
          %v3590 = vrsqrt.pop %v3574
          %v3591 = vmul.f32 %v3527, %v3575
          %v3592 = vmul.f32 %v3528, %v3575
          %v3593 = vmul.f32 %v3529, %v3576
          %v3594 = vmul.f32 %v3530, %v3576
          %v3595 = vmul.f32 %v3531, %v3577
          %v3596 = vmul.f32 %v3532, %v3577
          %v3597 = vmul.f32 %v3533, %v3578
          %v3598 = vmul.f32 %v3534, %v3578
          %v3599 = vmul.f32 %v3535, %v3579
          %v3600 = vmul.f32 %v3536, %v3579
          %v3601 = vmul.f32 %v3537, %v3580
          %v3602 = vmul.f32 %v3538, %v3580
          %v3603 = vmul.f32 %v3539, %v3581
          %v3604 = vmul.f32 %v3540, %v3581
          %v3605 = vmul.f32 %v3541, %v3582
          %v3606 = vmul.f32 %v3542, %v3582
          %v3607 = vmul.f32 %v3543, %v3583
          %v3608 = vmul.f32 %v3544, %v3583
          %v3609 = vmul.f32 %v3545, %v3584
          %v3610 = vmul.f32 %v3546, %v3584
          %v3611 = vmul.f32 %v3547, %v3585
          %v3612 = vmul.f32 %v3548, %v3585
          %v3613 = vmul.f32 %v3549, %v3586
          %v3614 = vmul.f32 %v3550, %v3586
          %v3615 = vmul.f32 %v3551, %v3587
          %v3616 = vmul.f32 %v3552, %v3587
          %v3617 = vmul.f32 %v3553, %v3588
          %v3618 = vmul.f32 %v3554, %v3588
          %v3619 = vmul.f32 %v3555, %v3589
          %v3620 = vmul.f32 %v3556, %v3589
          %v3621 = vmul.f32 %v3557, %v3590
          %v3622 = vmul.f32 %v3558, %v3590
          %v3624 = vlaneseq
          %v3625 = vshrl.u32 %v3624, 7
          %v3626 = vsub.s32 0, %v3625
          %v3627 = vrot.slane %v1103, %v3626
          %v3628 = vlaneseq
          %v3629 = vshrl.u32 %v3628, 7
          %v3630 = vsub.s32 1, %v3629
          %v3631 = vrot.slane %v1103, %v3630
          %v3634 = vmul.f32 %v3591, %v3627
          %v3635 = vmul.f32 %v3592, %v3631
          %v3636 = vmul.f32 %v3593, %v3627
          %v3637 = vmul.f32 %v3594, %v3631
          %v3638 = vmul.f32 %v3595, %v3627
          %v3639 = vmul.f32 %v3596, %v3631
          %v3640 = vmul.f32 %v3597, %v3627
          %v3641 = vmul.f32 %v3598, %v3631
          %v3642 = vmul.f32 %v3599, %v3627
          %v3643 = vmul.f32 %v3600, %v3631
          %v3644 = vmul.f32 %v3601, %v3627
          %v3645 = vmul.f32 %v3602, %v3631
          %v3646 = vmul.f32 %v3603, %v3627
          %v3647 = vmul.f32 %v3604, %v3631
          %v3648 = vmul.f32 %v3605, %v3627
          %v3649 = vmul.f32 %v3606, %v3631
          %v3650 = vmul.f32 %v3607, %v3627
          %v3651 = vmul.f32 %v3608, %v3631
          %v3652 = vmul.f32 %v3609, %v3627
          %v3653 = vmul.f32 %v3610, %v3631
          %v3654 = vmul.f32 %v3611, %v3627
          %v3655 = vmul.f32 %v3612, %v3631
          %v3656 = vmul.f32 %v3613, %v3627
          %v3657 = vmul.f32 %v3614, %v3631
          %v3658 = vmul.f32 %v3615, %v3627
          %v3659 = vmul.f32 %v3616, %v3631
          %v3660 = vmul.f32 %v3617, %v3627
          %v3661 = vmul.f32 %v3618, %v3631
          %v3662 = vmul.f32 %v3619, %v3627
          %v3663 = vmul.f32 %v3620, %v3631
          %v3664 = vmul.f32 %v3621, %v3627
          %v3665 = vmul.f32 %v3622, %v3631
          %v3667 = vlaneseq
          %v3668 = vshrl.u32 %v3667, 7
          %v3669 = vsub.s32 0, %v3668
          %v3670 = vrot.slane %v1104, %v3669
          %v3671 = vlaneseq
          %v3672 = vshrl.u32 %v3671, 7
          %v3673 = vsub.s32 1, %v3672
          %v3674 = vrot.slane %v1104, %v3673
          %v3677 = vadd.f32 %v3634, %v3670
          %v3678 = vadd.f32 %v3635, %v3674
          %v3679 = vadd.f32 %v3636, %v3670
          %v3680 = vadd.f32 %v3637, %v3674
          %v3681 = vadd.f32 %v3638, %v3670
          %v3682 = vadd.f32 %v3639, %v3674
          %v3683 = vadd.f32 %v3640, %v3670
          %v3684 = vadd.f32 %v3641, %v3674
          %v3685 = vadd.f32 %v3642, %v3670
          %v3686 = vadd.f32 %v3643, %v3674
          %v3687 = vadd.f32 %v3644, %v3670
          %v3688 = vadd.f32 %v3645, %v3674
          %v3689 = vadd.f32 %v3646, %v3670
          %v3690 = vadd.f32 %v3647, %v3674
          %v3691 = vadd.f32 %v3648, %v3670
          %v3692 = vadd.f32 %v3649, %v3674
          %v3693 = vadd.f32 %v3650, %v3670
          %v3694 = vadd.f32 %v3651, %v3674
          %v3695 = vadd.f32 %v3652, %v3670
          %v3696 = vadd.f32 %v3653, %v3674
          %v3697 = vadd.f32 %v3654, %v3670
          %v3698 = vadd.f32 %v3655, %v3674
          %v3699 = vadd.f32 %v3656, %v3670
          %v3700 = vadd.f32 %v3657, %v3674
          %v3701 = vadd.f32 %v3658, %v3670
          %v3702 = vadd.f32 %v3659, %v3674
          %v3703 = vadd.f32 %v3660, %v3670
          %v3704 = vadd.f32 %v3661, %v3674
          %v3705 = vadd.f32 %v3662, %v3670
          %v3706 = vadd.f32 %v3663, %v3674
          %v3707 = vadd.f32 %v3664, %v3670
          %v3708 = vadd.f32 %v3665, %v3674
          %v3709 = vpack.c.bf16 %v3679, %v3677
          %v3710 = vpack.c.bf16 %v3680, %v3678
          %v3711 = vpack.c.bf16 %v3683, %v3681
          %v3712 = vpack.c.bf16 %v3684, %v3682
          %v3713 = vpack.c.bf16 %v3687, %v3685
          %v3714 = vpack.c.bf16 %v3688, %v3686
          %v3715 = vpack.c.bf16 %v3691, %v3689
          %v3716 = vpack.c.bf16 %v3692, %v3690
          %v3717 = vpack.c.bf16 %v3695, %v3693
          %v3718 = vpack.c.bf16 %v3696, %v3694
          %v3719 = vpack.c.bf16 %v3699, %v3697
          %v3720 = vpack.c.bf16 %v3700, %v3698
          %v3721 = vpack.c.bf16 %v3703, %v3701
          %v3722 = vpack.c.bf16 %v3704, %v3702
          %v3723 = vpack.c.bf16 %v3707, %v3705
          %v3724 = vpack.c.bf16 %v3708, %v3706
          %v3726 = vlaneseq
          %v3727 = vshrl.u32 %v3726, 7
          %v3728 = vsub.s32 0, %v3727
          %v3729 = vrot.slane %v1101, %v3728
          %v3730 = vlaneseq
          %v3731 = vshrl.u32 %v3730, 7
          %v3732 = vsub.s32 1, %v3731
          %v3733 = vrot.slane %v1101, %v3732
          %v3734 = vlaneseq
          %v3735 = vshrl.u32 %v3734, 7
          %v3736 = vsub.s32 2, %v3735
          %v3737 = vrot.slane %v1101, %v3736
          %v3738 = vlaneseq
          %v3739 = vshrl.u32 %v3738, 7
          %v3740 = vsub.s32 3, %v3739
          %v3741 = vrot.slane %v1101, %v3740
          %v3810 = vunpack.c.l.b16 %v969
          %v3811 = vunpack.c.h.b16 %v969
          %v3812 = vunpack.c.l.b16 %v970
          %v3813 = vunpack.c.h.b16 %v970
          %v3814 = vunpack.c.l.b16 %v971
          %v3815 = vunpack.c.h.b16 %v971
          %v3816 = vunpack.c.l.b16 %v972
          %v3817 = vunpack.c.h.b16 %v972
          %v3818 = vunpack.c.l.b16 %v973
          %v3819 = vunpack.c.h.b16 %v973
          %v3820 = vunpack.c.l.b16 %v974
          %v3821 = vunpack.c.h.b16 %v974
          %v3822 = vunpack.c.l.b16 %v975
          %v3823 = vunpack.c.h.b16 %v975
          %v3824 = vunpack.c.l.b16 %v976
          %v3825 = vunpack.c.h.b16 %v976
          %v3826 = vunpack.c.l.b16 %v977
          %v3827 = vunpack.c.h.b16 %v977
          %v3828 = vunpack.c.l.b16 %v978
          %v3829 = vunpack.c.h.b16 %v978
          %v3830 = vunpack.c.l.b16 %v979
          %v3831 = vunpack.c.h.b16 %v979
          %v3832 = vunpack.c.l.b16 %v980
          %v3833 = vunpack.c.h.b16 %v980
          %v3834 = vunpack.c.l.b16 %v981
          %v3835 = vunpack.c.h.b16 %v981
          %v3836 = vunpack.c.l.b16 %v982
          %v3837 = vunpack.c.h.b16 %v982
          %v3838 = vunpack.c.l.b16 %v983
          %v3839 = vunpack.c.h.b16 %v983
          %v3840 = vunpack.c.l.b16 %v984
          %v3841 = vunpack.c.h.b16 %v984
          %v3842 = vunpack.c.l.b16 %v985
          %v3843 = vunpack.c.h.b16 %v985
          %v3844 = vunpack.c.l.b16 %v986
          %v3845 = vunpack.c.h.b16 %v986
          %v3846 = vunpack.c.l.b16 %v987
          %v3847 = vunpack.c.h.b16 %v987
          %v3848 = vunpack.c.l.b16 %v988
          %v3849 = vunpack.c.h.b16 %v988
          %v3850 = vunpack.c.l.b16 %v989
          %v3851 = vunpack.c.h.b16 %v989
          %v3852 = vunpack.c.l.b16 %v990
          %v3853 = vunpack.c.h.b16 %v990
          %v3854 = vunpack.c.l.b16 %v991
          %v3855 = vunpack.c.h.b16 %v991
          %v3856 = vunpack.c.l.b16 %v992
          %v3857 = vunpack.c.h.b16 %v992
          %v3858 = vunpack.c.l.b16 %v993
          %v3859 = vunpack.c.h.b16 %v993
          %v3860 = vunpack.c.l.b16 %v994
          %v3861 = vunpack.c.h.b16 %v994
          %v3862 = vunpack.c.l.b16 %v995
          %v3863 = vunpack.c.h.b16 %v995
          %v3864 = vunpack.c.l.b16 %v996
          %v3865 = vunpack.c.h.b16 %v996
          %v3866 = vunpack.c.l.b16 %v997
          %v3867 = vunpack.c.h.b16 %v997
          %v3868 = vunpack.c.l.b16 %v998
          %v3869 = vunpack.c.h.b16 %v998
          %v3870 = vunpack.c.l.b16 %v999
          %v3871 = vunpack.c.h.b16 %v999
          %v3872 = vunpack.c.l.b16 %v1000
          %v3873 = vunpack.c.h.b16 %v1000
          %v3874 = vunpack.c.l.b16 %v1001
          %v3875 = vunpack.c.h.b16 %v1001
          %v3876 = vunpack.c.l.b16 %v1002
          %v3877 = vunpack.c.h.b16 %v1002
          %v3878 = vunpack.c.l.b16 %v1003
          %v3879 = vunpack.c.h.b16 %v1003
          %v3880 = vunpack.c.l.b16 %v1004
          %v3881 = vunpack.c.h.b16 %v1004
          %v3882 = vunpack.c.l.b16 %v1005
          %v3883 = vunpack.c.h.b16 %v1005
          %v3884 = vunpack.c.l.b16 %v1006
          %v3885 = vunpack.c.h.b16 %v1006
          %v3886 = vunpack.c.l.b16 %v1007
          %v3887 = vunpack.c.h.b16 %v1007
          %v3888 = vunpack.c.l.b16 %v1008
          %v3889 = vunpack.c.h.b16 %v1008
          %v3890 = vunpack.c.l.b16 %v1009
          %v3891 = vunpack.c.h.b16 %v1009
          %v3892 = vunpack.c.l.b16 %v1010
          %v3893 = vunpack.c.h.b16 %v1010
          %v3894 = vunpack.c.l.b16 %v1011
          %v3895 = vunpack.c.h.b16 %v1011
          %v3896 = vunpack.c.l.b16 %v1012
          %v3897 = vunpack.c.h.b16 %v1012
          %v3898 = vunpack.c.l.b16 %v1013
          %v3899 = vunpack.c.h.b16 %v1013
          %v3900 = vunpack.c.l.b16 %v1014
          %v3901 = vunpack.c.h.b16 %v1014
          %v3902 = vunpack.c.l.b16 %v1015
          %v3903 = vunpack.c.h.b16 %v1015
          %v3904 = vunpack.c.l.b16 %v1016
          %v3905 = vunpack.c.h.b16 %v1016
          %v3906 = vunpack.c.l.b16 %v1017
          %v3907 = vunpack.c.h.b16 %v1017
          %v3908 = vunpack.c.l.b16 %v1018
          %v3909 = vunpack.c.h.b16 %v1018
          %v3910 = vunpack.c.l.b16 %v1019
          %v3911 = vunpack.c.h.b16 %v1019
          %v3912 = vunpack.c.l.b16 %v1020
          %v3913 = vunpack.c.h.b16 %v1020
          %v3914 = vunpack.c.l.b16 %v1021
          %v3915 = vunpack.c.h.b16 %v1021
          %v3916 = vunpack.c.l.b16 %v1022
          %v3917 = vunpack.c.h.b16 %v1022
          %v3918 = vunpack.c.l.b16 %v1023
          %v3919 = vunpack.c.h.b16 %v1023
          %v3920 = vunpack.c.l.b16 %v1024
          %v3921 = vunpack.c.h.b16 %v1024
          %v3922 = vunpack.c.l.b16 %v1025
          %v3923 = vunpack.c.h.b16 %v1025
          %v3924 = vunpack.c.l.b16 %v1026
          %v3925 = vunpack.c.h.b16 %v1026
          %v3926 = vunpack.c.l.b16 %v1027
          %v3927 = vunpack.c.h.b16 %v1027
          %v3928 = vunpack.c.l.b16 %v1028
          %v3929 = vunpack.c.h.b16 %v1028
          %v3930 = vunpack.c.l.b16 %v1029
          %v3931 = vunpack.c.h.b16 %v1029
          %v3932 = vunpack.c.l.b16 %v1030
          %v3933 = vunpack.c.h.b16 %v1030
          %v3934 = vunpack.c.l.b16 %v1031
          %v3935 = vunpack.c.h.b16 %v1031
          %v3936 = vunpack.c.l.b16 %v1032
          %v3937 = vunpack.c.h.b16 %v1032
          %v3938 = vpack.c.b16 %v3814, %v3810
          %v3939 = vpack.c.b16 %v3815, %v3811
          %v3940 = vpack.c.b16 %v3816, %v3812
          %v3941 = vpack.c.b16 %v3817, %v3813
          %v3942 = vpack.c.b16 %v3822, %v3818
          %v3943 = vpack.c.b16 %v3823, %v3819
          %v3944 = vpack.c.b16 %v3824, %v3820
          %v3945 = vpack.c.b16 %v3825, %v3821
          %v3946 = vpack.c.b16 %v3830, %v3826
          %v3947 = vpack.c.b16 %v3831, %v3827
          %v3948 = vpack.c.b16 %v3832, %v3828
          %v3949 = vpack.c.b16 %v3833, %v3829
          %v3950 = vpack.c.b16 %v3838, %v3834
          %v3951 = vpack.c.b16 %v3839, %v3835
          %v3952 = vpack.c.b16 %v3840, %v3836
          %v3953 = vpack.c.b16 %v3841, %v3837
          %v3954 = vpack.c.b16 %v3846, %v3842
          %v3955 = vpack.c.b16 %v3847, %v3843
          %v3956 = vpack.c.b16 %v3848, %v3844
          %v3957 = vpack.c.b16 %v3849, %v3845
          %v3958 = vpack.c.b16 %v3854, %v3850
          %v3959 = vpack.c.b16 %v3855, %v3851
          %v3960 = vpack.c.b16 %v3856, %v3852
          %v3961 = vpack.c.b16 %v3857, %v3853
          %v3962 = vpack.c.b16 %v3862, %v3858
          %v3963 = vpack.c.b16 %v3863, %v3859
          %v3964 = vpack.c.b16 %v3864, %v3860
          %v3965 = vpack.c.b16 %v3865, %v3861
          %v3966 = vpack.c.b16 %v3870, %v3866
          %v3967 = vpack.c.b16 %v3871, %v3867
          %v3968 = vpack.c.b16 %v3872, %v3868
          %v3969 = vpack.c.b16 %v3873, %v3869
          %v3970 = vpack.c.b16 %v3878, %v3874
          %v3971 = vpack.c.b16 %v3879, %v3875
          %v3972 = vpack.c.b16 %v3880, %v3876
          %v3973 = vpack.c.b16 %v3881, %v3877
          %v3974 = vpack.c.b16 %v3886, %v3882
          %v3975 = vpack.c.b16 %v3887, %v3883
          %v3976 = vpack.c.b16 %v3888, %v3884
          %v3977 = vpack.c.b16 %v3889, %v3885
          %v3978 = vpack.c.b16 %v3894, %v3890
          %v3979 = vpack.c.b16 %v3895, %v3891
          %v3980 = vpack.c.b16 %v3896, %v3892
          %v3981 = vpack.c.b16 %v3897, %v3893
          %v3982 = vpack.c.b16 %v3902, %v3898
          %v3983 = vpack.c.b16 %v3903, %v3899
          %v3984 = vpack.c.b16 %v3904, %v3900
          %v3985 = vpack.c.b16 %v3905, %v3901
          %v3986 = vpack.c.b16 %v3910, %v3906
          %v3987 = vpack.c.b16 %v3911, %v3907
          %v3988 = vpack.c.b16 %v3912, %v3908
          %v3989 = vpack.c.b16 %v3913, %v3909
          %v3990 = vpack.c.b16 %v3918, %v3914
          %v3991 = vpack.c.b16 %v3919, %v3915
          %v3992 = vpack.c.b16 %v3920, %v3916
          %v3993 = vpack.c.b16 %v3921, %v3917
          %v3994 = vpack.c.b16 %v3926, %v3922
          %v3995 = vpack.c.b16 %v3927, %v3923
          %v3996 = vpack.c.b16 %v3928, %v3924
          %v3997 = vpack.c.b16 %v3929, %v3925
          %v3998 = vpack.c.b16 %v3934, %v3930
          %v3999 = vpack.c.b16 %v3935, %v3931
          %v4000 = vpack.c.b16 %v3936, %v3932
          %v4001 = vpack.c.b16 %v3937, %v3933
          %4066 = vmatprep.subr.bf16.mxu0 %v3939
          %4067 = vmatpush1.bf16.msra.mxu0 %v3938
          %4068 = vmatprep.subr.bf16.mxu0 %v3943
          %4069 = vmatpush1.bf16.msra.mxu0 %v3942
          %4070 = vmatprep.subr.bf16.mxu0 %v3947
          %4071 = vmatpush1.bf16.msra.mxu0 %v3946
          %4072 = vmatprep.subr.bf16.mxu0 %v3951
          %4073 = vmatpush1.bf16.msra.mxu0 %v3950
          %4074 = vmatprep.subr.bf16.mxu0 %v3955
          %4075 = vmatpush1.bf16.msra.mxu0 %v3954
          %4076 = vmatprep.subr.bf16.mxu0 %v3959
          %4077 = vmatpush1.bf16.msra.mxu0 %v3958
          %4078 = vmatprep.subr.bf16.mxu0 %v3963
          %4079 = vmatpush1.bf16.msra.mxu0 %v3962
          %4080 = vmatprep.subr.bf16.mxu0 %v3967
          %4081 = vmatpush1.bf16.msra.mxu0 %v3966
          %4082 = vmatprep.subr.bf16.mxu0 %v3971
          %4083 = vmatpush1.bf16.msra.mxu0 %v3970
          %4084 = vmatprep.subr.bf16.mxu0 %v3975
          %4085 = vmatpush1.bf16.msra.mxu0 %v3974
          %4086 = vmatprep.subr.bf16.mxu0 %v3979
          %4087 = vmatpush1.bf16.msra.mxu0 %v3978
          %4088 = vmatprep.subr.bf16.mxu0 %v3983
          %4089 = vmatpush1.bf16.msra.mxu0 %v3982
          %4090 = vmatprep.subr.bf16.mxu0 %v3987
          %4091 = vmatpush1.bf16.msra.mxu0 %v3986
          %4092 = vmatprep.subr.bf16.mxu0 %v3991
          %4093 = vmatpush1.bf16.msra.mxu0 %v3990
          %4094 = vmatprep.subr.bf16.mxu0 %v3995
          %4095 = vmatpush1.bf16.msra.mxu0 %v3994
          %4096 = vmatprep.subr.bf16.mxu0 %v3999
          %4097 = vmatpush1.bf16.msra.mxu0 %v3998
          %4098 = vmatprep.mubr.bf16.mxu0 %v3710
          %4099 = vmatmul.mubr.bf16.gmra.mrb[0].mxu0 %v3709
          %v4100 = vpop.f32.mrb[0].mxu0
          %v4101 = vadd.f32 %v3729, %v4100
          %v4102 = vpop.f32.mrb[0].mxu0
          %v4103 = vadd.f32 %v3733, %v4102
          %v4104 = vpop.f32.mrb[0].mxu0
          %v4105 = vadd.f32 %v3729, %v4104
          %v4106 = vpop.f32.mrb[0].mxu0
          %v4107 = vadd.f32 %v3733, %v4106
          %4108 = vmatprep.mubr.bf16.mxu0 %v3712
          %4109 = vmatmul.mubr.bf16.gmra.mrb[0].mxu0 %v3711
          %v4110 = vpop.f32.mrb[0].mxu0
          %v4111 = vadd.f32 %v3729, %v4110
          %v4112 = vpop.f32.mrb[0].mxu0
          %v4113 = vadd.f32 %v3733, %v4112
          %v4114 = vpop.f32.mrb[0].mxu0
          %v4115 = vadd.f32 %v3729, %v4114
          %v4116 = vpop.f32.mrb[0].mxu0
          %v4117 = vadd.f32 %v3733, %v4116
          %4118 = vmatprep.mubr.bf16.mxu0 %v3714
          %4119 = vmatmul.mubr.bf16.gmra.mrb[0].mxu0 %v3713
          %v4120 = vpop.f32.mrb[0].mxu0
          %v4121 = vadd.f32 %v3729, %v4120
          %v4122 = vpop.f32.mrb[0].mxu0
          %v4123 = vadd.f32 %v3733, %v4122
          %v4124 = vpop.f32.mrb[0].mxu0
          %v4125 = vadd.f32 %v3729, %v4124
          %v4126 = vpop.f32.mrb[0].mxu0
          %v4127 = vadd.f32 %v3733, %v4126
          %4128 = vmatprep.mubr.bf16.mxu0 %v3716
          %4129 = vmatmul.mubr.bf16.gmra.mrb[0].mxu0 %v3715
          %v4130 = vpop.f32.mrb[0].mxu0
          %v4131 = vadd.f32 %v3729, %v4130
          %v4132 = vpop.f32.mrb[0].mxu0
          %v4133 = vadd.f32 %v3733, %v4132
          %v4134 = vpop.f32.mrb[0].mxu0
          %v4135 = vadd.f32 %v3729, %v4134
          %v4136 = vpop.f32.mrb[0].mxu0
          %v4137 = vadd.f32 %v3733, %v4136
          %4138 = vmatprep.mubr.bf16.mxu0 %v3718
          %4139 = vmatmul.mubr.bf16.gmra.mrb[0].mxu0 %v3717
          %v4140 = vpop.f32.mrb[0].mxu0
          %v4141 = vadd.f32 %v3729, %v4140
          %v4142 = vpop.f32.mrb[0].mxu0
          %v4143 = vadd.f32 %v3733, %v4142
          %v4144 = vpop.f32.mrb[0].mxu0
          %v4145 = vadd.f32 %v3729, %v4144
          %v4146 = vpop.f32.mrb[0].mxu0
          %v4147 = vadd.f32 %v3733, %v4146
          %4148 = vmatprep.mubr.bf16.mxu0 %v3720
          %4149 = vmatmul.mubr.bf16.gmra.mrb[0].mxu0 %v3719
          %v4150 = vpop.f32.mrb[0].mxu0
          %v4151 = vadd.f32 %v3729, %v4150
          %v4152 = vpop.f32.mrb[0].mxu0
          %v4153 = vadd.f32 %v3733, %v4152
          %v4154 = vpop.f32.mrb[0].mxu0
          %v4155 = vadd.f32 %v3729, %v4154
          %v4156 = vpop.f32.mrb[0].mxu0
          %v4157 = vadd.f32 %v3733, %v4156
          %4158 = vmatprep.mubr.bf16.mxu0 %v3722
          %4159 = vmatmul.mubr.bf16.gmra.mrb[0].mxu0 %v3721
          %v4160 = vpop.f32.mrb[0].mxu0
          %v4161 = vadd.f32 %v3729, %v4160
          %v4162 = vpop.f32.mrb[0].mxu0
          %v4163 = vadd.f32 %v3733, %v4162
          %v4164 = vpop.f32.mrb[0].mxu0
          %v4165 = vadd.f32 %v3729, %v4164
          %v4166 = vpop.f32.mrb[0].mxu0
          %v4167 = vadd.f32 %v3733, %v4166
          %4168 = vmatprep.mubr.bf16.mxu0 %v3724
          %4169 = vmatmul.mubr.bf16.gmra.mrb[0].mxu0 %v3723
          %v4170 = vpop.f32.mrb[0].mxu0
          %v4171 = vadd.f32 %v3729, %v4170
          %v4172 = vpop.f32.mrb[0].mxu0
          %v4173 = vadd.f32 %v3733, %v4172
          %v4174 = vpop.f32.mrb[0].mxu0
          %v4175 = vadd.f32 %v3729, %v4174
          %v4176 = vpop.f32.mrb[0].mxu0
          %v4177 = vadd.f32 %v3733, %v4176
          %4178 = vdwg.mxu0
          %4179 = vmatprep.subr.bf16.mxu0 %v3941
          %4180 = vmatpush1.bf16.msra.mxu0 %v3940
          %4181 = vmatprep.subr.bf16.mxu0 %v3945
          %4182 = vmatpush1.bf16.msra.mxu0 %v3944
          %4183 = vmatprep.subr.bf16.mxu0 %v3949
          %4184 = vmatpush1.bf16.msra.mxu0 %v3948
          %4185 = vmatprep.subr.bf16.mxu0 %v3953
          %4186 = vmatpush1.bf16.msra.mxu0 %v3952
          %4187 = vmatprep.subr.bf16.mxu0 %v3957
          %4188 = vmatpush1.bf16.msra.mxu0 %v3956
          %4189 = vmatprep.subr.bf16.mxu0 %v3961
          %4190 = vmatpush1.bf16.msra.mxu0 %v3960
          %4191 = vmatprep.subr.bf16.mxu0 %v3965
          %4192 = vmatpush1.bf16.msra.mxu0 %v3964
          %4193 = vmatprep.subr.bf16.mxu0 %v3969
          %4194 = vmatpush1.bf16.msra.mxu0 %v3968
          %4195 = vmatprep.subr.bf16.mxu0 %v3973
          %4196 = vmatpush1.bf16.msra.mxu0 %v3972
          %4197 = vmatprep.subr.bf16.mxu0 %v3977
          %4198 = vmatpush1.bf16.msra.mxu0 %v3976
          %4199 = vmatprep.subr.bf16.mxu0 %v3981
          %4200 = vmatpush1.bf16.msra.mxu0 %v3980
          %4201 = vmatprep.subr.bf16.mxu0 %v3985
          %4202 = vmatpush1.bf16.msra.mxu0 %v3984
          %4203 = vmatprep.subr.bf16.mxu0 %v3989
          %4204 = vmatpush1.bf16.msra.mxu0 %v3988
          %4205 = vmatprep.subr.bf16.mxu0 %v3993
          %4206 = vmatpush1.bf16.msra.mxu0 %v3992
          %4207 = vmatprep.subr.bf16.mxu0 %v3997
          %4208 = vmatpush1.bf16.msra.mxu0 %v3996
          %4209 = vmatprep.subr.bf16.mxu0 %v4001
          %4210 = vmatpush1.bf16.msra.mxu0 %v4000
          %4211 = vmatprep.mubr.bf16.mxu0 %v3710
          %4212 = vmatmul.mubr.bf16.gmra.mrb[0].mxu0 %v3709
          %v4213 = vpop.f32.mrb[0].mxu0
          %v4214 = vadd.f32 %v3737, %v4213
          %v4215 = vpop.f32.mrb[0].mxu0
          %v4216 = vadd.f32 %v3741, %v4215
          %v4217 = vpop.f32.mrb[0].mxu0
          %v4218 = vadd.f32 %v3737, %v4217
          %v4219 = vpop.f32.mrb[0].mxu0
          %v4220 = vadd.f32 %v3741, %v4219
          %4221 = vmatprep.mubr.bf16.mxu0 %v3712
          %4222 = vmatmul.mubr.bf16.gmra.mrb[0].mxu0 %v3711
          %v4223 = vpop.f32.mrb[0].mxu0
          %v4224 = vadd.f32 %v3737, %v4223
          %v4225 = vpop.f32.mrb[0].mxu0
          %v4226 = vadd.f32 %v3741, %v4225
          %v4227 = vpop.f32.mrb[0].mxu0
          %v4228 = vadd.f32 %v3737, %v4227
          %v4229 = vpop.f32.mrb[0].mxu0
          %v4230 = vadd.f32 %v3741, %v4229
          %4231 = vmatprep.mubr.bf16.mxu0 %v3714
          %4232 = vmatmul.mubr.bf16.gmra.mrb[0].mxu0 %v3713
          %v4233 = vpop.f32.mrb[0].mxu0
          %v4234 = vadd.f32 %v3737, %v4233
          %v4235 = vpop.f32.mrb[0].mxu0
          %v4236 = vadd.f32 %v3741, %v4235
          %v4237 = vpop.f32.mrb[0].mxu0
          %v4238 = vadd.f32 %v3737, %v4237
          %v4239 = vpop.f32.mrb[0].mxu0
          %v4240 = vadd.f32 %v3741, %v4239
          %4241 = vmatprep.mubr.bf16.mxu0 %v3716
          %4242 = vmatmul.mubr.bf16.gmra.mrb[0].mxu0 %v3715
          %v4243 = vpop.f32.mrb[0].mxu0
          %v4244 = vadd.f32 %v3737, %v4243
          %v4245 = vpop.f32.mrb[0].mxu0
          %v4246 = vadd.f32 %v3741, %v4245
          %v4247 = vpop.f32.mrb[0].mxu0
          %v4248 = vadd.f32 %v3737, %v4247
          %v4249 = vpop.f32.mrb[0].mxu0
          %v4250 = vadd.f32 %v3741, %v4249
          %4251 = vmatprep.mubr.bf16.mxu0 %v3718
          %4252 = vmatmul.mubr.bf16.gmra.mrb[0].mxu0 %v3717
          %v4253 = vpop.f32.mrb[0].mxu0
          %v4254 = vadd.f32 %v3737, %v4253
          %v4255 = vpop.f32.mrb[0].mxu0
          %v4256 = vadd.f32 %v3741, %v4255
          %v4257 = vpop.f32.mrb[0].mxu0
          %v4258 = vadd.f32 %v3737, %v4257
          %v4259 = vpop.f32.mrb[0].mxu0
          %v4260 = vadd.f32 %v3741, %v4259
          %4261 = vmatprep.mubr.bf16.mxu0 %v3720
          %4262 = vmatmul.mubr.bf16.gmra.mrb[0].mxu0 %v3719
          %v4263 = vpop.f32.mrb[0].mxu0
          %v4264 = vadd.f32 %v3737, %v4263
          %v4265 = vpop.f32.mrb[0].mxu0
          %v4266 = vadd.f32 %v3741, %v4265
          %v4267 = vpop.f32.mrb[0].mxu0
          %v4268 = vadd.f32 %v3737, %v4267
          %v4269 = vpop.f32.mrb[0].mxu0
          %v4270 = vadd.f32 %v3741, %v4269
          %4271 = vmatprep.mubr.bf16.mxu0 %v3722
          %4272 = vmatmul.mubr.bf16.gmra.mrb[0].mxu0 %v3721
          %v4273 = vpop.f32.mrb[0].mxu0
          %v4274 = vadd.f32 %v3737, %v4273
          %v4275 = vpop.f32.mrb[0].mxu0
          %v4276 = vadd.f32 %v3741, %v4275
          %v4277 = vpop.f32.mrb[0].mxu0
          %v4278 = vadd.f32 %v3737, %v4277
          %v4279 = vpop.f32.mrb[0].mxu0
          %v4280 = vadd.f32 %v3741, %v4279
          %4281 = vmatprep.mubr.bf16.mxu0 %v3724
          %4282 = vmatmul.mubr.bf16.gmra.mrb[0].mxu0 %v3723
          %v4283 = vpop.f32.mrb[0].mxu0
          %v4284 = vadd.f32 %v3737, %v4283
          %v4285 = vpop.f32.mrb[0].mxu0
          %v4286 = vadd.f32 %v3741, %v4285
          %v4287 = vpop.f32.mrb[0].mxu0
          %v4288 = vadd.f32 %v3737, %v4287
          %v4289 = vpop.f32.mrb[0].mxu0
          %v4290 = vadd.f32 %v3741, %v4289
          %4291 = vdwg.mxu0
          %v4292 = vmax.f32 %v4101, 0.0
          %v4293 = vmax.f32 %v4103, 0.0
          %v4294 = vmax.f32 %v4214, 0.0
          %v4295 = vmax.f32 %v4216, 0.0
          %v4296 = vmax.f32 %v4105, 0.0
          %v4297 = vmax.f32 %v4107, 0.0
          %v4298 = vmax.f32 %v4218, 0.0
          %v4299 = vmax.f32 %v4220, 0.0
          %v4300 = vmax.f32 %v4111, 0.0
          %v4301 = vmax.f32 %v4113, 0.0
          %v4302 = vmax.f32 %v4224, 0.0
          %v4303 = vmax.f32 %v4226, 0.0
          %v4304 = vmax.f32 %v4115, 0.0
          %v4305 = vmax.f32 %v4117, 0.0
          %v4306 = vmax.f32 %v4228, 0.0
          %v4307 = vmax.f32 %v4230, 0.0
          %v4308 = vmax.f32 %v4121, 0.0
          %v4309 = vmax.f32 %v4123, 0.0
          %v4310 = vmax.f32 %v4234, 0.0
          %v4311 = vmax.f32 %v4236, 0.0
          %v4312 = vmax.f32 %v4125, 0.0
          %v4313 = vmax.f32 %v4127, 0.0
          %v4314 = vmax.f32 %v4238, 0.0
          %v4315 = vmax.f32 %v4240, 0.0
          %v4316 = vmax.f32 %v4131, 0.0
          %v4317 = vmax.f32 %v4133, 0.0
          %v4318 = vmax.f32 %v4244, 0.0
          %v4319 = vmax.f32 %v4246, 0.0
          %v4320 = vmax.f32 %v4135, 0.0
          %v4321 = vmax.f32 %v4137, 0.0
          %v4322 = vmax.f32 %v4248, 0.0
          %v4323 = vmax.f32 %v4250, 0.0
          %v4324 = vmax.f32 %v4141, 0.0
          %v4325 = vmax.f32 %v4143, 0.0
          %v4326 = vmax.f32 %v4254, 0.0
          %v4327 = vmax.f32 %v4256, 0.0
          %v4328 = vmax.f32 %v4145, 0.0
          %v4329 = vmax.f32 %v4147, 0.0
          %v4330 = vmax.f32 %v4258, 0.0
          %v4331 = vmax.f32 %v4260, 0.0
          %v4332 = vmax.f32 %v4151, 0.0
          %v4333 = vmax.f32 %v4153, 0.0
          %v4334 = vmax.f32 %v4264, 0.0
          %v4335 = vmax.f32 %v4266, 0.0
          %v4336 = vmax.f32 %v4155, 0.0
          %v4337 = vmax.f32 %v4157, 0.0
          %v4338 = vmax.f32 %v4268, 0.0
          %v4339 = vmax.f32 %v4270, 0.0
          %v4340 = vmax.f32 %v4161, 0.0
          %v4341 = vmax.f32 %v4163, 0.0
          %v4342 = vmax.f32 %v4274, 0.0
          %v4343 = vmax.f32 %v4276, 0.0
          %v4344 = vmax.f32 %v4165, 0.0
          %v4345 = vmax.f32 %v4167, 0.0
          %v4346 = vmax.f32 %v4278, 0.0
          %v4347 = vmax.f32 %v4280, 0.0
          %v4348 = vmax.f32 %v4171, 0.0
          %v4349 = vmax.f32 %v4173, 0.0
          %v4350 = vmax.f32 %v4284, 0.0
          %v4351 = vmax.f32 %v4286, 0.0
          %v4352 = vmax.f32 %v4175, 0.0
          %v4353 = vmax.f32 %v4177, 0.0
          %v4354 = vmax.f32 %v4288, 0.0
          %v4355 = vmax.f32 %v4290, 0.0
          %v4356 = vpack.c.bf16 %v4296, %v4292
          %v4357 = vpack.c.bf16 %v4297, %v4293
          %v4358 = vpack.c.bf16 %v4298, %v4294
          %v4359 = vpack.c.bf16 %v4299, %v4295
          %v4360 = vpack.c.bf16 %v4304, %v4300
          %v4361 = vpack.c.bf16 %v4305, %v4301
          %v4362 = vpack.c.bf16 %v4306, %v4302
          %v4363 = vpack.c.bf16 %v4307, %v4303
          %v4364 = vpack.c.bf16 %v4312, %v4308
          %v4365 = vpack.c.bf16 %v4313, %v4309
          %v4366 = vpack.c.bf16 %v4314, %v4310
          %v4367 = vpack.c.bf16 %v4315, %v4311
          %v4368 = vpack.c.bf16 %v4320, %v4316
          %v4369 = vpack.c.bf16 %v4321, %v4317
          %v4370 = vpack.c.bf16 %v4322, %v4318
          %v4371 = vpack.c.bf16 %v4323, %v4319
          %v4372 = vpack.c.bf16 %v4328, %v4324
          %v4373 = vpack.c.bf16 %v4329, %v4325
          %v4374 = vpack.c.bf16 %v4330, %v4326
          %v4375 = vpack.c.bf16 %v4331, %v4327
          %v4376 = vpack.c.bf16 %v4336, %v4332
          %v4377 = vpack.c.bf16 %v4337, %v4333
          %v4378 = vpack.c.bf16 %v4338, %v4334
          %v4379 = vpack.c.bf16 %v4339, %v4335
          %v4380 = vpack.c.bf16 %v4344, %v4340
          %v4381 = vpack.c.bf16 %v4345, %v4341
          %v4382 = vpack.c.bf16 %v4346, %v4342
          %v4383 = vpack.c.bf16 %v4347, %v4343
          %v4384 = vpack.c.bf16 %v4352, %v4348
          %v4385 = vpack.c.bf16 %v4353, %v4349
          %v4386 = vpack.c.bf16 %v4354, %v4350
          %v4387 = vpack.c.bf16 %v4355, %v4351
          %v4389 = vlaneseq
          %v4390 = vshrl.u32 %v4389, 7
          %v4391 = vsub.s32 0, %v4390
          %v4392 = vrot.slane %v1102, %v4391
          %v4393 = vlaneseq
          %v4394 = vshrl.u32 %v4393, 7
          %v4395 = vsub.s32 1, %v4394
          %v4396 = vrot.slane %v1102, %v4395
          %v4463 = vunpack.c.l.b16 %v1033
          %v4464 = vunpack.c.h.b16 %v1033
          %v4465 = vunpack.c.l.b16 %v1034
          %v4466 = vunpack.c.h.b16 %v1034
          %v4467 = vunpack.c.l.b16 %v1035
          %v4468 = vunpack.c.h.b16 %v1035
          %v4469 = vunpack.c.l.b16 %v1036
          %v4470 = vunpack.c.h.b16 %v1036
          %v4471 = vunpack.c.l.b16 %v1037
          %v4472 = vunpack.c.h.b16 %v1037
          %v4473 = vunpack.c.l.b16 %v1038
          %v4474 = vunpack.c.h.b16 %v1038
          %v4475 = vunpack.c.l.b16 %v1039
          %v4476 = vunpack.c.h.b16 %v1039
          %v4477 = vunpack.c.l.b16 %v1040
          %v4478 = vunpack.c.h.b16 %v1040
          %v4479 = vunpack.c.l.b16 %v1041
          %v4480 = vunpack.c.h.b16 %v1041
          %v4481 = vunpack.c.l.b16 %v1042
          %v4482 = vunpack.c.h.b16 %v1042
          %v4483 = vunpack.c.l.b16 %v1043
          %v4484 = vunpack.c.h.b16 %v1043
          %v4485 = vunpack.c.l.b16 %v1044
          %v4486 = vunpack.c.h.b16 %v1044
          %v4487 = vunpack.c.l.b16 %v1045
          %v4488 = vunpack.c.h.b16 %v1045
          %v4489 = vunpack.c.l.b16 %v1046
          %v4490 = vunpack.c.h.b16 %v1046
          %v4491 = vunpack.c.l.b16 %v1047
          %v4492 = vunpack.c.h.b16 %v1047
          %v4493 = vunpack.c.l.b16 %v1048
          %v4494 = vunpack.c.h.b16 %v1048
          %v4495 = vunpack.c.l.b16 %v1049
          %v4496 = vunpack.c.h.b16 %v1049
          %v4497 = vunpack.c.l.b16 %v1050
          %v4498 = vunpack.c.h.b16 %v1050
          %v4499 = vunpack.c.l.b16 %v1051
          %v4500 = vunpack.c.h.b16 %v1051
          %v4501 = vunpack.c.l.b16 %v1052
          %v4502 = vunpack.c.h.b16 %v1052
          %v4503 = vunpack.c.l.b16 %v1053
          %v4504 = vunpack.c.h.b16 %v1053
          %v4505 = vunpack.c.l.b16 %v1054
          %v4506 = vunpack.c.h.b16 %v1054
          %v4507 = vunpack.c.l.b16 %v1055
          %v4508 = vunpack.c.h.b16 %v1055
          %v4509 = vunpack.c.l.b16 %v1056
          %v4510 = vunpack.c.h.b16 %v1056
          %v4511 = vunpack.c.l.b16 %v1057
          %v4512 = vunpack.c.h.b16 %v1057
          %v4513 = vunpack.c.l.b16 %v1058
          %v4514 = vunpack.c.h.b16 %v1058
          %v4515 = vunpack.c.l.b16 %v1059
          %v4516 = vunpack.c.h.b16 %v1059
          %v4517 = vunpack.c.l.b16 %v1060
          %v4518 = vunpack.c.h.b16 %v1060
          %v4519 = vunpack.c.l.b16 %v1061
          %v4520 = vunpack.c.h.b16 %v1061
          %v4521 = vunpack.c.l.b16 %v1062
          %v4522 = vunpack.c.h.b16 %v1062
          %v4523 = vunpack.c.l.b16 %v1063
          %v4524 = vunpack.c.h.b16 %v1063
          %v4525 = vunpack.c.l.b16 %v1064
          %v4526 = vunpack.c.h.b16 %v1064
          %v4527 = vunpack.c.l.b16 %v1065
          %v4528 = vunpack.c.h.b16 %v1065
          %v4529 = vunpack.c.l.b16 %v1066
          %v4530 = vunpack.c.h.b16 %v1066
          %v4531 = vunpack.c.l.b16 %v1067
          %v4532 = vunpack.c.h.b16 %v1067
          %v4533 = vunpack.c.l.b16 %v1068
          %v4534 = vunpack.c.h.b16 %v1068
          %v4535 = vunpack.c.l.b16 %v1069
          %v4536 = vunpack.c.h.b16 %v1069
          %v4537 = vunpack.c.l.b16 %v1070
          %v4538 = vunpack.c.h.b16 %v1070
          %v4539 = vunpack.c.l.b16 %v1071
          %v4540 = vunpack.c.h.b16 %v1071
          %v4541 = vunpack.c.l.b16 %v1072
          %v4542 = vunpack.c.h.b16 %v1072
          %v4543 = vunpack.c.l.b16 %v1073
          %v4544 = vunpack.c.h.b16 %v1073
          %v4545 = vunpack.c.l.b16 %v1074
          %v4546 = vunpack.c.h.b16 %v1074
          %v4547 = vunpack.c.l.b16 %v1075
          %v4548 = vunpack.c.h.b16 %v1075
          %v4549 = vunpack.c.l.b16 %v1076
          %v4550 = vunpack.c.h.b16 %v1076
          %v4551 = vunpack.c.l.b16 %v1077
          %v4552 = vunpack.c.h.b16 %v1077
          %v4553 = vunpack.c.l.b16 %v1078
          %v4554 = vunpack.c.h.b16 %v1078
          %v4555 = vunpack.c.l.b16 %v1079
          %v4556 = vunpack.c.h.b16 %v1079
          %v4557 = vunpack.c.l.b16 %v1080
          %v4558 = vunpack.c.h.b16 %v1080
          %v4559 = vunpack.c.l.b16 %v1081
          %v4560 = vunpack.c.h.b16 %v1081
          %v4561 = vunpack.c.l.b16 %v1082
          %v4562 = vunpack.c.h.b16 %v1082
          %v4563 = vunpack.c.l.b16 %v1083
          %v4564 = vunpack.c.h.b16 %v1083
          %v4565 = vunpack.c.l.b16 %v1084
          %v4566 = vunpack.c.h.b16 %v1084
          %v4567 = vunpack.c.l.b16 %v1085
          %v4568 = vunpack.c.h.b16 %v1085
          %v4569 = vunpack.c.l.b16 %v1086
          %v4570 = vunpack.c.h.b16 %v1086
          %v4571 = vunpack.c.l.b16 %v1087
          %v4572 = vunpack.c.h.b16 %v1087
          %v4573 = vunpack.c.l.b16 %v1088
          %v4574 = vunpack.c.h.b16 %v1088
          %v4575 = vunpack.c.l.b16 %v1089
          %v4576 = vunpack.c.h.b16 %v1089
          %v4577 = vunpack.c.l.b16 %v1090
          %v4578 = vunpack.c.h.b16 %v1090
          %v4579 = vunpack.c.l.b16 %v1091
          %v4580 = vunpack.c.h.b16 %v1091
          %v4581 = vunpack.c.l.b16 %v1092
          %v4582 = vunpack.c.h.b16 %v1092
          %v4583 = vunpack.c.l.b16 %v1093
          %v4584 = vunpack.c.h.b16 %v1093
          %v4585 = vunpack.c.l.b16 %v1094
          %v4586 = vunpack.c.h.b16 %v1094
          %v4587 = vunpack.c.l.b16 %v1095
          %v4588 = vunpack.c.h.b16 %v1095
          %v4589 = vunpack.c.l.b16 %v1096
          %v4590 = vunpack.c.h.b16 %v1096
          %v4591 = vpack.c.b16 %v4465, %v4463
          %v4592 = vpack.c.b16 %v4466, %v4464
          %v4593 = vpack.c.b16 %v4469, %v4467
          %v4594 = vpack.c.b16 %v4470, %v4468
          %v4595 = vpack.c.b16 %v4473, %v4471
          %v4596 = vpack.c.b16 %v4474, %v4472
          %v4597 = vpack.c.b16 %v4477, %v4475
          %v4598 = vpack.c.b16 %v4478, %v4476
          %v4599 = vpack.c.b16 %v4481, %v4479
          %v4600 = vpack.c.b16 %v4482, %v4480
          %v4601 = vpack.c.b16 %v4485, %v4483
          %v4602 = vpack.c.b16 %v4486, %v4484
          %v4603 = vpack.c.b16 %v4489, %v4487
          %v4604 = vpack.c.b16 %v4490, %v4488
          %v4605 = vpack.c.b16 %v4493, %v4491
          %v4606 = vpack.c.b16 %v4494, %v4492
          %v4607 = vpack.c.b16 %v4497, %v4495
          %v4608 = vpack.c.b16 %v4498, %v4496
          %v4609 = vpack.c.b16 %v4501, %v4499
          %v4610 = vpack.c.b16 %v4502, %v4500
          %v4611 = vpack.c.b16 %v4505, %v4503
          %v4612 = vpack.c.b16 %v4506, %v4504
          %v4613 = vpack.c.b16 %v4509, %v4507
          %v4614 = vpack.c.b16 %v4510, %v4508
          %v4615 = vpack.c.b16 %v4513, %v4511
          %v4616 = vpack.c.b16 %v4514, %v4512
          %v4617 = vpack.c.b16 %v4517, %v4515
          %v4618 = vpack.c.b16 %v4518, %v4516
          %v4619 = vpack.c.b16 %v4521, %v4519
          %v4620 = vpack.c.b16 %v4522, %v4520
          %v4621 = vpack.c.b16 %v4525, %v4523
          %v4622 = vpack.c.b16 %v4526, %v4524
          %v4623 = vpack.c.b16 %v4529, %v4527
          %v4624 = vpack.c.b16 %v4530, %v4528
          %v4625 = vpack.c.b16 %v4533, %v4531
          %v4626 = vpack.c.b16 %v4534, %v4532
          %v4627 = vpack.c.b16 %v4537, %v4535
          %v4628 = vpack.c.b16 %v4538, %v4536
          %v4629 = vpack.c.b16 %v4541, %v4539
          %v4630 = vpack.c.b16 %v4542, %v4540
          %v4631 = vpack.c.b16 %v4545, %v4543
          %v4632 = vpack.c.b16 %v4546, %v4544
          %v4633 = vpack.c.b16 %v4549, %v4547
          %v4634 = vpack.c.b16 %v4550, %v4548
          %v4635 = vpack.c.b16 %v4553, %v4551
          %v4636 = vpack.c.b16 %v4554, %v4552
          %v4637 = vpack.c.b16 %v4557, %v4555
          %v4638 = vpack.c.b16 %v4558, %v4556
          %v4639 = vpack.c.b16 %v4561, %v4559
          %v4640 = vpack.c.b16 %v4562, %v4560
          %v4641 = vpack.c.b16 %v4565, %v4563
          %v4642 = vpack.c.b16 %v4566, %v4564
          %v4643 = vpack.c.b16 %v4569, %v4567
          %v4644 = vpack.c.b16 %v4570, %v4568
          %v4645 = vpack.c.b16 %v4573, %v4571
          %v4646 = vpack.c.b16 %v4574, %v4572
          %v4647 = vpack.c.b16 %v4577, %v4575
          %v4648 = vpack.c.b16 %v4578, %v4576
          %v4649 = vpack.c.b16 %v4581, %v4579
          %v4650 = vpack.c.b16 %v4582, %v4580
          %v4651 = vpack.c.b16 %v4585, %v4583
          %v4652 = vpack.c.b16 %v4586, %v4584
          %v4653 = vpack.c.b16 %v4589, %v4587
          %v4654 = vpack.c.b16 %v4590, %v4588
          %4719 = vmatprep.subr.bf16.mxu0 %v4592
          %4720 = vmatpush1.bf16.msra.mxu0 %v4591
          %4721 = vmatprep.subr.bf16.mxu0 %v4594
          %4722 = vmatpush1.bf16.msra.mxu0 %v4593
          %4723 = vmatprep.subr.bf16.mxu0 %v4596
          %4724 = vmatpush1.bf16.msra.mxu0 %v4595
          %4725 = vmatprep.subr.bf16.mxu0 %v4598
          %4726 = vmatpush1.bf16.msra.mxu0 %v4597
          %4727 = vmatprep.subr.bf16.mxu0 %v4600
          %4728 = vmatpush1.bf16.msra.mxu0 %v4599
          %4729 = vmatprep.subr.bf16.mxu0 %v4602
          %4730 = vmatpush1.bf16.msra.mxu0 %v4601
          %4731 = vmatprep.subr.bf16.mxu0 %v4604
          %4732 = vmatpush1.bf16.msra.mxu0 %v4603
          %4733 = vmatprep.subr.bf16.mxu0 %v4606
          %4734 = vmatpush1.bf16.msra.mxu0 %v4605
          %4735 = vmatprep.subr.bf16.mxu0 %v4608
          %4736 = vmatpush1.bf16.msra.mxu0 %v4607
          %4737 = vmatprep.subr.bf16.mxu0 %v4610
          %4738 = vmatpush1.bf16.msra.mxu0 %v4609
          %4739 = vmatprep.subr.bf16.mxu0 %v4612
          %4740 = vmatpush1.bf16.msra.mxu0 %v4611
          %4741 = vmatprep.subr.bf16.mxu0 %v4614
          %4742 = vmatpush1.bf16.msra.mxu0 %v4613
          %4743 = vmatprep.subr.bf16.mxu0 %v4616
          %4744 = vmatpush1.bf16.msra.mxu0 %v4615
          %4745 = vmatprep.subr.bf16.mxu0 %v4618
          %4746 = vmatpush1.bf16.msra.mxu0 %v4617
          %4747 = vmatprep.subr.bf16.mxu0 %v4620
          %4748 = vmatpush1.bf16.msra.mxu0 %v4619
          %4749 = vmatprep.subr.bf16.mxu0 %v4622
          %4750 = vmatpush1.bf16.msra.mxu0 %v4621
          %4751 = vmatprep.mubr.bf16.mxu0 %v4357
          %4752 = vmatmul.mubr.bf16.gmra.mrb[0].mxu0 %v4356
          %v4753 = vpop.f32.mrb[0].mxu0
          %v4754 = vadd.f32 %v4392, %v4753
          %v4755 = vpop.f32.mrb[0].mxu0
          %v4756 = vadd.f32 %v4396, %v4755
          %v4757 = vpop.f32.mrb[0].mxu0
          %v4758 = vadd.f32 %v4392, %v4757
          %v4759 = vpop.f32.mrb[0].mxu0
          %v4760 = vadd.f32 %v4396, %v4759
          %4761 = vmatprep.mubr.bf16.mxu0 %v4361
          %4762 = vmatmul.mubr.bf16.gmra.mrb[0].mxu0 %v4360
          %v4763 = vpop.f32.mrb[0].mxu0
          %v4764 = vadd.f32 %v4392, %v4763
          %v4765 = vpop.f32.mrb[0].mxu0
          %v4766 = vadd.f32 %v4396, %v4765
          %v4767 = vpop.f32.mrb[0].mxu0
          %v4768 = vadd.f32 %v4392, %v4767
          %v4769 = vpop.f32.mrb[0].mxu0
          %v4770 = vadd.f32 %v4396, %v4769
          %4771 = vmatprep.mubr.bf16.mxu0 %v4365
          %4772 = vmatmul.mubr.bf16.gmra.mrb[0].mxu0 %v4364
          %v4773 = vpop.f32.mrb[0].mxu0
          %v4774 = vadd.f32 %v4392, %v4773
          %v4775 = vpop.f32.mrb[0].mxu0
          %v4776 = vadd.f32 %v4396, %v4775
          %v4777 = vpop.f32.mrb[0].mxu0
          %v4778 = vadd.f32 %v4392, %v4777
          %v4779 = vpop.f32.mrb[0].mxu0
          %v4780 = vadd.f32 %v4396, %v4779
          %4781 = vmatprep.mubr.bf16.mxu0 %v4369
          %4782 = vmatmul.mubr.bf16.gmra.mrb[0].mxu0 %v4368
          %v4783 = vpop.f32.mrb[0].mxu0
          %v4784 = vadd.f32 %v4392, %v4783
          %v4785 = vpop.f32.mrb[0].mxu0
          %v4786 = vadd.f32 %v4396, %v4785
          %v4787 = vpop.f32.mrb[0].mxu0
          %v4788 = vadd.f32 %v4392, %v4787
          %v4789 = vpop.f32.mrb[0].mxu0
          %v4790 = vadd.f32 %v4396, %v4789
          %4791 = vmatprep.mubr.bf16.mxu0 %v4373
          %4792 = vmatmul.mubr.bf16.gmra.mrb[0].mxu0 %v4372
          %v4793 = vpop.f32.mrb[0].mxu0
          %v4794 = vadd.f32 %v4392, %v4793
          %v4795 = vpop.f32.mrb[0].mxu0
          %v4796 = vadd.f32 %v4396, %v4795
          %v4797 = vpop.f32.mrb[0].mxu0
          %v4798 = vadd.f32 %v4392, %v4797
          %v4799 = vpop.f32.mrb[0].mxu0
          %v4800 = vadd.f32 %v4396, %v4799
          %4801 = vmatprep.mubr.bf16.mxu0 %v4377
          %4802 = vmatmul.mubr.bf16.gmra.mrb[0].mxu0 %v4376
          %v4803 = vpop.f32.mrb[0].mxu0
          %v4804 = vadd.f32 %v4392, %v4803
          %v4805 = vpop.f32.mrb[0].mxu0
          %v4806 = vadd.f32 %v4396, %v4805
          %v4807 = vpop.f32.mrb[0].mxu0
          %v4808 = vadd.f32 %v4392, %v4807
          %v4809 = vpop.f32.mrb[0].mxu0
          %v4810 = vadd.f32 %v4396, %v4809
          %4811 = vmatprep.mubr.bf16.mxu0 %v4381
          %4812 = vmatmul.mubr.bf16.gmra.mrb[0].mxu0 %v4380
          %v4813 = vpop.f32.mrb[0].mxu0
          %v4814 = vadd.f32 %v4392, %v4813
          %v4815 = vpop.f32.mrb[0].mxu0
          %v4816 = vadd.f32 %v4396, %v4815
          %v4817 = vpop.f32.mrb[0].mxu0
          %v4818 = vadd.f32 %v4392, %v4817
          %v4819 = vpop.f32.mrb[0].mxu0
          %v4820 = vadd.f32 %v4396, %v4819
          %4821 = vmatprep.mubr.bf16.mxu0 %v4385
          %4822 = vmatmul.mubr.bf16.gmra.mrb[0].mxu0 %v4384
          %v4823 = vpop.f32.mrb[0].mxu0
          %v4824 = vadd.f32 %v4392, %v4823
          %v4825 = vpop.f32.mrb[0].mxu0
          %v4826 = vadd.f32 %v4396, %v4825
          %v4827 = vpop.f32.mrb[0].mxu0
          %v4828 = vadd.f32 %v4392, %v4827
          %v4829 = vpop.f32.mrb[0].mxu0
          %v4830 = vadd.f32 %v4396, %v4829
          %4831 = vdwg.mxu0
          %4832 = vmatprep.subr.bf16.mxu0 %v4624
          %4833 = vmatpush1.bf16.msra.mxu0 %v4623
          %4834 = vmatprep.subr.bf16.mxu0 %v4626
          %4835 = vmatpush1.bf16.msra.mxu0 %v4625
          %4836 = vmatprep.subr.bf16.mxu0 %v4628
          %4837 = vmatpush1.bf16.msra.mxu0 %v4627
          %4838 = vmatprep.subr.bf16.mxu0 %v4630
          %4839 = vmatpush1.bf16.msra.mxu0 %v4629
          %4840 = vmatprep.subr.bf16.mxu0 %v4632
          %4841 = vmatpush1.bf16.msra.mxu0 %v4631
          %4842 = vmatprep.subr.bf16.mxu0 %v4634
          %4843 = vmatpush1.bf16.msra.mxu0 %v4633
          %4844 = vmatprep.subr.bf16.mxu0 %v4636
          %4845 = vmatpush1.bf16.msra.mxu0 %v4635
          %4846 = vmatprep.subr.bf16.mxu0 %v4638
          %4847 = vmatpush1.bf16.msra.mxu0 %v4637
          %4848 = vmatprep.subr.bf16.mxu0 %v4640
          %4849 = vmatpush1.bf16.msra.mxu0 %v4639
          %4850 = vmatprep.subr.bf16.mxu0 %v4642
          %4851 = vmatpush1.bf16.msra.mxu0 %v4641
          %4852 = vmatprep.subr.bf16.mxu0 %v4644
          %4853 = vmatpush1.bf16.msra.mxu0 %v4643
          %4854 = vmatprep.subr.bf16.mxu0 %v4646
          %4855 = vmatpush1.bf16.msra.mxu0 %v4645
          %4856 = vmatprep.subr.bf16.mxu0 %v4648
          %4857 = vmatpush1.bf16.msra.mxu0 %v4647
          %4858 = vmatprep.subr.bf16.mxu0 %v4650
          %4859 = vmatpush1.bf16.msra.mxu0 %v4649
          %4860 = vmatprep.subr.bf16.mxu0 %v4652
          %4861 = vmatpush1.bf16.msra.mxu0 %v4651
          %4862 = vmatprep.subr.bf16.mxu0 %v4654
          %4863 = vmatpush1.bf16.msra.mxu0 %v4653
          %4864 = vmatprep.mubr.bf16.mxu0 %v4359
          %4865 = vmatmul.mubr.bf16.gmra.mrb[0].mxu0 %v4358
          %v4866 = vpop.f32.mrb[0].mxu0
          %v4867 = vadd.f32 %v4754, %v4866
          %v4868 = vpop.f32.mrb[0].mxu0
          %v4869 = vadd.f32 %v4756, %v4868
          %v4870 = vpop.f32.mrb[0].mxu0
          %v4871 = vadd.f32 %v4758, %v4870
          %v4872 = vpop.f32.mrb[0].mxu0
          %v4873 = vadd.f32 %v4760, %v4872
          %4874 = vmatprep.mubr.bf16.mxu0 %v4363
          %4875 = vmatmul.mubr.bf16.gmra.mrb[0].mxu0 %v4362
          %v4876 = vpop.f32.mrb[0].mxu0
          %v4877 = vadd.f32 %v4764, %v4876
          %v4878 = vpop.f32.mrb[0].mxu0
          %v4879 = vadd.f32 %v4766, %v4878
          %v4880 = vpop.f32.mrb[0].mxu0
          %v4881 = vadd.f32 %v4768, %v4880
          %v4882 = vpop.f32.mrb[0].mxu0
          %v4883 = vadd.f32 %v4770, %v4882
          %4884 = vmatprep.mubr.bf16.mxu0 %v4367
          %4885 = vmatmul.mubr.bf16.gmra.mrb[0].mxu0 %v4366
          %v4886 = vpop.f32.mrb[0].mxu0
          %v4887 = vadd.f32 %v4774, %v4886
          %v4888 = vpop.f32.mrb[0].mxu0
          %v4889 = vadd.f32 %v4776, %v4888
          %v4890 = vpop.f32.mrb[0].mxu0
          %v4891 = vadd.f32 %v4778, %v4890
          %v4892 = vpop.f32.mrb[0].mxu0
          %v4893 = vadd.f32 %v4780, %v4892
          %4894 = vmatprep.mubr.bf16.mxu0 %v4371
          %4895 = vmatmul.mubr.bf16.gmra.mrb[0].mxu0 %v4370
          %v4896 = vpop.f32.mrb[0].mxu0
          %v4897 = vadd.f32 %v4784, %v4896
          %v4898 = vpop.f32.mrb[0].mxu0
          %v4899 = vadd.f32 %v4786, %v4898
          %v4900 = vpop.f32.mrb[0].mxu0
          %v4901 = vadd.f32 %v4788, %v4900
          %v4902 = vpop.f32.mrb[0].mxu0
          %v4903 = vadd.f32 %v4790, %v4902
          %4904 = vmatprep.mubr.bf16.mxu0 %v4375
          %4905 = vmatmul.mubr.bf16.gmra.mrb[0].mxu0 %v4374
          %v4906 = vpop.f32.mrb[0].mxu0
          %v4907 = vadd.f32 %v4794, %v4906
          %v4908 = vpop.f32.mrb[0].mxu0
          %v4909 = vadd.f32 %v4796, %v4908
          %v4910 = vpop.f32.mrb[0].mxu0
          %v4911 = vadd.f32 %v4798, %v4910
          %v4912 = vpop.f32.mrb[0].mxu0
          %v4913 = vadd.f32 %v4800, %v4912
          %4914 = vmatprep.mubr.bf16.mxu0 %v4379
          %4915 = vmatmul.mubr.bf16.gmra.mrb[0].mxu0 %v4378
          %v4916 = vpop.f32.mrb[0].mxu0
          %v4917 = vadd.f32 %v4804, %v4916
          %v4918 = vpop.f32.mrb[0].mxu0
          %v4919 = vadd.f32 %v4806, %v4918
          %v4920 = vpop.f32.mrb[0].mxu0
          %v4921 = vadd.f32 %v4808, %v4920
          %v4922 = vpop.f32.mrb[0].mxu0
          %v4923 = vadd.f32 %v4810, %v4922
          %4924 = vmatprep.mubr.bf16.mxu0 %v4383
          %4925 = vmatmul.mubr.bf16.gmra.mrb[0].mxu0 %v4382
          %v4926 = vpop.f32.mrb[0].mxu0
          %v4927 = vadd.f32 %v4814, %v4926
          %v4928 = vpop.f32.mrb[0].mxu0
          %v4929 = vadd.f32 %v4816, %v4928
          %v4930 = vpop.f32.mrb[0].mxu0
          %v4931 = vadd.f32 %v4818, %v4930
          %v4932 = vpop.f32.mrb[0].mxu0
          %v4933 = vadd.f32 %v4820, %v4932
          %4934 = vmatprep.mubr.bf16.mxu0 %v4387
          %4935 = vmatmul.mubr.bf16.gmra.mrb[0].mxu0 %v4386
          %v4936 = vpop.f32.mrb[0].mxu0
          %v4937 = vadd.f32 %v4824, %v4936
          %v4938 = vpop.f32.mrb[0].mxu0
          %v4939 = vadd.f32 %v4826, %v4938
          %v4940 = vpop.f32.mrb[0].mxu0
          %v4941 = vadd.f32 %v4828, %v4940
          %v4942 = vpop.f32.mrb[0].mxu0
          %v4943 = vadd.f32 %v4830, %v4942
          %4944 = vdwg.mxu0
          %v4945 = vadd.f32 %v3677, %v4867
          %v4946 = vadd.f32 %v3678, %v4869
          %v4947 = vadd.f32 %v3679, %v4871
          %v4948 = vadd.f32 %v3680, %v4873
          %v4949 = vadd.f32 %v3681, %v4877
          %v4950 = vadd.f32 %v3682, %v4879
          %v4951 = vadd.f32 %v3683, %v4881
          %v4952 = vadd.f32 %v3684, %v4883
          %v4953 = vadd.f32 %v3685, %v4887
          %v4954 = vadd.f32 %v3686, %v4889
          %v4955 = vadd.f32 %v3687, %v4891
          %v4956 = vadd.f32 %v3688, %v4893
          %v4957 = vadd.f32 %v3689, %v4897
          %v4958 = vadd.f32 %v3690, %v4899
          %v4959 = vadd.f32 %v3691, %v4901
          %v4960 = vadd.f32 %v3692, %v4903
          %v4961 = vadd.f32 %v3693, %v4907
          %v4962 = vadd.f32 %v3694, %v4909
          %v4963 = vadd.f32 %v3695, %v4911
          %v4964 = vadd.f32 %v3696, %v4913
          %v4965 = vadd.f32 %v3697, %v4917
          %v4966 = vadd.f32 %v3698, %v4919
          %v4967 = vadd.f32 %v3699, %v4921
          %v4968 = vadd.f32 %v3700, %v4923
          %v4969 = vadd.f32 %v3701, %v4927
          %v4970 = vadd.f32 %v3702, %v4929
          %v4971 = vadd.f32 %v3703, %v4931
          %v4972 = vadd.f32 %v3704, %v4933
          %v4973 = vadd.f32 %v3705, %v4937
          %v4974 = vadd.f32 %v3706, %v4939
          %v4975 = vadd.f32 %v3707, %v4941
          %v4976 = vadd.f32 %v3708, %v4943
          %v4977 = vadd.f32 %v4945, %v4946
          %4978 = vadd.xlane.f32.xlu0 %v4977
          %v4979 = vpop.xlane.xlu0 %4978
          %v4980 = vadd.f32 %v4947, %v4948
          %4981 = vadd.xlane.f32.xlu0 %v4980
          %v4982 = vpop.xlane.xlu0 %4981
          %v4983 = vadd.f32 %v4949, %v4950
          %4984 = vadd.xlane.f32.xlu0 %v4983
          %v4985 = vpop.xlane.xlu0 %4984
          %v4986 = vadd.f32 %v4951, %v4952
          %4987 = vadd.xlane.f32.xlu0 %v4986
          %v4988 = vpop.xlane.xlu0 %4987
          %v4989 = vadd.f32 %v4953, %v4954
          %4990 = vadd.xlane.f32.xlu0 %v4989
          %v4991 = vpop.xlane.xlu0 %4990
          %v4992 = vadd.f32 %v4955, %v4956
          %4993 = vadd.xlane.f32.xlu0 %v4992
          %v4994 = vpop.xlane.xlu0 %4993
          %v4995 = vadd.f32 %v4957, %v4958
          %4996 = vadd.xlane.f32.xlu0 %v4995
          %v4997 = vpop.xlane.xlu0 %4996
          %v4998 = vadd.f32 %v4959, %v4960
          %4999 = vadd.xlane.f32.xlu0 %v4998
          %v5000 = vpop.xlane.xlu0 %4999
          %v5001 = vadd.f32 %v4961, %v4962
          %5002 = vadd.xlane.f32.xlu0 %v5001
          %v5003 = vpop.xlane.xlu0 %5002
          %v5004 = vadd.f32 %v4963, %v4964
          %5005 = vadd.xlane.f32.xlu0 %v5004
          %v5006 = vpop.xlane.xlu0 %5005
          %v5007 = vadd.f32 %v4965, %v4966
          %5008 = vadd.xlane.f32.xlu0 %v5007
          %v5009 = vpop.xlane.xlu0 %5008
          %v5010 = vadd.f32 %v4967, %v4968
          %5011 = vadd.xlane.f32.xlu0 %v5010
          %v5012 = vpop.xlane.xlu0 %5011
          %v5013 = vadd.f32 %v4969, %v4970
          %5014 = vadd.xlane.f32.xlu0 %v5013
          %v5015 = vpop.xlane.xlu0 %5014
          %v5016 = vadd.f32 %v4971, %v4972
          %5017 = vadd.xlane.f32.xlu0 %v5016
          %v5018 = vpop.xlane.xlu0 %5017
          %v5019 = vadd.f32 %v4973, %v4974
          %5020 = vadd.xlane.f32.xlu0 %v5019
          %v5021 = vpop.xlane.xlu0 %5020
          %v5022 = vadd.f32 %v4975, %v4976
          %5023 = vadd.xlane.f32.xlu0 %v5022
          %v5024 = vpop.xlane.xlu0 %5023
          %v5025 = vmul.f32 %v4979, %v3382
          %v5026 = vmul.f32 %v4982, %v3382
          %v5027 = vmul.f32 %v4985, %v3382
          %v5028 = vmul.f32 %v4988, %v3382
          %v5029 = vmul.f32 %v4991, %v3382
          %v5030 = vmul.f32 %v4994, %v3382
          %v5031 = vmul.f32 %v4997, %v3382
          %v5032 = vmul.f32 %v5000, %v3382
          %v5033 = vmul.f32 %v5003, %v3382
          %v5034 = vmul.f32 %v5006, %v3382
          %v5035 = vmul.f32 %v5009, %v3382
          %v5036 = vmul.f32 %v5012, %v3382
          %v5037 = vmul.f32 %v5015, %v3382
          %v5038 = vmul.f32 %v5018, %v3382
          %v5039 = vmul.f32 %v5021, %v3382
          %v5040 = vmul.f32 %v5024, %v3382
          %v5041 = vmul.f32 %v4945, %v4945
          %v5042 = vmul.f32 %v4946, %v4946
          %v5043 = vmul.f32 %v4947, %v4947
          %v5044 = vmul.f32 %v4948, %v4948
          %v5045 = vmul.f32 %v4949, %v4949
          %v5046 = vmul.f32 %v4950, %v4950
          %v5047 = vmul.f32 %v4951, %v4951
          %v5048 = vmul.f32 %v4952, %v4952
          %v5049 = vmul.f32 %v4953, %v4953
          %v5050 = vmul.f32 %v4954, %v4954
          %v5051 = vmul.f32 %v4955, %v4955
          %v5052 = vmul.f32 %v4956, %v4956
          %v5053 = vmul.f32 %v4957, %v4957
          %v5054 = vmul.f32 %v4958, %v4958
          %v5055 = vmul.f32 %v4959, %v4959
          %v5056 = vmul.f32 %v4960, %v4960
          %v5057 = vmul.f32 %v4961, %v4961
          %v5058 = vmul.f32 %v4962, %v4962
          %v5059 = vmul.f32 %v4963, %v4963
          %v5060 = vmul.f32 %v4964, %v4964
          %v5061 = vmul.f32 %v4965, %v4965
          %v5062 = vmul.f32 %v4966, %v4966
          %v5063 = vmul.f32 %v4967, %v4967
          %v5064 = vmul.f32 %v4968, %v4968
          %v5065 = vmul.f32 %v4969, %v4969
          %v5066 = vmul.f32 %v4970, %v4970
          %v5067 = vmul.f32 %v4971, %v4971
          %v5068 = vmul.f32 %v4972, %v4972
          %v5069 = vmul.f32 %v4973, %v4973
          %v5070 = vmul.f32 %v4974, %v4974
          %v5071 = vmul.f32 %v4975, %v4975
          %v5072 = vmul.f32 %v4976, %v4976
          %v5073 = vadd.f32 %v5041, %v5042
          %5074 = vadd.xlane.f32.xlu0 %v5073
          %v5075 = vpop.xlane.xlu0 %5074
          %v5076 = vadd.f32 %v5043, %v5044
          %5077 = vadd.xlane.f32.xlu0 %v5076
          %v5078 = vpop.xlane.xlu0 %5077
          %v5079 = vadd.f32 %v5045, %v5046
          %5080 = vadd.xlane.f32.xlu0 %v5079
          %v5081 = vpop.xlane.xlu0 %5080
          %v5082 = vadd.f32 %v5047, %v5048
          %5083 = vadd.xlane.f32.xlu0 %v5082
          %v5084 = vpop.xlane.xlu0 %5083
          %v5085 = vadd.f32 %v5049, %v5050
          %5086 = vadd.xlane.f32.xlu0 %v5085
          %v5087 = vpop.xlane.xlu0 %5086
          %v5088 = vadd.f32 %v5051, %v5052
          %5089 = vadd.xlane.f32.xlu0 %v5088
          %v5090 = vpop.xlane.xlu0 %5089
          %v5091 = vadd.f32 %v5053, %v5054
          %5092 = vadd.xlane.f32.xlu0 %v5091
          %v5093 = vpop.xlane.xlu0 %5092
          %v5094 = vadd.f32 %v5055, %v5056
          %5095 = vadd.xlane.f32.xlu0 %v5094
          %v5096 = vpop.xlane.xlu0 %5095
          %v5097 = vadd.f32 %v5057, %v5058
          %5098 = vadd.xlane.f32.xlu0 %v5097
          %v5099 = vpop.xlane.xlu0 %5098
          %v5100 = vadd.f32 %v5059, %v5060
          %5101 = vadd.xlane.f32.xlu0 %v5100
          %v5102 = vpop.xlane.xlu0 %5101
          %v5103 = vadd.f32 %v5061, %v5062
          %5104 = vadd.xlane.f32.xlu0 %v5103
          %v5105 = vpop.xlane.xlu0 %5104
          %v5106 = vadd.f32 %v5063, %v5064
          %5107 = vadd.xlane.f32.xlu0 %v5106
          %v5108 = vpop.xlane.xlu0 %5107
          %v5109 = vadd.f32 %v5065, %v5066
          %5110 = vadd.xlane.f32.xlu0 %v5109
          %v5111 = vpop.xlane.xlu0 %5110
          %v5112 = vadd.f32 %v5067, %v5068
          %5113 = vadd.xlane.f32.xlu0 %v5112
          %v5114 = vpop.xlane.xlu0 %5113
          %v5115 = vadd.f32 %v5069, %v5070
          %5116 = vadd.xlane.f32.xlu0 %v5115
          %v5117 = vpop.xlane.xlu0 %5116
          %v5118 = vadd.f32 %v5071, %v5072
          %5119 = vadd.xlane.f32.xlu0 %v5118
          %v5120 = vpop.xlane.xlu0 %5119
          %v5121 = vmul.f32 %v5075, %v3382
          %v5122 = vmul.f32 %v5078, %v3382
          %v5123 = vmul.f32 %v5081, %v3382
          %v5124 = vmul.f32 %v5084, %v3382
          %v5125 = vmul.f32 %v5087, %v3382
          %v5126 = vmul.f32 %v5090, %v3382
          %v5127 = vmul.f32 %v5093, %v3382
          %v5128 = vmul.f32 %v5096, %v3382
          %v5129 = vmul.f32 %v5099, %v3382
          %v5130 = vmul.f32 %v5102, %v3382
          %v5131 = vmul.f32 %v5105, %v3382
          %v5132 = vmul.f32 %v5108, %v3382
          %v5133 = vmul.f32 %v5111, %v3382
          %v5134 = vmul.f32 %v5114, %v3382
          %v5135 = vmul.f32 %v5117, %v3382
          %v5136 = vmul.f32 %v5120, %v3382
          %v5137 = vmul.f32 %v5025, %v5025
          %v5138 = vmul.f32 %v5026, %v5026
          %v5139 = vmul.f32 %v5027, %v5027
          %v5140 = vmul.f32 %v5028, %v5028
          %v5141 = vmul.f32 %v5029, %v5029
          %v5142 = vmul.f32 %v5030, %v5030
          %v5143 = vmul.f32 %v5031, %v5031
          %v5144 = vmul.f32 %v5032, %v5032
          %v5145 = vmul.f32 %v5033, %v5033
          %v5146 = vmul.f32 %v5034, %v5034
          %v5147 = vmul.f32 %v5035, %v5035
          %v5148 = vmul.f32 %v5036, %v5036
          %v5149 = vmul.f32 %v5037, %v5037
          %v5150 = vmul.f32 %v5038, %v5038
          %v5151 = vmul.f32 %v5039, %v5039
          %v5152 = vmul.f32 %v5040, %v5040
          %v5153 = vsub.f32 %v5121, %v5137
          %v5154 = vsub.f32 %v5122, %v5138
          %v5155 = vsub.f32 %v5123, %v5139
          %v5156 = vsub.f32 %v5124, %v5140
          %v5157 = vsub.f32 %v5125, %v5141
          %v5158 = vsub.f32 %v5126, %v5142
          %v5159 = vsub.f32 %v5127, %v5143
          %v5160 = vsub.f32 %v5128, %v5144
          %v5161 = vsub.f32 %v5129, %v5145
          %v5162 = vsub.f32 %v5130, %v5146
          %v5163 = vsub.f32 %v5131, %v5147
          %v5164 = vsub.f32 %v5132, %v5148
          %v5165 = vsub.f32 %v5133, %v5149
          %v5166 = vsub.f32 %v5134, %v5150
          %v5167 = vsub.f32 %v5135, %v5151
          %v5168 = vsub.f32 %v5136, %v5152
          %v5169 = vsub.f32 %v4945, %v5025
          %v5170 = vsub.f32 %v4946, %v5025
          %v5171 = vsub.f32 %v4947, %v5026
          %v5172 = vsub.f32 %v4948, %v5026
          %v5173 = vsub.f32 %v4949, %v5027
          %v5174 = vsub.f32 %v4950, %v5027
          %v5175 = vsub.f32 %v4951, %v5028
          %v5176 = vsub.f32 %v4952, %v5028
          %v5177 = vsub.f32 %v4953, %v5029
          %v5178 = vsub.f32 %v4954, %v5029
          %v5179 = vsub.f32 %v4955, %v5030
          %v5180 = vsub.f32 %v4956, %v5030
          %v5181 = vsub.f32 %v4957, %v5031
          %v5182 = vsub.f32 %v4958, %v5031
          %v5183 = vsub.f32 %v4959, %v5032
          %v5184 = vsub.f32 %v4960, %v5032
          %v5185 = vsub.f32 %v4961, %v5033
          %v5186 = vsub.f32 %v4962, %v5033
          %v5187 = vsub.f32 %v4963, %v5034
          %v5188 = vsub.f32 %v4964, %v5034
          %v5189 = vsub.f32 %v4965, %v5035
          %v5190 = vsub.f32 %v4966, %v5035
          %v5191 = vsub.f32 %v4967, %v5036
          %v5192 = vsub.f32 %v4968, %v5036
          %v5193 = vsub.f32 %v4969, %v5037
          %v5194 = vsub.f32 %v4970, %v5037
          %v5195 = vsub.f32 %v4971, %v5038
          %v5196 = vsub.f32 %v4972, %v5038
          %v5197 = vsub.f32 %v4973, %v5039
          %v5198 = vsub.f32 %v4974, %v5039
          %v5199 = vsub.f32 %v4975, %v5040
          %v5200 = vsub.f32 %v4976, %v5040
          %v5201 = vadd.f32 %v5153, 1e-05
          %v5202 = vadd.f32 %v5154, 1e-05
          %v5203 = vadd.f32 %v5155, 1e-05
          %v5204 = vadd.f32 %v5156, 1e-05
          %v5205 = vadd.f32 %v5157, 1e-05
          %v5206 = vadd.f32 %v5158, 1e-05
          %v5207 = vadd.f32 %v5159, 1e-05
          %v5208 = vadd.f32 %v5160, 1e-05
          %v5209 = vadd.f32 %v5161, 1e-05
          %v5210 = vadd.f32 %v5162, 1e-05
          %v5211 = vadd.f32 %v5163, 1e-05
          %v5212 = vadd.f32 %v5164, 1e-05
          %v5213 = vadd.f32 %v5165, 1e-05
          %v5214 = vadd.f32 %v5166, 1e-05
          %v5215 = vadd.f32 %v5167, 1e-05
          %v5216 = vadd.f32 %v5168, 1e-05
          %v5217 = vrsqrt.pop %v5201
          %v5218 = vrsqrt.pop %v5202
          %v5219 = vrsqrt.pop %v5203
          %v5220 = vrsqrt.pop %v5204
          %v5221 = vrsqrt.pop %v5205
          %v5222 = vrsqrt.pop %v5206
          %v5223 = vrsqrt.pop %v5207
          %v5224 = vrsqrt.pop %v5208
          %v5225 = vrsqrt.pop %v5209
          %v5226 = vrsqrt.pop %v5210
          %v5227 = vrsqrt.pop %v5211
          %v5228 = vrsqrt.pop %v5212
          %v5229 = vrsqrt.pop %v5213
          %v5230 = vrsqrt.pop %v5214
          %v5231 = vrsqrt.pop %v5215
          %v5232 = vrsqrt.pop %v5216
          %v5233 = vmul.f32 %v5169, %v5217
          %v5234 = vmul.f32 %v5170, %v5217
          %v5235 = vmul.f32 %v5171, %v5218
          %v5236 = vmul.f32 %v5172, %v5218
          %v5237 = vmul.f32 %v5173, %v5219
          %v5238 = vmul.f32 %v5174, %v5219
          %v5239 = vmul.f32 %v5175, %v5220
          %v5240 = vmul.f32 %v5176, %v5220
          %v5241 = vmul.f32 %v5177, %v5221
          %v5242 = vmul.f32 %v5178, %v5221
          %v5243 = vmul.f32 %v5179, %v5222
          %v5244 = vmul.f32 %v5180, %v5222
          %v5245 = vmul.f32 %v5181, %v5223
          %v5246 = vmul.f32 %v5182, %v5223
          %v5247 = vmul.f32 %v5183, %v5224
          %v5248 = vmul.f32 %v5184, %v5224
          %v5249 = vmul.f32 %v5185, %v5225
          %v5250 = vmul.f32 %v5186, %v5225
          %v5251 = vmul.f32 %v5187, %v5226
          %v5252 = vmul.f32 %v5188, %v5226
          %v5253 = vmul.f32 %v5189, %v5227
          %v5254 = vmul.f32 %v5190, %v5227
          %v5255 = vmul.f32 %v5191, %v5228
          %v5256 = vmul.f32 %v5192, %v5228
          %v5257 = vmul.f32 %v5193, %v5229
          %v5258 = vmul.f32 %v5194, %v5229
          %v5259 = vmul.f32 %v5195, %v5230
          %v5260 = vmul.f32 %v5196, %v5230
          %v5261 = vmul.f32 %v5197, %v5231
          %v5262 = vmul.f32 %v5198, %v5231
          %v5263 = vmul.f32 %v5199, %v5232
          %v5264 = vmul.f32 %v5200, %v5232
          %v5266 = vlaneseq
          %v5267 = vshrl.u32 %v5266, 7
          %v5268 = vsub.s32 0, %v5267
          %v5269 = vrot.slane %v1105, %v5268
          %v5270 = vlaneseq
          %v5271 = vshrl.u32 %v5270, 7
          %v5272 = vsub.s32 1, %v5271
          %v5273 = vrot.slane %v1105, %v5272
          %v5276 = vmul.f32 %v5233, %v5269
          %v5277 = vmul.f32 %v5234, %v5273
          %v5278 = vmul.f32 %v5235, %v5269
          %v5279 = vmul.f32 %v5236, %v5273
          %v5280 = vmul.f32 %v5237, %v5269
          %v5281 = vmul.f32 %v5238, %v5273
          %v5282 = vmul.f32 %v5239, %v5269
          %v5283 = vmul.f32 %v5240, %v5273
          %v5284 = vmul.f32 %v5241, %v5269
          %v5285 = vmul.f32 %v5242, %v5273
          %v5286 = vmul.f32 %v5243, %v5269
          %v5287 = vmul.f32 %v5244, %v5273
          %v5288 = vmul.f32 %v5245, %v5269
          %v5289 = vmul.f32 %v5246, %v5273
          %v5290 = vmul.f32 %v5247, %v5269
          %v5291 = vmul.f32 %v5248, %v5273
          %v5292 = vmul.f32 %v5249, %v5269
          %v5293 = vmul.f32 %v5250, %v5273
          %v5294 = vmul.f32 %v5251, %v5269
          %v5295 = vmul.f32 %v5252, %v5273
          %v5296 = vmul.f32 %v5253, %v5269
          %v5297 = vmul.f32 %v5254, %v5273
          %v5298 = vmul.f32 %v5255, %v5269
          %v5299 = vmul.f32 %v5256, %v5273
          %v5300 = vmul.f32 %v5257, %v5269
          %v5301 = vmul.f32 %v5258, %v5273
          %v5302 = vmul.f32 %v5259, %v5269
          %v5303 = vmul.f32 %v5260, %v5273
          %v5304 = vmul.f32 %v5261, %v5269
          %v5305 = vmul.f32 %v5262, %v5273
          %v5306 = vmul.f32 %v5263, %v5269
          %v5307 = vmul.f32 %v5264, %v5273
          %v5309 = vlaneseq
          %v5310 = vshrl.u32 %v5309, 7
          %v5311 = vsub.s32 0, %v5310
          %v5312 = vrot.slane %v1106, %v5311
          %v5313 = vlaneseq
          %v5314 = vshrl.u32 %v5313, 7
          %v5315 = vsub.s32 1, %v5314
          %v5316 = vrot.slane %v1106, %v5315
          %v5319 = vadd.f32 %v5276, %v5312
          %v5320 = vadd.f32 %v5277, %v5316
          %v5321 = vadd.f32 %v5278, %v5312
          %v5322 = vadd.f32 %v5279, %v5316
          %v5323 = vadd.f32 %v5280, %v5312
          %v5324 = vadd.f32 %v5281, %v5316
          %v5325 = vadd.f32 %v5282, %v5312
          %v5326 = vadd.f32 %v5283, %v5316
          %v5327 = vadd.f32 %v5284, %v5312
          %v5328 = vadd.f32 %v5285, %v5316
          %v5329 = vadd.f32 %v5286, %v5312
          %v5330 = vadd.f32 %v5287, %v5316
          %v5331 = vadd.f32 %v5288, %v5312
          %v5332 = vadd.f32 %v5289, %v5316
          %v5333 = vadd.f32 %v5290, %v5312
          %v5334 = vadd.f32 %v5291, %v5316
          %v5335 = vadd.f32 %v5292, %v5312
          %v5336 = vadd.f32 %v5293, %v5316
          %v5337 = vadd.f32 %v5294, %v5312
          %v5338 = vadd.f32 %v5295, %v5316
          %v5339 = vadd.f32 %v5296, %v5312
          %v5340 = vadd.f32 %v5297, %v5316
          %v5341 = vadd.f32 %v5298, %v5312
          %v5342 = vadd.f32 %v5299, %v5316
          %v5343 = vadd.f32 %v5300, %v5312
          %v5344 = vadd.f32 %v5301, %v5316
          %v5345 = vadd.f32 %v5302, %v5312
          %v5346 = vadd.f32 %v5303, %v5316
          %v5347 = vadd.f32 %v5304, %v5312
          %v5348 = vadd.f32 %v5305, %v5316
          %v5349 = vadd.f32 %v5306, %v5312
          %v5350 = vadd.f32 %v5307, %v5316
        $region169: #{encoder_forward.1} parent=91 // loop_footer
          %s1146 = sadd.s32 1, %s1142
        $region170: #{encoder_forward.1} parent=91 // loop_footer_branch
          %1141 = sbr.rel target = $region166
        $region171: #{encoder_forward.1} parent=91 // loop_exit
          _
        %5351 = vst [vmem:[%s839] sm:$0xff] %v1147
        %5352 = vst [vmem:[%s839 + $0x8] sm:$0xff] %v1148
        %5353 = vst [vmem:[%s839 + $0x10] sm:$0xff] %v1149
        %5354 = vst [vmem:[%s839 + $0x18] sm:$0xff] %v1150
        %5355 = vst [vmem:[%s839 + $0x20] sm:$0xff] %v1151
        %5356 = vst [vmem:[%s839 + $0x28] sm:$0xff] %v1152
        %5357 = vst [vmem:[%s839 + $0x30] sm:$0xff] %v1153
        %5358 = vst [vmem:[%s839 + $0x38] sm:$0xff] %v1154
        %5359 = vst [vmem:[%s839 + $0x40] sm:$0xff] %v1155
        %5360 = vst [vmem:[%s839 + $0x48] sm:$0xff] %v1156
        %5361 = vst [vmem:[%s839 + $0x50] sm:$0xff] %v1157
        %5362 = vst [vmem:[%s839 + $0x58] sm:$0xff] %v1158
        %5363 = vst [vmem:[%s839 + $0x60] sm:$0xff] %v1159
        %5364 = vst [vmem:[%s839 + $0x68] sm:$0xff] %v1160
        %5365 = vst [vmem:[%s839 + $0x70] sm:$0xff] %v1161
        %5366 = vst [vmem:[%s839 + $0x78] sm:$0xff] %v1162
        %5367 = vst [vmem:[%s839 + $0x80] sm:$0xff] %v1163
        %5368 = vst [vmem:[%s839 + $0x88] sm:$0xff] %v1164
        %5369 = vst [vmem:[%s839 + $0x90] sm:$0xff] %v1165
        %5370 = vst [vmem:[%s839 + $0x98] sm:$0xff] %v1166
        %5371 = vst [vmem:[%s839 + $0xa0] sm:$0xff] %v1167
        %5372 = vst [vmem:[%s839 + $0xa8] sm:$0xff] %v1168
        %5373 = vst [vmem:[%s839 + $0xb0] sm:$0xff] %v1169
        %5374 = vst [vmem:[%s839 + $0xb8] sm:$0xff] %v1170
        %5375 = vst [vmem:[%s839 + $0xc0] sm:$0xff] %v1171
        %5376 = vst [vmem:[%s839 + $0xc8] sm:$0xff] %v1172
        %5377 = vst [vmem:[%s839 + $0xd0] sm:$0xff] %v1173
        %5378 = vst [vmem:[%s839 + $0xd8] sm:$0xff] %v1174
        %5379 = vst [vmem:[%s839 + $0xe0] sm:$0xff] %v1175
        %5380 = vst [vmem:[%s839 + $0xe8] sm:$0xff] %v1176
        %5381 = vst [vmem:[%s839 + $0xf0] sm:$0xff] %v1177
        %5382 = vst [vmem:[%s839 + $0xf8] sm:$0xff] %v1178
        %s5383 = sand.u32 %s442, 1
        %s5384 = scalar_lea.sflag [#allocation4], %s5383
        %s5385 = sand.u32 %s442, 1
        %s5386 = smul.addr %s5385, 256
        %s5387 = scalar_lea.vmem [#allocation31], %s5386
        // Predicated region
        $region172: #{encoder_forward.1} parent=91 // pred_check
          %p5388 = pneg %p452
        $region173: #{encoder_forward.1} parent=91 // pred_check_branch
          %5390 = sbr.rel (%p5388) target = $region175
        $region174: #{encoder_forward.1} parent=91 // pred_region
          %s5392 = ssub.s32 4096, 4096
          %5393 = vsyncadd %s5384, %s5392
          %s5394 = smul.addr %s46, 32
          %s5395 = smul.addr %s5394, 128
          %s5396 = scalar_lea.hbm %s18, %s5395
          %s5397 = sshll.u32 %s5387, 4
          %s5398 = int_to_ptr.vmem [resolvable:$true] %s5397
          %5403 = dma.vmem_to_hbm [thread:$0]  %s5398, 4096, %s5396, %s5384, 256, 256, 16
        $region175: #{encoder_forward.1} parent=91 // pred_fallthru
          _
      $region92: #{encoder_forward.1} parent=5 // pred_fallthru
        _
      %p5404 = scmp.le.s32.totalorder 2, %s41
      // Predicated region
      $region176: #{encoder_forward.1} parent=5 // pred_check
        %p5405 = pneg %p5404
      $region177: #{encoder_forward.1} parent=5 // pred_check_branch
        %5407 = sbr.rel (%p5405) target = $region179
      $region178: #{encoder_forward.1} parent=5 // pred_region
        %s5408 = ssub.s32 %s41, 2
        // Predicated region
        $region180: #{encoder_forward.1} parent=178 // pred_check
          %p5409 = pneg %p458
        $region181: #{encoder_forward.1} parent=178 // pred_check_branch
          %5411 = sbr.rel (%p5409) target = $region183
        $region182: #{encoder_forward.1} parent=178 // pred_region
          %s5412 = sand.u32 %s443, 1
          %s5413 = scalar_lea.sflag [#allocation4], %s5412
          %s5414 = sand.u32 %s443, 1
          %s5415 = smul.addr %s5414, 256
          %s5416 = scalar_lea.vmem [#allocation31], %s5415
          %5417 = dma.done %s5413, 4096
        $region183: #{encoder_forward.1} parent=178 // pred_fallthru
          _
      $region179: #{encoder_forward.1} parent=5 // pred_fallthru
        _
    $region6: #{encoder_forward.1} parent=1 // loop_footer
      %s45 = sadd.s32 1, %s41
    $region7: #{encoder_forward.1} parent=1 // loop_footer_branch
      %40 = sbr.rel target = $region3
    $region8: #{encoder_forward.1} parent=1 // loop_exit
      _
    %5418 = vsyncpa [#allocation3], 1
    %s5419 = scalar_lea.sflag [#allocation3], 1
    %5420 = vsyncpa %s5419, 1
    %5421 = vsyncpa [#allocation6], 1
    %s5422 = scalar_lea.sflag [#allocation6], 1
    %5423 = vsyncpa %s5422, 1
    %5424 = vsyncpa [#allocation9], 1
    %5425 = vsyncpa [#allocation12], 1
    %5426 = vsyncpa [#allocation15], 1
    %5427 = vsyncpa [#allocation18], 1
    %5428 = vsyncpa [#allocation21], 1
    %5429 = vsyncpa [#allocation24], 1
    %5430 = vsyncpa [#allocation27], 1
    %5431 = vsyncpa [#allocation30], 1
    %5432 = vsyncpa [#allocation4], 1
    %s5433 = scalar_lea.sflag [#allocation4], 1
    %5434 = vsyncpa %s5433, 1

</llo_original>
